<compile_context>
chip_gen: v7x
topology: tpu7x:2x2x1
jax: 0.10.0
libtpu: 0.0.40
codegen_flags: <defaults>
</compile_context>

<pallas_src>
import math
import itertools
import numpy as np
import jax
import jax.numpy as jnp
from jax import lax
from jax.experimental import pallas as pl
from jax.experimental.pallas import tpu as pltpu

# ---------------- configuration (mirrors FcaBlock.__init__ arguments) --------
DIM         = 32                      # dim
H, W        = 8, 8                    # input_resolution
N           = H * W
NUM_HEADS   = 4
HEAD_DIM    = DIM // NUM_HEADS
MLP_RATIO   = 4.0
HIDDEN      = int(DIM * MLP_RATIO)
INNER_DEPTH = 1
CAB_MAX_D   = 3
S_UP        = True
S_TOKEN_NUM = math.ceil(H / 4) * math.ceil(W / 4)
N_S         = min(INNER_DEPTH, CAB_MAX_D) * S_TOKEN_NUM   # attention s tokens
SCALE       = HEAD_DIM ** (-0.5)
LN_EPS      = 1e-5
BN_EPS      = 1e-5
HO          = (H + 2 * 3 - 7) // 4 + 1   # dw_conv output height (stride 4)
WO          = (W + 2 * 3 - 7) // 4 + 1
N_SU        = HO * WO                    # s_update tokens (== N_S for this cfg)
B           = 2

KEYS        = 128                        # padded key count (lane-dense tiles)
NEG_BIAS    = -1e30                      # pad-key mask (exp underflows to 0)
PAD0        = 16                         # sublane pad before x1 in conv scratch
PADROWS     = N + 2 * PAD0               # 96

# ---- relative position bias index table (same construction as the module) ---
_points = list(itertools.product(range(H), range(W)))
_offsets = {}
_idxs = []
for _p1 in _points:
    for _p2 in _points:
        _off = (abs(_p1[0] - _p2[0]), abs(_p1[1] - _p2[1]))
        if _off not in _offsets:
            _offsets[_off] = len(_offsets)
        _idxs.append(_offsets[_off])
IDX = np.array(_idxs, dtype=np.int32).reshape(N, N)
NUM_OFFSETS = len(_offsets)

_CP = pltpu.CompilerParams(dimension_semantics=("parallel",))


# ---- host-side constants ------------------------------------------------------
def _build_conv7_gather():
    # g[p, k, t] = 1 if input token t feeds tap k of s_update output token p.
    g = np.zeros((N_SU, 49, N), np.float32)
    for ho in range(HO):
        for wo in range(WO):
            p_ = ho * WO + wo
            for dy in range(7):
                for dx in range(7):
                    iy, ix = 4 * ho + dy - 3, 4 * wo + dx - 3
                    if 0 <= iy < H and 0 <= ix < W:
                        g[p_, dy * 7 + dx, iy * W + ix] = 1.0
    return g


def _build_conv3_mask():
    # m[k, q, 0] = 1 if tap k of output token q reads an in-bounds input token.
    m = np.zeros((9, N, 1), np.float32)
    for q in range(N):
        y, x = divmod(q, W)
        for dy in range(3):
            for dx in range(3):
                iy, ix = y + dy - 1, x + dx - 1
                if 0 <= iy < H and 0 <= ix < W:
                    m[dy * 3 + dx, q, 0] = 1.0
    return m


def _build_head_mask():
    m = np.zeros((NUM_HEADS, DIM, 1), np.float32)
    for h in range(NUM_HEADS):
        m[h, h * HEAD_DIM:(h + 1) * HEAD_DIM, 0] = 1.0
    return m


G7_NP = _build_conv7_gather()        # (N_SU, 49, N)
MASK3_NP = _build_conv3_mask()       # (9, N, 1)
HEAD_MASK_NP = _build_head_mask()    # (NUM_HEADS, DIM, 1)


# ------------------------------ kernel helpers --------------------------------
def _ln(v, w, b):
    mu = jnp.mean(v, axis=-1, keepdims=True)
    var = jnp.mean(jnp.square(v - mu), axis=-1, keepdims=True)
    return (v - mu) * lax.rsqrt(var + LN_EPS) * w + b


def _gelu_tanh(x):
    # tanh-form GELU (EUP tanh); |err| vs exact erf-GELU ~1e-3, well inside tol.
    c = 0.7978845608028654  # sqrt(2/pi)
    return 0.5 * x * (1.0 + jnp.tanh(c * (x + 0.044715 * x * x * x)))


# ------------------------------ fused Pallas kernel ---------------------------
def fca_fused_kernel(
        x_ref, s_ref,
        sscale_ref, n1w_ref, n1b_ref, snw_ref, snb_ref,
        m_ref, bt_ref, wv_ref, bv_ref, bias_ref, wpm_ref, bproj_ref, g1_ref,
        a7_ref, mw3_ref, bnsc_ref, bnsh_ref,
        n2w_ref, n2b_ref, nmw_ref, nmb_ref,
        w1_ref, b1_ref, w2_ref, b2_ref, g2_ref,
        outx_ref, outs_ref,
        cat_ref, xpad_ref):
    f32 = jnp.float32
    bf16 = jnp.bfloat16

    # ---------------- attention branch (inner_depth > 0 path) ----------------
    xn = _ln(x_ref[0], n1w_ref[...], n1b_ref[...])                      # (N, C)
    sn = _ln(s_ref[0] * sscale_ref[...], snw_ref[...], snb_ref[...])    # (N_S, C)

    # stacked (zero-padded) token matrix: rows [xn; sn; 0 ...] -> KEYS rows
    cat_ref[...] = jnp.zeros((KEYS, DIM), f32)
    cat_ref[0:N, :] = xn
    cat_ref[N:N + N_S, :] = sn
    cat_f = cat_ref[...]
    cat_bf = cat_f.astype(bf16)
    catT_bf = jnp.transpose(cat_f).astype(bf16)                         # (C, KEYS)

    # shared V for all heads (padded rows are killed by zero softmax weights)
    v_all = (jnp.dot(cat_bf, wv_ref[...], preferred_element_type=f32)
             + bv_ref[...]).astype(bf16)                                # (KEYS, C)
    xn_bf = xn.astype(bf16)

    proj = jnp.zeros((N, DIM), f32)
    for h in range(NUM_HEADS):
        # scores = (xn @ (SCALE*Wq_h Wk_h^T) + SCALE*bq_h Wk_h^T) @ cat^T + bias
        qt = jnp.dot(xn_bf, m_ref[h], preferred_element_type=f32) + bt_ref[h]
        sc = (jnp.dot(qt.astype(bf16), catT_bf, preferred_element_type=f32)
              + bias_ref[h])                                            # (N, KEYS)
        mx = jnp.max(sc, axis=-1, keepdims=True)
        ex = jnp.exp(sc - mx)
        inv = pl.reciprocal(jnp.sum(ex, axis=-1, keepdims=True), approx=True)
        oh = jnp.dot(ex.astype(bf16), v_all, preferred_element_type=f32) * inv
        # head-concat + proj folded into a row-masked projection weight
        proj = proj + jnp.dot(oh.astype(bf16), wpm_ref[h],
                              preferred_element_type=f32)

    x1 = x_ref[0] + g1_ref[...] * (proj + bproj_ref[...])               # (N, C)

    # ------------- s_update = depthwise 7x7, stride 4, pad 3 (host-folded A) --
    rows = [jnp.sum(a7_ref[p] * x1, axis=0, keepdims=True)              # (1, C)
            for p in range(N_SU)]
    outs_ref[0] = jnp.concatenate(rows, axis=0)                         # (N_SU, C)

    # ------------- local_conv = depthwise 3x3 + fused BatchNorm ---------------
    # zero-padded copy of x1; taps are shifted static slices FMA'd with the
    # host-folded (boundary-mask * weight) tiles (no MXU work).
    xpad_ref[...] = jnp.zeros((PADROWS, DIM), f32)
    xpad_ref[PAD0:PAD0 + N, :] = x1
    conv3 = jnp.zeros((N, DIM), f32)
    for dy in range(3):
        for dx in range(3):
            k = dy * 3 + dx
            d = (dy - 1) * W + (dx - 1)
            conv3 = conv3 + xpad_ref[PAD0 + d:PAD0 + d + N, :] * mw3_ref[k]
    x2 = conv3 * bnsc_ref[...] + bnsh_ref[...]                          # (N, C)

    # ------------- MLP branch: x2 + gamma_2 * Mlp(norm2(x2)) ------------------
    y = _ln(_ln(x2, n2w_ref[...], n2b_ref[...]), nmw_ref[...], nmb_ref[...])
    h1 = (jnp.dot(y.astype(bf16), w1_ref[...], preferred_element_type=f32)
          + b1_ref[...])                                                # (N, HIDDEN)
    act = _gelu_tanh(h1)
    mo = (jnp.dot(act.astype(bf16), w2_ref[...], preferred_element_type=f32)
          + b2_ref[...])
    outx_ref[0] = x2 + g2_ref[...] * mo


# ------------------------------ BlockSpec helpers ------------------------------
def _bcast_spec(shape):
    zeros = (0,) * len(shape)
    return pl.BlockSpec(shape, lambda b: zeros)


def _batch_spec(shape):
    zeros = (0,) * len(shape)
    return pl.BlockSpec((1,) + shape, lambda b: (b,) + zeros)


# ------------------------------ forward wrapper --------------------------------
@jax.jit
def fca_block_forward(x, s, p):
    Bn = x.shape[0]
    f32 = jnp.float32
    bf16 = jnp.bfloat16

    # ---- parameter prep: reshapes / tiny folds only, no activation work ----
    wqkv = p['wqkv']                                      # (DIM, 3*DIM)
    bqkv = p['bqkv'].reshape(3 * DIM)
    wq = wqkv[:, 0:DIM].reshape(DIM, NUM_HEADS, HEAD_DIM)
    wk = wqkv[:, DIM:2 * DIM].reshape(DIM, NUM_HEADS, HEAD_DIM)
    wv = wqkv[:, 2 * DIM:3 * DIM]                         # (DIM, DIM)
    bq = bqkv[0:DIM].reshape(NUM_HEADS, HEAD_DIM)
    bv = bqkv[2 * DIM:3 * DIM].reshape(1, DIM)
    # (bk and bq@bk^T only add key-constant terms -> softmax-invariant, dropped)

    m4 = (SCALE * jnp.einsum('che,dhe->hcd', wq, wk)).astype(bf16)  # (NH, C, C)
    bt = (SCALE * jnp.einsum('he,dhe->hd', bq, wk)
          ).reshape(NUM_HEADS, 1, DIM).astype(f32)                  # (NH, 1, C)

    wpm = (jnp.asarray(HEAD_MASK_NP) * p['wproj'][None]).astype(bf16)  # (NH,C,C)

    # combined bias: [rel-pos | s_token_bias | -1e30 pad] out to KEYS lanes
    sb = jnp.broadcast_to(p['sbias'][:, None, :], (NUM_HEADS, N, N_S))
    pad = jnp.full((NUM_HEADS, N, KEYS - N - N_S), NEG_BIAS, f32)
    bias = jnp.concatenate([p['abias'], sb, pad], axis=-1)          # (NH, N, KEYS)

    # 7x7/stride-4 depthwise folded: A[p, t, c] = sum_k G7[p, k, t] * w7[k, c]
    a7 = jnp.einsum('pkt,kc->ptc', jnp.asarray(G7_NP),
                    p['w_dw7'].reshape(49, DIM)).astype(f32)        # (N_SU, N, C)

    # 3x3 depthwise: per-tap (boundary mask * weight)
    mw3 = (jnp.asarray(MASK3_NP) * p['w_dw3'].reshape(9, 1, DIM)).astype(f32)

    bn_rstd = 1.0 / jnp.sqrt(p['bn_var'] + BN_EPS)
    bn_scale = (p['bn_g'] * bn_rstd).reshape(1, DIM)
    bn_shift = (p['bn_b'] - p['bn_mean'] * p['bn_g'] * bn_rstd).reshape(1, DIM)

    out_x, out_s = pl.pallas_call(
        fca_fused_kernel,
        out_shape=(jax.ShapeDtypeStruct((Bn, N, DIM), f32),
                   jax.ShapeDtypeStruct((Bn, N_SU, DIM), f32)),
        grid=(Bn,),
        in_specs=[
            _batch_spec((N, DIM)),                          # x
            _batch_spec((N_S, DIM)),                        # s
            _bcast_spec((N_S, 1)),                          # s_scale_factors
            _bcast_spec((1, DIM)), _bcast_spec((1, DIM)),   # norm1 w,b
            _bcast_spec((1, DIM)), _bcast_spec((1, DIM)),   # s_norm w,b
            _bcast_spec((NUM_HEADS, DIM, DIM)),             # SCALE*Wq_h Wk_h^T (bf16)
            _bcast_spec((NUM_HEADS, 1, DIM)),               # SCALE*bq_h Wk_h^T
            _bcast_spec((DIM, DIM)),                        # Wv (bf16)
            _bcast_spec((1, DIM)),                          # bv
            _bcast_spec((NUM_HEADS, N, KEYS)),              # combined attention bias
            _bcast_spec((NUM_HEADS, DIM, DIM)),             # row-masked Wproj (bf16)
            _bcast_spec((1, DIM)),                          # bproj
            _bcast_spec((1, DIM)),                          # gamma_1
            _bcast_spec((N_SU, N, DIM)),                    # folded 7x7 dw (A)
            _bcast_spec((9, N, DIM)),                       # folded 3x3 dw (mask*w)
            _bcast_spec((1, DIM)), _bcast_spec((1, DIM)),   # fused BN scale/shift
            _bcast_spec((1, DIM)), _bcast_spec((1, DIM)),   # norm2 w,b
            _bcast_spec((1, DIM)), _bcast_spec((1, DIM)),   # Mlp.norm w,b
            _bcast_spec((DIM, HIDDEN)), _bcast_spec((1, HIDDEN)),  # fc1 (bf16 W)
            _bcast_spec((HIDDEN, DIM)), _bcast_spec((1, DIM)),     # fc2 (bf16 W)
            _bcast_spec((1, DIM)),                          # gamma_2
        ],
        out_specs=(_batch_spec((N, DIM)), _batch_spec((N_SU, DIM))),
        scratch_shapes=[pltpu.VMEM((KEYS, DIM), f32),       # stacked tokens
                        pltpu.VMEM((PADROWS, DIM), f32)],   # padded x1 for 3x3
        compiler_params=_CP,
    )(x, s, p['s_scale'], p['n1w'], p['n1b'], p['snw'], p['snb'],
      m4, bt, wv.astype(bf16), bv, bias, wpm, p['bproj'], p['g1'],
      a7, mw3, bn_scale, bn_shift,
      p['n2w'], p['n2b'], p['nmw'], p['nmb'],
      p['w1'].astype(bf16), p['b1'], p['w2'].astype(bf16), p['b2'], p['g2'])

    return out_x, out_s


# ------------------------------ parameter init ---------------------------------
def init_params(key):
    ks = iter(jax.random.split(key, 32))

    def rn(shape, scale=0.1):
        return scale * jax.random.normal(next(ks), shape, dtype=jnp.float32)

    attention_biases = rn((NUM_HEADS, NUM_OFFSETS))        # (heads, #offsets)
    return dict(
        s_scale=1.0 + rn((N_S, 1)),                        # s_scale_factors
        n1w=1.0 + rn((1, DIM)), n1b=rn((1, DIM)),          # norm1
        snw=1.0 + rn((1, DIM)), snb=rn((1, DIM)),          # s_norm
        wqkv=rn((DIM, 3 * DIM)), bqkv=rn((1, 3 * DIM)),    # qkv (pre-transposed)
        abias=attention_biases[:, IDX],                    # gathered (h, N, N)
        sbias=rn((NUM_HEADS, N_S)),                        # s_token_bias
        wproj=rn((DIM, DIM)), bproj=rn((1, DIM)),          # proj
        g1=rn((1, DIM)),                                   # gamma_1
        w_dw7=rn((7, 7, DIM)),                             # dw_conv weight
        w_dw3=rn((9, DIM)),                                # local_conv dw 3x3
        bn_g=1.0 + rn((DIM,)), bn_b=rn((DIM,)),            # local_conv BN
        bn_mean=rn((DIM,)),
        bn_var=1.0 + 0.1 * jnp.abs(jax.random.normal(next(ks), (DIM,),
                                                     jnp.float32)),
        n2w=1.0 + rn((1, DIM)), n2b=rn((1, DIM)),          # norm2
        nmw=1.0 + rn((1, DIM)), nmb=rn((1, DIM)),          # Mlp.norm
        w1=rn((DIM, HIDDEN)), b1=rn((1, HIDDEN)),          # fc1
        w2=rn((HIDDEN, DIM)), b2=rn((1, DIM)),             # fc2
        g2=rn((1, DIM)),                                   # gamma_2
    )


# ------------------------------ pure-JAX reference ------------------------------
def reference(x, s, p):
    def ln(v, w, b):
        mu = v.mean(-1, keepdims=True)
        var = ((v - mu) ** 2).mean(-1, keepdims=True)
        return (v - mu) / jnp.sqrt(var + LN_EPS) * w.reshape(-1) + b.reshape(-1)

    Bn = x.shape[0]
    res_x = x
    s2 = s * p['s_scale'][None]
    xn, sn = ln(x, p['n1w'], p['n1b']), ln(s2, p['snw'], p['snb'])
    qkv_x = (xn @ p['wqkv'] + p['bqkv'].reshape(-1)).reshape(
        Bn, N, 3, NUM_HEADS, HEAD_DIM).transpose(2, 0, 3, 1, 4)
    qkv_s = (sn @ p['wqkv'] + p['bqkv'].reshape(-1)).reshape(
        Bn, N_S, 3, NUM_HEADS, HEAD_DIM).transpose(2, 0, 3, 1, 4)
    q_x, k_x, v_x = qkv_x[0] * SCALE, qkv_x[1], qkv_x[2]
    k_s, v_s = qkv_s[1], qkv_s[2]
    attn_x = q_x @ k_x.transpose(0, 1, 3, 2) + p['abias'][None]
    attn_s = q_x @ k_s.transpose(0, 1, 3, 2) + p['sbias'][None, :, None, :]
    attn = jax.nn.softmax(jnp.concatenate([attn_x, attn_s], -1), -1)
    v = jnp.concatenate([v_x, v_s], axis=-2)
    xo = (attn @ v).transpose(0, 2, 1, 3).reshape(Bn, N, DIM)
    xo = xo @ p['wproj'] + p['bproj'].reshape(-1)
    x1 = res_x + p['g1'].reshape(-1) * xo

    x_sp = x1.reshape(Bn, H, W, DIM)
    dn = ('NHWC', 'HWIO', 'NHWC')
    s_upd = lax.conv_general_dilated(
        x_sp, p['w_dw7'][:, :, None, :], (4, 4), ((3, 3), (3, 3)),
        dimension_numbers=dn, feature_group_count=DIM).reshape(Bn, N_SU, DIM)
    conv3 = lax.conv_general_dilated(
        x_sp, p['w_dw3'].reshape(3, 3, DIM)[:, :, None, :], (1, 1),
        ((1, 1), (1, 1)), dimension_numbers=dn, feature_group_count=DIM)
    bn_scale = p['bn_g'] / jnp.sqrt(p['bn_var'] + BN_EPS)
    bn_shift = p['bn_b'] - p['bn_mean'] * bn_scale
    x2 = (conv3 * bn_scale + bn_shift).reshape(Bn, N, DIM)

    y = ln(ln(x2, p['n2w'], p['n2b']), p['nmw'], p['nmb'])
    y = jax.nn.gelu(y @ p['w1'] + p['b1'].reshape(-1), approximate=False)
    y = y @ p['w2'] + p['b2'].reshape(-1)
    x3 = x2 + p['g2'].reshape(-1) * y
    return x3, s_upd


# ------------------------------------ main --------------------------------------
if __name__ == "__main__":
    key = jax.random.PRNGKey(0)
    kx, ksv, kp = jax.random.split(key, 3)
    x = 0.5 * jax.random.normal(kx, (B, N, DIM), jnp.float32)
    s = 0.5 * jax.random.normal(ksv, (B, N_S, DIM), jnp.float32)
    params = init_params(kp)

    out_x, out_s = fca_block_forward(x, s, params)
    out_x = jax.block_until_ready(out_x)
    out_s = jax.block_until_ready(out_s)

    ref_x, ref_s = reference(x, s, params)
    np.testing.assert_allclose(np.asarray(out_x), np.asarray(ref_x),
                               rtol=1e-2, atol=1e-2)
    np.testing.assert_allclose(np.asarray(out_s), np.asarray(ref_s),
                               rtol=1e-2, atol=1e-2)
    print("KERNEL_OK")
</pallas_src>

<mosaic_0001>
module attributes {stable_mosaic.version = 11 : i64} {
  func.func @fca_fused_kernel(%arg0: i32, %arg1: memref<1x64x32xf32, #tpu.memory_space<vmem>>, %arg2: memref<1x4x32xf32, #tpu.memory_space<vmem>>, %arg3: memref<4x1xf32, #tpu.memory_space<vmem>>, %arg4: memref<1x32xf32, #tpu.memory_space<vmem>>, %arg5: memref<1x32xf32, #tpu.memory_space<vmem>>, %arg6: memref<1x32xf32, #tpu.memory_space<vmem>>, %arg7: memref<1x32xf32, #tpu.memory_space<vmem>>, %arg8: memref<4x32x32xbf16, #tpu.memory_space<vmem>>, %arg9: memref<4x1x32xf32, #tpu.memory_space<vmem>>, %arg10: memref<32x32xbf16, #tpu.memory_space<vmem>>, %arg11: memref<1x32xf32, #tpu.memory_space<vmem>>, %arg12: memref<4x64x128xf32, #tpu.memory_space<vmem>>, %arg13: memref<4x32x32xbf16, #tpu.memory_space<vmem>>, %arg14: memref<1x32xf32, #tpu.memory_space<vmem>>, %arg15: memref<1x32xf32, #tpu.memory_space<vmem>>, %arg16: memref<4x64x32xf32, #tpu.memory_space<vmem>>, %arg17: memref<9x64x32xf32, #tpu.memory_space<vmem>>, %arg18: memref<1x32xf32, #tpu.memory_space<vmem>>, %arg19: memref<1x32xf32, #tpu.memory_space<vmem>>, %arg20: memref<1x32xf32, #tpu.memory_space<vmem>>, %arg21: memref<1x32xf32, #tpu.memory_space<vmem>>, %arg22: memref<1x32xf32, #tpu.memory_space<vmem>>, %arg23: memref<1x32xf32, #tpu.memory_space<vmem>>, %arg24: memref<32x128xbf16, #tpu.memory_space<vmem>>, %arg25: memref<1x128xf32, #tpu.memory_space<vmem>>, %arg26: memref<128x32xbf16, #tpu.memory_space<vmem>>, %arg27: memref<1x32xf32, #tpu.memory_space<vmem>>, %arg28: memref<1x32xf32, #tpu.memory_space<vmem>>, %arg29: memref<1x64x32xf32, #tpu.memory_space<vmem>>, %arg30: memref<1x4x32xf32, #tpu.memory_space<vmem>>, %arg31: memref<128x32xf32, #tpu.memory_space<vmem>>, %arg32: memref<96x32xf32, #tpu.memory_space<vmem>>) attributes {dimension_semantics = [#tpu.dimension_semantics<parallel>], iteration_bounds = array<i64: 2>, scalar_prefetch = 0 : i64, scratch_operands = 2 : i64, tpu.core_type = #tpu.core_type<tc>, window_params = [{transform_indices = @transform_0, window_bounds = array<i64: 1, 64, 32>}, {transform_indices = @transform_1, window_bounds = array<i64: 1, 4, 32>}, {pipeline_mode = #tpu.pipeline_mode<synchronous>, transform_indices = @transform_2, window_bounds = array<i64: 4, 1>}, {pipeline_mode = #tpu.pipeline_mode<synchronous>, transform_indices = @transform_3, window_bounds = array<i64: 1, 32>}, {pipeline_mode = #tpu.pipeline_mode<synchronous>, transform_indices = @transform_4, window_bounds = array<i64: 1, 32>}, {pipeline_mode = #tpu.pipeline_mode<synchronous>, transform_indices = @transform_5, window_bounds = array<i64: 1, 32>}, {pipeline_mode = #tpu.pipeline_mode<synchronous>, transform_indices = @transform_6, window_bounds = array<i64: 1, 32>}, {pipeline_mode = #tpu.pipeline_mode<synchronous>, transform_indices = @transform_7, window_bounds = array<i64: 4, 32, 32>}, {pipeline_mode = #tpu.pipeline_mode<synchronous>, transform_indices = @transform_8, window_bounds = array<i64: 4, 1, 32>}, {pipeline_mode = #tpu.pipeline_mode<synchronous>, transform_indices = @transform_9, window_bounds = array<i64: 32, 32>}, {pipeline_mode = #tpu.pipeline_mode<synchronous>, transform_indices = @transform_10, window_bounds = array<i64: 1, 32>}, {pipeline_mode = #tpu.pipeline_mode<synchronous>, transform_indices = @transform_11, window_bounds = array<i64: 4, 64, 128>}, {pipeline_mode = #tpu.pipeline_mode<synchronous>, transform_indices = @transform_12, window_bounds = array<i64: 4, 32, 32>}, {pipeline_mode = #tpu.pipeline_mode<synchronous>, transform_indices = @transform_13, window_bounds = array<i64: 1, 32>}, {pipeline_mode = #tpu.pipeline_mode<synchronous>, transform_indices = @transform_14, window_bounds = array<i64: 1, 32>}, {pipeline_mode = #tpu.pipeline_mode<synchronous>, transform_indices = @transform_15, window_bounds = array<i64: 4, 64, 32>}, {pipeline_mode = #tpu.pipeline_mode<synchronous>, transform_indices = @transform_16, window_bounds = array<i64: 9, 64, 32>}, {pipeline_mode = #tpu.pipeline_mode<synchronous>, transform_indices = @transform_17, window_bounds = array<i64: 1, 32>}, {pipeline_mode = #tpu.pipeline_mode<synchronous>, transform_indices = @transform_18, window_bounds = array<i64: 1, 32>}, {pipeline_mode = #tpu.pipeline_mode<synchronous>, transform_indices = @transform_19, window_bounds = array<i64: 1, 32>}, {pipeline_mode = #tpu.pipeline_mode<synchronous>, transform_indices = @transform_20, window_bounds = array<i64: 1, 32>}, {pipeline_mode = #tpu.pipeline_mode<synchronous>, transform_indices = @transform_21, window_bounds = array<i64: 1, 32>}, {pipeline_mode = #tpu.pipeline_mode<synchronous>, transform_indices = @transform_22, window_bounds = array<i64: 1, 32>}, {pipeline_mode = #tpu.pipeline_mode<synchronous>, transform_indices = @transform_23, window_bounds = array<i64: 32, 128>}, {pipeline_mode = #tpu.pipeline_mode<synchronous>, transform_indices = @transform_24, window_bounds = array<i64: 1, 128>}, {pipeline_mode = #tpu.pipeline_mode<synchronous>, transform_indices = @transform_25, window_bounds = array<i64: 128, 32>}, {pipeline_mode = #tpu.pipeline_mode<synchronous>, transform_indices = @transform_26, window_bounds = array<i64: 1, 32>}, {pipeline_mode = #tpu.pipeline_mode<synchronous>, transform_indices = @transform_27, window_bounds = array<i64: 1, 32>}, {transform_indices = @transform_28, window_bounds = array<i64: 1, 64, 32>}, {transform_indices = @transform_29, window_bounds = array<i64: 1, 4, 32>}]} {
    %c0 = arith.constant 0 : index
    %c0_0 = arith.constant 0 : index
    %c0_1 = arith.constant 0 : index
    %0 = vector.load %arg1[%c0, %c0_0, %c0_1] : memref<1x64x32xf32, #tpu.memory_space<vmem>>, vector<1x64x32xf32>
    %1 = vector.shape_cast %0 : vector<1x64x32xf32> to vector<64x32xf32>
    %c0_2 = arith.constant 0 : index
    %c0_3 = arith.constant 0 : index
    %2 = vector.load %arg4[%c0_2, %c0_3] : memref<1x32xf32, #tpu.memory_space<vmem>>, vector<1x32xf32>
    %c0_4 = arith.constant 0 : index
    %c0_5 = arith.constant 0 : index
    %3 = vector.load %arg5[%c0_4, %c0_5] : memref<1x32xf32, #tpu.memory_space<vmem>>, vector<1x32xf32>
    %cst = arith.constant dense<0.000000e+00> : vector<64xf32>
    %4 = vector.multi_reduction <add>, %1, %cst [1] : vector<64x32xf32> to vector<64xf32>
    %5 = vector.shape_cast %4 : vector<64xf32> to vector<64x1xf32>
    %cst_6 = arith.constant 3.200000e+01 : f32
    %6 = vector.broadcast %cst_6 : f32 to vector<64x1xf32>
    %7 = arith.divf %5, %6 : vector<64x1xf32>
    %8 = vector.broadcast %7 : vector<64x1xf32> to vector<64x32xf32>
    %9 = arith.subf %1, %8 : vector<64x32xf32>
    %10 = arith.mulf %9, %9 : vector<64x32xf32>
    %cst_7 = arith.constant dense<0.000000e+00> : vector<64xf32>
    %11 = vector.multi_reduction <add>, %10, %cst_7 [1] : vector<64x32xf32> to vector<64xf32>
    %12 = vector.shape_cast %11 : vector<64xf32> to vector<64x1xf32>
    %cst_8 = arith.constant 3.200000e+01 : f32
    %13 = vector.broadcast %cst_8 : f32 to vector<64x1xf32>
    %14 = arith.divf %12, %13 : vector<64x1xf32>
    %15 = vector.broadcast %7 : vector<64x1xf32> to vector<64x32xf32>
    %16 = arith.subf %1, %15 : vector<64x32xf32>
    %cst_9 = arith.constant 9.99999974E-6 : f32
    %17 = vector.broadcast %cst_9 : f32 to vector<64x1xf32>
    %18 = arith.addf %14, %17 : vector<64x1xf32>
    %19 = math.rsqrt %18 : vector<64x1xf32>
    %20 = vector.broadcast %19 : vector<64x1xf32> to vector<64x32xf32>
    %21 = arith.mulf %16, %20 : vector<64x32xf32>
    %22 = vector.broadcast %2 : vector<1x32xf32> to vector<64x32xf32>
    %23 = arith.mulf %21, %22 : vector<64x32xf32>
    %24 = vector.broadcast %3 : vector<1x32xf32> to vector<64x32xf32>
    %25 = arith.addf %23, %24 : vector<64x32xf32>
    %c0_10 = arith.constant 0 : index
    %c0_11 = arith.constant 0 : index
    %c0_12 = arith.constant 0 : index
    %26 = vector.load %arg2[%c0_10, %c0_11, %c0_12] : memref<1x4x32xf32, #tpu.memory_space<vmem>>, vector<1x4x32xf32>
    %27 = vector.shape_cast %26 : vector<1x4x32xf32> to vector<4x32xf32>
    %c0_13 = arith.constant 0 : index
    %c0_14 = arith.constant 0 : index
    %28 = vector.load %arg3[%c0_13, %c0_14] : memref<4x1xf32, #tpu.memory_space<vmem>>, vector<4x1xf32>
    %29 = vector.broadcast %28 : vector<4x1xf32> to vector<4x32xf32>
    %30 = arith.mulf %27, %29 : vector<4x32xf32>
    %c0_15 = arith.constant 0 : index
    %c0_16 = arith.constant 0 : index
    %31 = vector.load %arg6[%c0_15, %c0_16] : memref<1x32xf32, #tpu.memory_space<vmem>>, vector<1x32xf32>
    %c0_17 = arith.constant 0 : index
    %c0_18 = arith.constant 0 : index
    %32 = vector.load %arg7[%c0_17, %c0_18] : memref<1x32xf32, #tpu.memory_space<vmem>>, vector<1x32xf32>
    %cst_19 = arith.constant dense<0.000000e+00> : vector<4xf32>
    %33 = vector.multi_reduction <add>, %30, %cst_19 [1] : vector<4x32xf32> to vector<4xf32>
    %34 = vector.shape_cast %33 : vector<4xf32> to vector<4x1xf32>
    %cst_20 = arith.constant 3.200000e+01 : f32
    %35 = vector.broadcast %cst_20 : f32 to vector<4x1xf32>
    %36 = arith.divf %34, %35 : vector<4x1xf32>
    %37 = vector.broadcast %36 : vector<4x1xf32> to vector<4x32xf32>
    %38 = arith.subf %30, %37 : vector<4x32xf32>
    %39 = arith.mulf %38, %38 : vector<4x32xf32>
    %cst_21 = arith.constant dense<0.000000e+00> : vector<4xf32>
    %40 = vector.multi_reduction <add>, %39, %cst_21 [1] : vector<4x32xf32> to vector<4xf32>
    %41 = vector.shape_cast %40 : vector<4xf32> to vector<4x1xf32>
    %cst_22 = arith.constant 3.200000e+01 : f32
    %42 = vector.broadcast %cst_22 : f32 to vector<4x1xf32>
    %43 = arith.divf %41, %42 : vector<4x1xf32>
    %44 = vector.broadcast %36 : vector<4x1xf32> to vector<4x32xf32>
    %45 = arith.subf %30, %44 : vector<4x32xf32>
    %cst_23 = arith.constant 9.99999974E-6 : f32
    %46 = vector.broadcast %cst_23 : f32 to vector<4x1xf32>
    %47 = arith.addf %43, %46 : vector<4x1xf32>
    %48 = math.rsqrt %47 : vector<4x1xf32>
    %49 = vector.broadcast %48 : vector<4x1xf32> to vector<4x32xf32>
    %50 = arith.mulf %45, %49 : vector<4x32xf32>
    %51 = vector.broadcast %31 : vector<1x32xf32> to vector<4x32xf32>
    %52 = arith.mulf %50, %51 : vector<4x32xf32>
    %53 = vector.broadcast %32 : vector<1x32xf32> to vector<4x32xf32>
    %54 = arith.addf %52, %53 : vector<4x32xf32>
    %cst_24 = arith.constant 0.000000e+00 : f32
    %55 = vector.broadcast %cst_24 : f32 to vector<128x32xf32>
    %c0_25 = arith.constant 0 : index
    %c0_26 = arith.constant 0 : index
    %56 = vector.load %arg31[%c0_25, %c0_26] : memref<128x32xf32, #tpu.memory_space<vmem>>, vector<128x32xf32>
    tpu.vector_store %arg31[%c0_25, %c0_26], %55 {strides = array<i32>} : memref<128x32xf32, #tpu.memory_space<vmem>>, vector<128x32xf32>,
    %c0_27 = arith.constant 0 : index
    %c0_28 = arith.constant 0 : index
    %57 = vector.load %arg31[%c0_27, %c0_28] : memref<128x32xf32, #tpu.memory_space<vmem>>, vector<64x32xf32>
    tpu.vector_store %arg31[%c0_27, %c0_28], %25 {strides = array<i32>} : memref<128x32xf32, #tpu.memory_space<vmem>>, vector<64x32xf32>,
    %c64 = arith.constant 64 : index
    %c0_29 = arith.constant 0 : index
    %58 = vector.load %arg31[%c64, %c0_29] : memref<128x32xf32, #tpu.memory_space<vmem>>, vector<4x32xf32>
    tpu.vector_store %arg31[%c64, %c0_29], %54 {strides = array<i32>} : memref<128x32xf32, #tpu.memory_space<vmem>>, vector<4x32xf32>,
    %c0_30 = arith.constant 0 : index
    %c0_31 = arith.constant 0 : index
    %59 = vector.load %arg31[%c0_30, %c0_31] : memref<128x32xf32, #tpu.memory_space<vmem>>, vector<128x32xf32>
    %60 = arith.truncf %59 : vector<128x32xf32> to vector<128x32xbf16>
    %61 = tpu.transpose %59, [1, 0] : vector<128x32xf32> -> vector<32x128xf32>
    %62 = arith.truncf %61 : vector<32x128xf32> to vector<32x128xbf16>
    %c0_32 = arith.constant 0 : index
    %c0_33 = arith.constant 0 : index
    %63 = vector.load %arg10[%c0_32, %c0_33] : memref<32x32xbf16, #tpu.memory_space<vmem>>, vector<32x32xbf16>
    %cst_34 = arith.constant dense<0.000000e+00> : vector<128x32xf32>
    %64 = tpu.matmul %60, %63, %cst_34 {dimension_numbers = #tpu.dot_dimension_numbers<[1], [0], [0], [1], [0, 0, 1, 1], [], []>} : vector<128x32xbf16>, vector<32x32xbf16>, vector<128x32xf32> -> vector<128x32xf32>
    %c0_35 = arith.constant 0 : index
    %c0_36 = arith.constant 0 : index
    %65 = vector.load %arg11[%c0_35, %c0_36] : memref<1x32xf32, #tpu.memory_space<vmem>>, vector<1x32xf32>
    %66 = vector.broadcast %65 : vector<1x32xf32> to vector<128x32xf32>
    %67 = arith.addf %64, %66 : vector<128x32xf32>
    %68 = arith.truncf %67 : vector<128x32xf32> to vector<128x32xbf16>
    %69 = arith.truncf %25 : vector<64x32xf32> to vector<64x32xbf16>
    %cst_37 = arith.constant 0.000000e+00 : f32
    %70 = vector.broadcast %cst_37 : f32 to vector<64x32xf32>
    %c0_38 = arith.constant 0 : index
    %c0_39 = arith.constant 0 : index
    %c0_40 = arith.constant 0 : index
    %71 = vector.load %arg8[%c0_38, %c0_39, %c0_40] : memref<4x32x32xbf16, #tpu.memory_space<vmem>>, vector<1x32x32xbf16>
    %72 = vector.shape_cast %71 : vector<1x32x32xbf16> to vector<32x32xbf16>
    %cst_41 = arith.constant dense<0.000000e+00> : vector<64x32xf32>
    %73 = tpu.matmul %69, %72, %cst_41 {dimension_numbers = #tpu.dot_dimension_numbers<[1], [0], [0], [1], [0, 0, 1, 1], [], []>} : vector<64x32xbf16>, vector<32x32xbf16>, vector<64x32xf32> -> vector<64x32xf32>
    %c0_42 = arith.constant 0 : index
    %c0_43 = arith.constant 0 : index
    %c0_44 = arith.constant 0 : index
    %74 = vector.load %arg9[%c0_42, %c0_43, %c0_44] : memref<4x1x32xf32, #tpu.memory_space<vmem>>, vector<1x1x32xf32>
    %75 = vector.shape_cast %74 : vector<1x1x32xf32> to vector<1x32xf32>
    %76 = vector.broadcast %75 : vector<1x32xf32> to vector<64x32xf32>
    %77 = arith.addf %73, %76 : vector<64x32xf32>
    %78 = arith.truncf %77 : vector<64x32xf32> to vector<64x32xbf16>
    %cst_45 = arith.constant dense<0.000000e+00> : vector<64x128xf32>
    %79 = tpu.matmul %78, %62, %cst_45 {dimension_numbers = #tpu.dot_dimension_numbers<[1], [0], [0], [1], [0, 0, 1, 1], [], []>} : vector<64x32xbf16>, vector<32x128xbf16>, vector<64x128xf32> -> vector<64x128xf32>
    %c0_46 = arith.constant 0 : index
    %c0_47 = arith.constant 0 : index
    %c0_48 = arith.constant 0 : index
    %80 = vector.load %arg12[%c0_46, %c0_47, %c0_48] : memref<4x64x128xf32, #tpu.memory_space<vmem>>, vector<1x64x128xf32>
    %81 = vector.shape_cast %80 : vector<1x64x128xf32> to vector<64x128xf32>
    %82 = arith.addf %79, %81 : vector<64x128xf32>
    %cst_49 = arith.constant dense<0xFF800000> : vector<64xf32>
    %83 = vector.multi_reduction <maximumf>, %82, %cst_49 [1] : vector<64x128xf32> to vector<64xf32>
    %84 = vector.shape_cast %83 : vector<64xf32> to vector<64x1xf32>
    %85 = vector.broadcast %84 : vector<64x1xf32> to vector<64x128xf32>
    %86 = arith.subf %82, %85 : vector<64x128xf32>
    %87 = math.exp %86 : vector<64x128xf32>
    %cst_50 = arith.constant dense<0.000000e+00> : vector<64xf32>
    %88 = vector.multi_reduction <add>, %87, %cst_50 [1] : vector<64x128xf32> to vector<64xf32>
    %89 = vector.shape_cast %88 : vector<64xf32> to vector<64x1xf32>
    %90 = tpu.reciprocal %89 {approx = true} : vector<64x1xf32> -> vector<64x1xf32>
    %91 = arith.truncf %87 : vector<64x128xf32> to vector<64x128xbf16>
    %cst_51 = arith.constant dense<0.000000e+00> : vector<64x32xf32>
    %92 = tpu.matmul %91, %68, %cst_51 {dimension_numbers = #tpu.dot_dimension_numbers<[1], [0], [0], [1], [0, 0, 1, 1], [], []>} : vector<64x128xbf16>, vector<128x32xbf16>, vector<64x32xf32> -> vector<64x32xf32>
    %93 = vector.broadcast %90 : vector<64x1xf32> to vector<64x32xf32>
    %94 = arith.mulf %92, %93 : vector<64x32xf32>
    %95 = arith.truncf %94 : vector<64x32xf32> to vector<64x32xbf16>
    %c0_52 = arith.constant 0 : index
    %c0_53 = arith.constant 0 : index
    %c0_54 = arith.constant 0 : index
    %96 = vector.load %arg13[%c0_52, %c0_53, %c0_54] : memref<4x32x32xbf16, #tpu.memory_space<vmem>>, vector<1x32x32xbf16>
    %97 = vector.shape_cast %96 : vector<1x32x32xbf16> to vector<32x32xbf16>
    %cst_55 = arith.constant dense<0.000000e+00> : vector<64x32xf32>
    %98 = tpu.matmul %95, %97, %cst_55 {dimension_numbers = #tpu.dot_dimension_numbers<[1], [0], [0], [1], [0, 0, 1, 1], [], []>} : vector<64x32xbf16>, vector<32x32xbf16>, vector<64x32xf32> -> vector<64x32xf32>
    %99 = arith.addf %70, %98 : vector<64x32xf32>
    %c1 = arith.constant 1 : index
    %c0_56 = arith.constant 0 : index
    %c0_57 = arith.constant 0 : index
    %100 = vector.load %arg8[%c1, %c0_56, %c0_57] : memref<4x32x32xbf16, #tpu.memory_space<vmem>>, vector<1x32x32xbf16>
    %101 = vector.shape_cast %100 : vector<1x32x32xbf16> to vector<32x32xbf16>
    %cst_58 = arith.constant dense<0.000000e+00> : vector<64x32xf32>
    %102 = tpu.matmul %69, %101, %cst_58 {dimension_numbers = #tpu.dot_dimension_numbers<[1], [0], [0], [1], [0, 0, 1, 1], [], []>} : vector<64x32xbf16>, vector<32x32xbf16>, vector<64x32xf32> -> vector<64x32xf32>
    %c1_59 = arith.constant 1 : index
    %c0_60 = arith.constant 0 : index
    %c0_61 = arith.constant 0 : index
    %103 = vector.load %arg9[%c1_59, %c0_60, %c0_61] : memref<4x1x32xf32, #tpu.memory_space<vmem>>, vector<1x1x32xf32>
    %104 = vector.shape_cast %103 : vector<1x1x32xf32> to vector<1x32xf32>
    %105 = vector.broadcast %104 : vector<1x32xf32> to vector<64x32xf32>
    %106 = arith.addf %102, %105 : vector<64x32xf32>
    %107 = arith.truncf %106 : vector<64x32xf32> to vector<64x32xbf16>
    %cst_62 = arith.constant dense<0.000000e+00> : vector<64x128xf32>
    %108 = tpu.matmul %107, %62, %cst_62 {dimension_numbers = #tpu.dot_dimension_numbers<[1], [0], [0], [1], [0, 0, 1, 1], [], []>} : vector<64x32xbf16>, vector<32x128xbf16>, vector<64x128xf32> -> vector<64x128xf32>
    %c1_63 = arith.constant 1 : index
    %c0_64 = arith.constant 0 : index
    %c0_65 = arith.constant 0 : index
    %109 = vector.load %arg12[%c1_63, %c0_64, %c0_65] : memref<4x64x128xf32, #tpu.memory_space<vmem>>, vector<1x64x128xf32>
    %110 = vector.shape_cast %109 : vector<1x64x128xf32> to vector<64x128xf32>
    %111 = arith.addf %108, %110 : vector<64x128xf32>
    %cst_66 = arith.constant dense<0xFF800000> : vector<64xf32>
    %112 = vector.multi_reduction <maximumf>, %111, %cst_66 [1] : vector<64x128xf32> to vector<64xf32>
    %113 = vector.shape_cast %112 : vector<64xf32> to vector<64x1xf32>
    %114 = vector.broadcast %113 : vector<64x1xf32> to vector<64x128xf32>
    %115 = arith.subf %111, %114 : vector<64x128xf32>
    %116 = math.exp %115 : vector<64x128xf32>
    %cst_67 = arith.constant dense<0.000000e+00> : vector<64xf32>
    %117 = vector.multi_reduction <add>, %116, %cst_67 [1] : vector<64x128xf32> to vector<64xf32>
    %118 = vector.shape_cast %117 : vector<64xf32> to vector<64x1xf32>
    %119 = tpu.reciprocal %118 {approx = true} : vector<64x1xf32> -> vector<64x1xf32>
    %120 = arith.truncf %116 : vector<64x128xf32> to vector<64x128xbf16>
    %cst_68 = arith.constant dense<0.000000e+00> : vector<64x32xf32>
    %121 = tpu.matmul %120, %68, %cst_68 {dimension_numbers = #tpu.dot_dimension_numbers<[1], [0], [0], [1], [0, 0, 1, 1], [], []>} : vector<64x128xbf16>, vector<128x32xbf16>, vector<64x32xf32> -> vector<64x32xf32>
    %122 = vector.broadcast %119 : vector<64x1xf32> to vector<64x32xf32>
    %123 = arith.mulf %121, %122 : vector<64x32xf32>
    %124 = arith.truncf %123 : vector<64x32xf32> to vector<64x32xbf16>
    %c1_69 = arith.constant 1 : index
    %c0_70 = arith.constant 0 : index
    %c0_71 = arith.constant 0 : index
    %125 = vector.load %arg13[%c1_69, %c0_70, %c0_71] : memref<4x32x32xbf16, #tpu.memory_space<vmem>>, vector<1x32x32xbf16>
    %126 = vector.shape_cast %125 : vector<1x32x32xbf16> to vector<32x32xbf16>
    %cst_72 = arith.constant dense<0.000000e+00> : vector<64x32xf32>
    %127 = tpu.matmul %124, %126, %cst_72 {dimension_numbers = #tpu.dot_dimension_numbers<[1], [0], [0], [1], [0, 0, 1, 1], [], []>} : vector<64x32xbf16>, vector<32x32xbf16>, vector<64x32xf32> -> vector<64x32xf32>
    %128 = arith.addf %99, %127 : vector<64x32xf32>
    %c2 = arith.constant 2 : index
    %c0_73 = arith.constant 0 : index
    %c0_74 = arith.constant 0 : index
    %129 = vector.load %arg8[%c2, %c0_73, %c0_74] : memref<4x32x32xbf16, #tpu.memory_space<vmem>>, vector<1x32x32xbf16>
    %130 = vector.shape_cast %129 : vector<1x32x32xbf16> to vector<32x32xbf16>
    %cst_75 = arith.constant dense<0.000000e+00> : vector<64x32xf32>
    %131 = tpu.matmul %69, %130, %cst_75 {dimension_numbers = #tpu.dot_dimension_numbers<[1], [0], [0], [1], [0, 0, 1, 1], [], []>} : vector<64x32xbf16>, vector<32x32xbf16>, vector<64x32xf32> -> vector<64x32xf32>
    %c2_76 = arith.constant 2 : index
    %c0_77 = arith.constant 0 : index
    %c0_78 = arith.constant 0 : index
    %132 = vector.load %arg9[%c2_76, %c0_77, %c0_78] : memref<4x1x32xf32, #tpu.memory_space<vmem>>, vector<1x1x32xf32>
    %133 = vector.shape_cast %132 : vector<1x1x32xf32> to vector<1x32xf32>
    %134 = vector.broadcast %133 : vector<1x32xf32> to vector<64x32xf32>
    %135 = arith.addf %131, %134 : vector<64x32xf32>
    %136 = arith.truncf %135 : vector<64x32xf32> to vector<64x32xbf16>
    %cst_79 = arith.constant dense<0.000000e+00> : vector<64x128xf32>
    %137 = tpu.matmul %136, %62, %cst_79 {dimension_numbers = #tpu.dot_dimension_numbers<[1], [0], [0], [1], [0, 0, 1, 1], [], []>} : vector<64x32xbf16>, vector<32x128xbf16>, vector<64x128xf32> -> vector<64x128xf32>
    %c2_80 = arith.constant 2 : index
    %c0_81 = arith.constant 0 : index
    %c0_82 = arith.constant 0 : index
    %138 = vector.load %arg12[%c2_80, %c0_81, %c0_82] : memref<4x64x128xf32, #tpu.memory_space<vmem>>, vector<1x64x128xf32>
    %139 = vector.shape_cast %138 : vector<1x64x128xf32> to vector<64x128xf32>
    %140 = arith.addf %137, %139 : vector<64x128xf32>
    %cst_83 = arith.constant dense<0xFF800000> : vector<64xf32>
    %141 = vector.multi_reduction <maximumf>, %140, %cst_83 [1] : vector<64x128xf32> to vector<64xf32>
    %142 = vector.shape_cast %141 : vector<64xf32> to vector<64x1xf32>
    %143 = vector.broadcast %142 : vector<64x1xf32> to vector<64x128xf32>
    %144 = arith.subf %140, %143 : vector<64x128xf32>
    %145 = math.exp %144 : vector<64x128xf32>
    %cst_84 = arith.constant dense<0.000000e+00> : vector<64xf32>
    %146 = vector.multi_reduction <add>, %145, %cst_84 [1] : vector<64x128xf32> to vector<64xf32>
    %147 = vector.shape_cast %146 : vector<64xf32> to vector<64x1xf32>
    %148 = tpu.reciprocal %147 {approx = true} : vector<64x1xf32> -> vector<64x1xf32>
    %149 = arith.truncf %145 : vector<64x128xf32> to vector<64x128xbf16>
    %cst_85 = arith.constant dense<0.000000e+00> : vector<64x32xf32>
    %150 = tpu.matmul %149, %68, %cst_85 {dimension_numbers = #tpu.dot_dimension_numbers<[1], [0], [0], [1], [0, 0, 1, 1], [], []>} : vector<64x128xbf16>, vector<128x32xbf16>, vector<64x32xf32> -> vector<64x32xf32>
    %151 = vector.broadcast %148 : vector<64x1xf32> to vector<64x32xf32>
    %152 = arith.mulf %150, %151 : vector<64x32xf32>
    %153 = arith.truncf %152 : vector<64x32xf32> to vector<64x32xbf16>
    %c2_86 = arith.constant 2 : index
    %c0_87 = arith.constant 0 : index
    %c0_88 = arith.constant 0 : index
    %154 = vector.load %arg13[%c2_86, %c0_87, %c0_88] : memref<4x32x32xbf16, #tpu.memory_space<vmem>>, vector<1x32x32xbf16>
    %155 = vector.shape_cast %154 : vector<1x32x32xbf16> to vector<32x32xbf16>
    %cst_89 = arith.constant dense<0.000000e+00> : vector<64x32xf32>
    %156 = tpu.matmul %153, %155, %cst_89 {dimension_numbers = #tpu.dot_dimension_numbers<[1], [0], [0], [1], [0, 0, 1, 1], [], []>} : vector<64x32xbf16>, vector<32x32xbf16>, vector<64x32xf32> -> vector<64x32xf32>
    %157 = arith.addf %128, %156 : vector<64x32xf32>
    %c3 = arith.constant 3 : index
    %c0_90 = arith.constant 0 : index
    %c0_91 = arith.constant 0 : index
    %158 = vector.load %arg8[%c3, %c0_90, %c0_91] : memref<4x32x32xbf16, #tpu.memory_space<vmem>>, vector<1x32x32xbf16>
    %159 = vector.shape_cast %158 : vector<1x32x32xbf16> to vector<32x32xbf16>
    %cst_92 = arith.constant dense<0.000000e+00> : vector<64x32xf32>
    %160 = tpu.matmul %69, %159, %cst_92 {dimension_numbers = #tpu.dot_dimension_numbers<[1], [0], [0], [1], [0, 0, 1, 1], [], []>} : vector<64x32xbf16>, vector<32x32xbf16>, vector<64x32xf32> -> vector<64x32xf32>
    %c3_93 = arith.constant 3 : index
    %c0_94 = arith.constant 0 : index
    %c0_95 = arith.constant 0 : index
    %161 = vector.load %arg9[%c3_93, %c0_94, %c0_95] : memref<4x1x32xf32, #tpu.memory_space<vmem>>, vector<1x1x32xf32>
    %162 = vector.shape_cast %161 : vector<1x1x32xf32> to vector<1x32xf32>
    %163 = vector.broadcast %162 : vector<1x32xf32> to vector<64x32xf32>
    %164 = arith.addf %160, %163 : vector<64x32xf32>
    %165 = arith.truncf %164 : vector<64x32xf32> to vector<64x32xbf16>
    %cst_96 = arith.constant dense<0.000000e+00> : vector<64x128xf32>
    %166 = tpu.matmul %165, %62, %cst_96 {dimension_numbers = #tpu.dot_dimension_numbers<[1], [0], [0], [1], [0, 0, 1, 1], [], []>} : vector<64x32xbf16>, vector<32x128xbf16>, vector<64x128xf32> -> vector<64x128xf32>
    %c3_97 = arith.constant 3 : index
    %c0_98 = arith.constant 0 : index
    %c0_99 = arith.constant 0 : index
    %167 = vector.load %arg12[%c3_97, %c0_98, %c0_99] : memref<4x64x128xf32, #tpu.memory_space<vmem>>, vector<1x64x128xf32>
    %168 = vector.shape_cast %167 : vector<1x64x128xf32> to vector<64x128xf32>
    %169 = arith.addf %166, %168 : vector<64x128xf32>
    %cst_100 = arith.constant dense<0xFF800000> : vector<64xf32>
    %170 = vector.multi_reduction <maximumf>, %169, %cst_100 [1] : vector<64x128xf32> to vector<64xf32>
    %171 = vector.shape_cast %170 : vector<64xf32> to vector<64x1xf32>
    %172 = vector.broadcast %171 : vector<64x1xf32> to vector<64x128xf32>
    %173 = arith.subf %169, %172 : vector<64x128xf32>
    %174 = math.exp %173 : vector<64x128xf32>
    %cst_101 = arith.constant dense<0.000000e+00> : vector<64xf32>
    %175 = vector.multi_reduction <add>, %174, %cst_101 [1] : vector<64x128xf32> to vector<64xf32>
    %176 = vector.shape_cast %175 : vector<64xf32> to vector<64x1xf32>
    %177 = tpu.reciprocal %176 {approx = true} : vector<64x1xf32> -> vector<64x1xf32>
    %178 = arith.truncf %174 : vector<64x128xf32> to vector<64x128xbf16>
    %cst_102 = arith.constant dense<0.000000e+00> : vector<64x32xf32>
    %179 = tpu.matmul %178, %68, %cst_102 {dimension_numbers = #tpu.dot_dimension_numbers<[1], [0], [0], [1], [0, 0, 1, 1], [], []>} : vector<64x128xbf16>, vector<128x32xbf16>, vector<64x32xf32> -> vector<64x32xf32>
    %180 = vector.broadcast %177 : vector<64x1xf32> to vector<64x32xf32>
    %181 = arith.mulf %179, %180 : vector<64x32xf32>
    %182 = arith.truncf %181 : vector<64x32xf32> to vector<64x32xbf16>
    %c3_103 = arith.constant 3 : index
    %c0_104 = arith.constant 0 : index
    %c0_105 = arith.constant 0 : index
    %183 = vector.load %arg13[%c3_103, %c0_104, %c0_105] : memref<4x32x32xbf16, #tpu.memory_space<vmem>>, vector<1x32x32xbf16>
    %184 = vector.shape_cast %183 : vector<1x32x32xbf16> to vector<32x32xbf16>
    %cst_106 = arith.constant dense<0.000000e+00> : vector<64x32xf32>
    %185 = tpu.matmul %182, %184, %cst_106 {dimension_numbers = #tpu.dot_dimension_numbers<[1], [0], [0], [1], [0, 0, 1, 1], [], []>} : vector<64x32xbf16>, vector<32x32xbf16>, vector<64x32xf32> -> vector<64x32xf32>
    %186 = arith.addf %157, %185 : vector<64x32xf32>
    %c0_107 = arith.constant 0 : index
    %c0_108 = arith.constant 0 : index
    %c0_109 = arith.constant 0 : index
    %187 = vector.load %arg1[%c0_107, %c0_108, %c0_109] : memref<1x64x32xf32, #tpu.memory_space<vmem>>, vector<1x64x32xf32>
    %188 = vector.shape_cast %187 : vector<1x64x32xf32> to vector<64x32xf32>
    %c0_110 = arith.constant 0 : index
    %c0_111 = arith.constant 0 : index
    %189 = vector.load %arg15[%c0_110, %c0_111] : memref<1x32xf32, #tpu.memory_space<vmem>>, vector<1x32xf32>
    %c0_112 = arith.constant 0 : index
    %c0_113 = arith.constant 0 : index
    %190 = vector.load %arg14[%c0_112, %c0_113] : memref<1x32xf32, #tpu.memory_space<vmem>>, vector<1x32xf32>
    %191 = vector.broadcast %190 : vector<1x32xf32> to vector<64x32xf32>
    %192 = arith.addf %186, %191 : vector<64x32xf32>
    %193 = vector.broadcast %189 : vector<1x32xf32> to vector<64x32xf32>
    %194 = arith.mulf %193, %192 : vector<64x32xf32>
    %195 = arith.addf %188, %194 : vector<64x32xf32>
    %c0_114 = arith.constant 0 : index
    %c0_115 = arith.constant 0 : index
    %c0_116 = arith.constant 0 : index
    %196 = vector.load %arg16[%c0_114, %c0_115, %c0_116] : memref<4x64x32xf32, #tpu.memory_space<vmem>>, vector<1x64x32xf32>
    %197 = vector.shape_cast %196 : vector<1x64x32xf32> to vector<64x32xf32>
    %198 = arith.mulf %197, %195 : vector<64x32xf32>
    %cst_117 = arith.constant dense<0.000000e+00> : vector<32xf32>
    %199 = vector.multi_reduction <add>, %198, %cst_117 [0] : vector<64x32xf32> to vector<32xf32>
    %200 = vector.shape_cast %199 : vector<32xf32> to vector<1x32xf32>
    %c1_118 = arith.constant 1 : index
    %c0_119 = arith.constant 0 : index
    %c0_120 = arith.constant 0 : index
    %201 = vector.load %arg16[%c1_118, %c0_119, %c0_120] : memref<4x64x32xf32, #tpu.memory_space<vmem>>, vector<1x64x32xf32>
    %202 = vector.shape_cast %201 : vector<1x64x32xf32> to vector<64x32xf32>
    %203 = arith.mulf %202, %195 : vector<64x32xf32>
    %cst_121 = arith.constant dense<0.000000e+00> : vector<32xf32>
    %204 = vector.multi_reduction <add>, %203, %cst_121 [0] : vector<64x32xf32> to vector<32xf32>
    %205 = vector.shape_cast %204 : vector<32xf32> to vector<1x32xf32>
    %c2_122 = arith.constant 2 : index
    %c0_123 = arith.constant 0 : index
    %c0_124 = arith.constant 0 : index
    %206 = vector.load %arg16[%c2_122, %c0_123, %c0_124] : memref<4x64x32xf32, #tpu.memory_space<vmem>>, vector<1x64x32xf32>
    %207 = vector.shape_cast %206 : vector<1x64x32xf32> to vector<64x32xf32>
    %208 = arith.mulf %207, %195 : vector<64x32xf32>
    %cst_125 = arith.constant dense<0.000000e+00> : vector<32xf32>
    %209 = vector.multi_reduction <add>, %208, %cst_125 [0] : vector<64x32xf32> to vector<32xf32>
    %210 = vector.shape_cast %209 : vector<32xf32> to vector<1x32xf32>
    %c3_126 = arith.constant 3 : index
    %c0_127 = arith.constant 0 : index
    %c0_128 = arith.constant 0 : index
    %211 = vector.load %arg16[%c3_126, %c0_127, %c0_128] : memref<4x64x32xf32, #tpu.memory_space<vmem>>, vector<1x64x32xf32>
    %212 = vector.shape_cast %211 : vector<1x64x32xf32> to vector<64x32xf32>
    %213 = arith.mulf %212, %195 : vector<64x32xf32>
    %cst_129 = arith.constant dense<0.000000e+00> : vector<32xf32>
    %214 = vector.multi_reduction <add>, %213, %cst_129 [0] : vector<64x32xf32> to vector<32xf32>
    %215 = vector.shape_cast %214 : vector<32xf32> to vector<1x32xf32>
    %216 = tpu.concatenate %200, %205, %210, %215 in 0 : vector<1x32xf32>, vector<1x32xf32>, vector<1x32xf32>, vector<1x32xf32> -> vector<4x32xf32>
    %c0_130 = arith.constant 0 : index
    %c0_131 = arith.constant 0 : index
    %c0_132 = arith.constant 0 : index
    %217 = vector.load %arg30[%c0_130, %c0_131, %c0_132] : memref<1x4x32xf32, #tpu.memory_space<vmem>>, vector<1x4x32xf32>
    %218 = vector.shape_cast %217 : vector<1x4x32xf32> to vector<4x32xf32>
    %219 = vector.shape_cast %216 : vector<4x32xf32> to vector<1x4x32xf32>
    tpu.vector_store %arg30[%c0_130, %c0_131, %c0_132], %219 {strides = array<i32>} : memref<1x4x32xf32, #tpu.memory_space<vmem>>, vector<1x4x32xf32>,
    %cst_133 = arith.constant 0.000000e+00 : f32
    %220 = vector.broadcast %cst_133 : f32 to vector<96x32xf32>
    %c0_134 = arith.constant 0 : index
    %c0_135 = arith.constant 0 : index
    %221 = vector.load %arg32[%c0_134, %c0_135] : memref<96x32xf32, #tpu.memory_space<vmem>>, vector<96x32xf32>
    tpu.vector_store %arg32[%c0_134, %c0_135], %220 {strides = array<i32>} : memref<96x32xf32, #tpu.memory_space<vmem>>, vector<96x32xf32>,
    %c16 = arith.constant 16 : index
    %c0_136 = arith.constant 0 : index
    %222 = vector.load %arg32[%c16, %c0_136] : memref<96x32xf32, #tpu.memory_space<vmem>>, vector<64x32xf32>
    tpu.vector_store %arg32[%c16, %c0_136], %195 {strides = array<i32>} : memref<96x32xf32, #tpu.memory_space<vmem>>, vector<64x32xf32>,
    %cst_137 = arith.constant 0.000000e+00 : f32
    %223 = vector.broadcast %cst_137 : f32 to vector<64x32xf32>
    %c7 = arith.constant 7 : index
    %c0_138 = arith.constant 0 : index
    %224 = vector.load %arg32[%c7, %c0_138] : memref<96x32xf32, #tpu.memory_space<vmem>>, vector<64x32xf32>
    %c0_139 = arith.constant 0 : index
    %c0_140 = arith.constant 0 : index
    %c0_141 = arith.constant 0 : index
    %225 = vector.load %arg17[%c0_139, %c0_140, %c0_141] : memref<9x64x32xf32, #tpu.memory_space<vmem>>, vector<1x64x32xf32>
    %226 = vector.shape_cast %225 : vector<1x64x32xf32> to vector<64x32xf32>
    %227 = arith.mulf %224, %226 : vector<64x32xf32>
    %228 = arith.addf %223, %227 : vector<64x32xf32>
    %c8 = arith.constant 8 : index
    %c0_142 = arith.constant 0 : index
    %229 = vector.load %arg32[%c8, %c0_142] : memref<96x32xf32, #tpu.memory_space<vmem>>, vector<64x32xf32>
    %c1_143 = arith.constant 1 : index
    %c0_144 = arith.constant 0 : index
    %c0_145 = arith.constant 0 : index
    %230 = vector.load %arg17[%c1_143, %c0_144, %c0_145] : memref<9x64x32xf32, #tpu.memory_space<vmem>>, vector<1x64x32xf32>
    %231 = vector.shape_cast %230 : vector<1x64x32xf32> to vector<64x32xf32>
    %232 = arith.mulf %229, %231 : vector<64x32xf32>
    %233 = arith.addf %228, %232 : vector<64x32xf32>
    %c9 = arith.constant 9 : index
    %c0_146 = arith.constant 0 : index
    %234 = vector.load %arg32[%c9, %c0_146] : memref<96x32xf32, #tpu.memory_space<vmem>>, vector<64x32xf32>
    %c2_147 = arith.constant 2 : index
    %c0_148 = arith.constant 0 : index
    %c0_149 = arith.constant 0 : index
    %235 = vector.load %arg17[%c2_147, %c0_148, %c0_149] : memref<9x64x32xf32, #tpu.memory_space<vmem>>, vector<1x64x32xf32>
    %236 = vector.shape_cast %235 : vector<1x64x32xf32> to vector<64x32xf32>
    %237 = arith.mulf %234, %236 : vector<64x32xf32>
    %238 = arith.addf %233, %237 : vector<64x32xf32>
    %c15 = arith.constant 15 : index
    %c0_150 = arith.constant 0 : index
    %239 = vector.load %arg32[%c15, %c0_150] : memref<96x32xf32, #tpu.memory_space<vmem>>, vector<64x32xf32>
    %c3_151 = arith.constant 3 : index
    %c0_152 = arith.constant 0 : index
    %c0_153 = arith.constant 0 : index
    %240 = vector.load %arg17[%c3_151, %c0_152, %c0_153] : memref<9x64x32xf32, #tpu.memory_space<vmem>>, vector<1x64x32xf32>
    %241 = vector.shape_cast %240 : vector<1x64x32xf32> to vector<64x32xf32>
    %242 = arith.mulf %239, %241 : vector<64x32xf32>
    %243 = arith.addf %238, %242 : vector<64x32xf32>
    %c16_154 = arith.constant 16 : index
    %c0_155 = arith.constant 0 : index
    %244 = vector.load %arg32[%c16_154, %c0_155] : memref<96x32xf32, #tpu.memory_space<vmem>>, vector<64x32xf32>
    %c4 = arith.constant 4 : index
    %c0_156 = arith.constant 0 : index
    %c0_157 = arith.constant 0 : index
    %245 = vector.load %arg17[%c4, %c0_156, %c0_157] : memref<9x64x32xf32, #tpu.memory_space<vmem>>, vector<1x64x32xf32>
    %246 = vector.shape_cast %245 : vector<1x64x32xf32> to vector<64x32xf32>
    %247 = arith.mulf %244, %246 : vector<64x32xf32>
    %248 = arith.addf %243, %247 : vector<64x32xf32>
    %c17 = arith.constant 17 : index
    %c0_158 = arith.constant 0 : index
    %249 = vector.load %arg32[%c17, %c0_158] : memref<96x32xf32, #tpu.memory_space<vmem>>, vector<64x32xf32>
    %c5 = arith.constant 5 : index
    %c0_159 = arith.constant 0 : index
    %c0_160 = arith.constant 0 : index
    %250 = vector.load %arg17[%c5, %c0_159, %c0_160] : memref<9x64x32xf32, #tpu.memory_space<vmem>>, vector<1x64x32xf32>
    %251 = vector.shape_cast %250 : vector<1x64x32xf32> to vector<64x32xf32>
    %252 = arith.mulf %249, %251 : vector<64x32xf32>
    %253 = arith.addf %248, %252 : vector<64x32xf32>
    %c23 = arith.constant 23 : index
    %c0_161 = arith.constant 0 : index
    %254 = vector.load %arg32[%c23, %c0_161] : memref<96x32xf32, #tpu.memory_space<vmem>>, vector<64x32xf32>
    %c6 = arith.constant 6 : index
    %c0_162 = arith.constant 0 : index
    %c0_163 = arith.constant 0 : index
    %255 = vector.load %arg17[%c6, %c0_162, %c0_163] : memref<9x64x32xf32, #tpu.memory_space<vmem>>, vector<1x64x32xf32>
    %256 = vector.shape_cast %255 : vector<1x64x32xf32> to vector<64x32xf32>
    %257 = arith.mulf %254, %256 : vector<64x32xf32>
    %258 = arith.addf %253, %257 : vector<64x32xf32>
    %c24 = arith.constant 24 : index
    %c0_164 = arith.constant 0 : index
    %259 = vector.load %arg32[%c24, %c0_164] : memref<96x32xf32, #tpu.memory_space<vmem>>, vector<64x32xf32>
    %c7_165 = arith.constant 7 : index
    %c0_166 = arith.constant 0 : index
    %c0_167 = arith.constant 0 : index
    %260 = vector.load %arg17[%c7_165, %c0_166, %c0_167] : memref<9x64x32xf32, #tpu.memory_space<vmem>>, vector<1x64x32xf32>
    %261 = vector.shape_cast %260 : vector<1x64x32xf32> to vector<64x32xf32>
    %262 = arith.mulf %259, %261 : vector<64x32xf32>
    %263 = arith.addf %258, %262 : vector<64x32xf32>
    %c25 = arith.constant 25 : index
    %c0_168 = arith.constant 0 : index
    %264 = vector.load %arg32[%c25, %c0_168] : memref<96x32xf32, #tpu.memory_space<vmem>>, vector<64x32xf32>
    %c8_169 = arith.constant 8 : index
    %c0_170 = arith.constant 0 : index
    %c0_171 = arith.constant 0 : index
    %265 = vector.load %arg17[%c8_169, %c0_170, %c0_171] : memref<9x64x32xf32, #tpu.memory_space<vmem>>, vector<1x64x32xf32>
    %266 = vector.shape_cast %265 : vector<1x64x32xf32> to vector<64x32xf32>
    %267 = arith.mulf %264, %266 : vector<64x32xf32>
    %268 = arith.addf %263, %267 : vector<64x32xf32>
    %c0_172 = arith.constant 0 : index
    %c0_173 = arith.constant 0 : index
    %269 = vector.load %arg18[%c0_172, %c0_173] : memref<1x32xf32, #tpu.memory_space<vmem>>, vector<1x32xf32>
    %270 = vector.broadcast %269 : vector<1x32xf32> to vector<64x32xf32>
    %271 = arith.mulf %268, %270 : vector<64x32xf32>
    %c0_174 = arith.constant 0 : index
    %c0_175 = arith.constant 0 : index
    %272 = vector.load %arg19[%c0_174, %c0_175] : memref<1x32xf32, #tpu.memory_space<vmem>>, vector<1x32xf32>
    %273 = vector.broadcast %272 : vector<1x32xf32> to vector<64x32xf32>
    %274 = arith.addf %271, %273 : vector<64x32xf32>
    %c0_176 = arith.constant 0 : index
    %c0_177 = arith.constant 0 : index
    %275 = vector.load %arg20[%c0_176, %c0_177] : memref<1x32xf32, #tpu.memory_space<vmem>>, vector<1x32xf32>
    %c0_178 = arith.constant 0 : index
    %c0_179 = arith.constant 0 : index
    %276 = vector.load %arg21[%c0_178, %c0_179] : memref<1x32xf32, #tpu.memory_space<vmem>>, vector<1x32xf32>
    %cst_180 = arith.constant dense<0.000000e+00> : vector<64xf32>
    %277 = vector.multi_reduction <add>, %274, %cst_180 [1] : vector<64x32xf32> to vector<64xf32>
    %278 = vector.shape_cast %277 : vector<64xf32> to vector<64x1xf32>
    %cst_181 = arith.constant 3.200000e+01 : f32
    %279 = vector.broadcast %cst_181 : f32 to vector<64x1xf32>
    %280 = arith.divf %278, %279 : vector<64x1xf32>
    %281 = vector.broadcast %280 : vector<64x1xf32> to vector<64x32xf32>
    %282 = arith.subf %274, %281 : vector<64x32xf32>
    %283 = arith.mulf %282, %282 : vector<64x32xf32>
    %cst_182 = arith.constant dense<0.000000e+00> : vector<64xf32>
    %284 = vector.multi_reduction <add>, %283, %cst_182 [1] : vector<64x32xf32> to vector<64xf32>
    %285 = vector.shape_cast %284 : vector<64xf32> to vector<64x1xf32>
    %cst_183 = arith.constant 3.200000e+01 : f32
    %286 = vector.broadcast %cst_183 : f32 to vector<64x1xf32>
    %287 = arith.divf %285, %286 : vector<64x1xf32>
    %288 = vector.broadcast %280 : vector<64x1xf32> to vector<64x32xf32>
    %289 = arith.subf %274, %288 : vector<64x32xf32>
    %cst_184 = arith.constant 9.99999974E-6 : f32
    %290 = vector.broadcast %cst_184 : f32 to vector<64x1xf32>
    %291 = arith.addf %287, %290 : vector<64x1xf32>
    %292 = math.rsqrt %291 : vector<64x1xf32>
    %293 = vector.broadcast %292 : vector<64x1xf32> to vector<64x32xf32>
    %294 = arith.mulf %289, %293 : vector<64x32xf32>
    %295 = vector.broadcast %275 : vector<1x32xf32> to vector<64x32xf32>
    %296 = arith.mulf %294, %295 : vector<64x32xf32>
    %297 = vector.broadcast %276 : vector<1x32xf32> to vector<64x32xf32>
    %298 = arith.addf %296, %297 : vector<64x32xf32>
    %c0_185 = arith.constant 0 : index
    %c0_186 = arith.constant 0 : index
    %299 = vector.load %arg22[%c0_185, %c0_186] : memref<1x32xf32, #tpu.memory_space<vmem>>, vector<1x32xf32>
    %c0_187 = arith.constant 0 : index
    %c0_188 = arith.constant 0 : index
    %300 = vector.load %arg23[%c0_187, %c0_188] : memref<1x32xf32, #tpu.memory_space<vmem>>, vector<1x32xf32>
    %cst_189 = arith.constant dense<0.000000e+00> : vector<64xf32>
    %301 = vector.multi_reduction <add>, %298, %cst_189 [1] : vector<64x32xf32> to vector<64xf32>
    %302 = vector.shape_cast %301 : vector<64xf32> to vector<64x1xf32>
    %cst_190 = arith.constant 3.200000e+01 : f32
    %303 = vector.broadcast %cst_190 : f32 to vector<64x1xf32>
    %304 = arith.divf %302, %303 : vector<64x1xf32>
    %305 = vector.broadcast %304 : vector<64x1xf32> to vector<64x32xf32>
    %306 = arith.subf %298, %305 : vector<64x32xf32>
    %307 = arith.mulf %306, %306 : vector<64x32xf32>
    %cst_191 = arith.constant dense<0.000000e+00> : vector<64xf32>
    %308 = vector.multi_reduction <add>, %307, %cst_191 [1] : vector<64x32xf32> to vector<64xf32>
    %309 = vector.shape_cast %308 : vector<64xf32> to vector<64x1xf32>
    %cst_192 = arith.constant 3.200000e+01 : f32
    %310 = vector.broadcast %cst_192 : f32 to vector<64x1xf32>
    %311 = arith.divf %309, %310 : vector<64x1xf32>
    %312 = vector.broadcast %304 : vector<64x1xf32> to vector<64x32xf32>
    %313 = arith.subf %298, %312 : vector<64x32xf32>
    %cst_193 = arith.constant 9.99999974E-6 : f32
    %314 = vector.broadcast %cst_193 : f32 to vector<64x1xf32>
    %315 = arith.addf %311, %314 : vector<64x1xf32>
    %316 = math.rsqrt %315 : vector<64x1xf32>
    %317 = vector.broadcast %316 : vector<64x1xf32> to vector<64x32xf32>
    %318 = arith.mulf %313, %317 : vector<64x32xf32>
    %319 = vector.broadcast %299 : vector<1x32xf32> to vector<64x32xf32>
    %320 = arith.mulf %318, %319 : vector<64x32xf32>
    %321 = vector.broadcast %300 : vector<1x32xf32> to vector<64x32xf32>
    %322 = arith.addf %320, %321 : vector<64x32xf32>
    %323 = arith.truncf %322 : vector<64x32xf32> to vector<64x32xbf16>
    %c0_194 = arith.constant 0 : index
    %c0_195 = arith.constant 0 : index
    %324 = vector.load %arg24[%c0_194, %c0_195] : memref<32x128xbf16, #tpu.memory_space<vmem>>, vector<32x128xbf16>
    %cst_196 = arith.constant dense<0.000000e+00> : vector<64x128xf32>
    %325 = tpu.matmul %323, %324, %cst_196 {dimension_numbers = #tpu.dot_dimension_numbers<[1], [0], [0], [1], [0, 0, 1, 1], [], []>} : vector<64x32xbf16>, vector<32x128xbf16>, vector<64x128xf32> -> vector<64x128xf32>
    %c0_197 = arith.constant 0 : index
    %c0_198 = arith.constant 0 : index
    %326 = vector.load %arg25[%c0_197, %c0_198] : memref<1x128xf32, #tpu.memory_space<vmem>>, vector<1x128xf32>
    %327 = vector.broadcast %326 : vector<1x128xf32> to vector<64x128xf32>
    %328 = arith.addf %325, %327 : vector<64x128xf32>
    %cst_199 = arith.constant 5.000000e-01 : f32
    %329 = vector.broadcast %cst_199 : f32 to vector<64x128xf32>
    %330 = arith.mulf %329, %328 : vector<64x128xf32>
    %cst_200 = arith.constant 4.471500e-02 : f32
    %331 = vector.broadcast %cst_200 : f32 to vector<64x128xf32>
    %332 = arith.mulf %331, %328 : vector<64x128xf32>
    %333 = arith.mulf %332, %328 : vector<64x128xf32>
    %334 = arith.mulf %333, %328 : vector<64x128xf32>
    %335 = arith.addf %328, %334 : vector<64x128xf32>
    %cst_201 = arith.constant 0.797884583 : f32
    %336 = vector.broadcast %cst_201 : f32 to vector<64x128xf32>
    %337 = arith.mulf %336, %335 : vector<64x128xf32>
    %338 = math.tanh %337 : vector<64x128xf32>
    %cst_202 = arith.constant 1.000000e+00 : f32
    %339 = vector.broadcast %cst_202 : f32 to vector<64x128xf32>
    %340 = arith.addf %339, %338 : vector<64x128xf32>
    %341 = arith.mulf %330, %340 : vector<64x128xf32>
    %342 = arith.truncf %341 : vector<64x128xf32> to vector<64x128xbf16>
    %c0_203 = arith.constant 0 : index
    %c0_204 = arith.constant 0 : index
    %343 = vector.load %arg26[%c0_203, %c0_204] : memref<128x32xbf16, #tpu.memory_space<vmem>>, vector<128x32xbf16>
    %cst_205 = arith.constant dense<0.000000e+00> : vector<64x32xf32>
    %344 = tpu.matmul %342, %343, %cst_205 {dimension_numbers = #tpu.dot_dimension_numbers<[1], [0], [0], [1], [0, 0, 1, 1], [], []>} : vector<64x128xbf16>, vector<128x32xbf16>, vector<64x32xf32> -> vector<64x32xf32>
    %c0_206 = arith.constant 0 : index
    %c0_207 = arith.constant 0 : index
    %345 = vector.load %arg27[%c0_206, %c0_207] : memref<1x32xf32, #tpu.memory_space<vmem>>, vector<1x32xf32>
    %346 = vector.broadcast %345 : vector<1x32xf32> to vector<64x32xf32>
    %347 = arith.addf %344, %346 : vector<64x32xf32>
    %c0_208 = arith.constant 0 : index
    %c0_209 = arith.constant 0 : index
    %348 = vector.load %arg28[%c0_208, %c0_209] : memref<1x32xf32, #tpu.memory_space<vmem>>, vector<1x32xf32>
    %349 = vector.broadcast %348 : vector<1x32xf32> to vector<64x32xf32>
    %350 = arith.mulf %349, %347 : vector<64x32xf32>
    %351 = arith.addf %274, %350 : vector<64x32xf32>
    %c0_210 = arith.constant 0 : index
    %c0_211 = arith.constant 0 : index
    %c0_212 = arith.constant 0 : index
    %352 = vector.load %arg29[%c0_210, %c0_211, %c0_212] : memref<1x64x32xf32, #tpu.memory_space<vmem>>, vector<1x64x32xf32>
    %353 = vector.shape_cast %352 : vector<1x64x32xf32> to vector<64x32xf32>
    %354 = vector.shape_cast %351 : vector<64x32xf32> to vector<1x64x32xf32>
    tpu.vector_store %arg29[%c0_210, %c0_211, %c0_212], %354 {strides = array<i32>} : memref<1x64x32xf32, #tpu.memory_space<vmem>>, vector<1x64x32xf32>,
    return
  }
  func.func @transform_0(%arg0: i32) -> (i32, i32, i32) {
    %c0_i32 = arith.constant 0 : i32
    %c0_i32_0 = arith.constant 0 : i32
    %c0_i32_1 = arith.constant 0 : i32
    return %arg0, %c0_i32, %c0_i32_0 : i32, i32, i32
  }
  func.func @transform_1(%arg0: i32) -> (i32, i32, i32) {
    %c0_i32 = arith.constant 0 : i32
    %c0_i32_0 = arith.constant 0 : i32
    %c0_i32_1 = arith.constant 0 : i32
    return %arg0, %c0_i32, %c0_i32_0 : i32, i32, i32
  }
  func.func @transform_2(%arg0: i32) -> (i32, i32) {
    %c0_i32 = arith.constant 0 : i32
    %c0_i32_0 = arith.constant 0 : i32
    %c0_i32_1 = arith.constant 0 : i32
    return %c0_i32, %c0_i32_0 : i32, i32
  }
  func.func @transform_3(%arg0: i32) -> (i32, i32) {
    %c0_i32 = arith.constant 0 : i32
    %c0_i32_0 = arith.constant 0 : i32
    %c0_i32_1 = arith.constant 0 : i32
    return %c0_i32, %c0_i32_0 : i32, i32
  }
  func.func @transform_4(%arg0: i32) -> (i32, i32) {
    %c0_i32 = arith.constant 0 : i32
    %c0_i32_0 = arith.constant 0 : i32
    %c0_i32_1 = arith.constant 0 : i32
    return %c0_i32, %c0_i32_0 : i32, i32
  }
  func.func @transform_5(%arg0: i32) -> (i32, i32) {
    %c0_i32 = arith.constant 0 : i32
    %c0_i32_0 = arith.constant 0 : i32
    %c0_i32_1 = arith.constant 0 : i32
    return %c0_i32, %c0_i32_0 : i32, i32
  }
  func.func @transform_6(%arg0: i32) -> (i32, i32) {
    %c0_i32 = arith.constant 0 : i32
    %c0_i32_0 = arith.constant 0 : i32
    %c0_i32_1 = arith.constant 0 : i32
    return %c0_i32, %c0_i32_0 : i32, i32
  }
  func.func @transform_7(%arg0: i32) -> (i32, i32, i32) {
    %c0_i32 = arith.constant 0 : i32
    %c0_i32_0 = arith.constant 0 : i32
    %c0_i32_1 = arith.constant 0 : i32
    %c0_i32_2 = arith.constant 0 : i32
    return %c0_i32, %c0_i32_0, %c0_i32_1 : i32, i32, i32
  }
  func.func @transform_8(%arg0: i32) -> (i32, i32, i32) {
    %c0_i32 = arith.constant 0 : i32
    %c0_i32_0 = arith.constant 0 : i32
    %c0_i32_1 = arith.constant 0 : i32
    %c0_i32_2 = arith.constant 0 : i32
    return %c0_i32, %c0_i32_0, %c0_i32_1 : i32, i32, i32
  }
  func.func @transform_9(%arg0: i32) -> (i32, i32) {
    %c0_i32 = arith.constant 0 : i32
    %c0_i32_0 = arith.constant 0 : i32
    %c0_i32_1 = arith.constant 0 : i32
    return %c0_i32, %c0_i32_0 : i32, i32
  }
  func.func @transform_10(%arg0: i32) -> (i32, i32) {
    %c0_i32 = arith.constant 0 : i32
    %c0_i32_0 = arith.constant 0 : i32
    %c0_i32_1 = arith.constant 0 : i32
    return %c0_i32, %c0_i32_0 : i32, i32
  }
  func.func @transform_11(%arg0: i32) -> (i32, i32, i32) {
    %c0_i32 = arith.constant 0 : i32
    %c0_i32_0 = arith.constant 0 : i32
    %c0_i32_1 = arith.constant 0 : i32
    %c0_i32_2 = arith.constant 0 : i32
    return %c0_i32, %c0_i32_0, %c0_i32_1 : i32, i32, i32
  }
  func.func @transform_12(%arg0: i32) -> (i32, i32, i32) {
    %c0_i32 = arith.constant 0 : i32
    %c0_i32_0 = arith.constant 0 : i32
    %c0_i32_1 = arith.constant 0 : i32
    %c0_i32_2 = arith.constant 0 : i32
    return %c0_i32, %c0_i32_0, %c0_i32_1 : i32, i32, i32
  }
  func.func @transform_13(%arg0: i32) -> (i32, i32) {
    %c0_i32 = arith.constant 0 : i32
    %c0_i32_0 = arith.constant 0 : i32
    %c0_i32_1 = arith.constant 0 : i32
    return %c0_i32, %c0_i32_0 : i32, i32
  }
  func.func @transform_14(%arg0: i32) -> (i32, i32) {
    %c0_i32 = arith.constant 0 : i32
    %c0_i32_0 = arith.constant 0 : i32
    %c0_i32_1 = arith.constant 0 : i32
    return %c0_i32, %c0_i32_0 : i32, i32
  }
  func.func @transform_15(%arg0: i32) -> (i32, i32, i32) {
    %c0_i32 = arith.constant 0 : i32
    %c0_i32_0 = arith.constant 0 : i32
    %c0_i32_1 = arith.constant 0 : i32
    %c0_i32_2 = arith.constant 0 : i32
    return %c0_i32, %c0_i32_0, %c0_i32_1 : i32, i32, i32
  }
  func.func @transform_16(%arg0: i32) -> (i32, i32, i32) {
    %c0_i32 = arith.constant 0 : i32
    %c0_i32_0 = arith.constant 0 : i32
    %c0_i32_1 = arith.constant 0 : i32
    %c0_i32_2 = arith.constant 0 : i32
    return %c0_i32, %c0_i32_0, %c0_i32_1 : i32, i32, i32
  }
  func.func @transform_17(%arg0: i32) -> (i32, i32) {
    %c0_i32 = arith.constant 0 : i32
    %c0_i32_0 = arith.constant 0 : i32
    %c0_i32_1 = arith.constant 0 : i32
    return %c0_i32, %c0_i32_0 : i32, i32
  }
  func.func @transform_18(%arg0: i32) -> (i32, i32) {
    %c0_i32 = arith.constant 0 : i32
    %c0_i32_0 = arith.constant 0 : i32
    %c0_i32_1 = arith.constant 0 : i32
    return %c0_i32, %c0_i32_0 : i32, i32
  }
  func.func @transform_19(%arg0: i32) -> (i32, i32) {
    %c0_i32 = arith.constant 0 : i32
    %c0_i32_0 = arith.constant 0 : i32
    %c0_i32_1 = arith.constant 0 : i32
    return %c0_i32, %c0_i32_0 : i32, i32
  }
  func.func @transform_20(%arg0: i32) -> (i32, i32) {
    %c0_i32 = arith.constant 0 : i32
    %c0_i32_0 = arith.constant 0 : i32
    %c0_i32_1 = arith.constant 0 : i32
    return %c0_i32, %c0_i32_0 : i32, i32
  }
  func.func @transform_21(%arg0: i32) -> (i32, i32) {
    %c0_i32 = arith.constant 0 : i32
    %c0_i32_0 = arith.constant 0 : i32
    %c0_i32_1 = arith.constant 0 : i32
    return %c0_i32, %c0_i32_0 : i32, i32
  }
  func.func @transform_22(%arg0: i32) -> (i32, i32) {
    %c0_i32 = arith.constant 0 : i32
    %c0_i32_0 = arith.constant 0 : i32
    %c0_i32_1 = arith.constant 0 : i32
    return %c0_i32, %c0_i32_0 : i32, i32
  }
  func.func @transform_23(%arg0: i32) -> (i32, i32) {
    %c0_i32 = arith.constant 0 : i32
    %c0_i32_0 = arith.constant 0 : i32
    %c0_i32_1 = arith.constant 0 : i32
    return %c0_i32, %c0_i32_0 : i32, i32
  }
  func.func @transform_24(%arg0: i32) -> (i32, i32) {
    %c0_i32 = arith.constant 0 : i32
    %c0_i32_0 = arith.constant 0 : i32
    %c0_i32_1 = arith.constant 0 : i32
    return %c0_i32, %c0_i32_0 : i32, i32
  }
  func.func @transform_25(%arg0: i32) -> (i32, i32) {
    %c0_i32 = arith.constant 0 : i32
    %c0_i32_0 = arith.constant 0 : i32
    %c0_i32_1 = arith.constant 0 : i32
    return %c0_i32, %c0_i32_0 : i32, i32
  }
  func.func @transform_26(%arg0: i32) -> (i32, i32) {
    %c0_i32 = arith.constant 0 : i32
    %c0_i32_0 = arith.constant 0 : i32
    %c0_i32_1 = arith.constant 0 : i32
    return %c0_i32, %c0_i32_0 : i32, i32
  }
  func.func @transform_27(%arg0: i32) -> (i32, i32) {
    %c0_i32 = arith.constant 0 : i32
    %c0_i32_0 = arith.constant 0 : i32
    %c0_i32_1 = arith.constant 0 : i32
    return %c0_i32, %c0_i32_0 : i32, i32
  }
  func.func @transform_28(%arg0: i32) -> (i32, i32, i32) {
    %c0_i32 = arith.constant 0 : i32
    %c0_i32_0 = arith.constant 0 : i32
    %c0_i32_1 = arith.constant 0 : i32
    return %arg0, %c0_i32, %c0_i32_0 : i32, i32, i32
  }
  func.func @transform_29(%arg0: i32) -> (i32, i32, i32) {
    %c0_i32 = arith.constant 0 : i32
    %c0_i32_0 = arith.constant 0 : i32
    %c0_i32_1 = arith.constant 0 : i32
    return %arg0, %c0_i32, %c0_i32_0 : i32, i32, i32
  }
}

</mosaic_0001>

<llo_original>
// kernel: fca_block_forward.1
$region0: #{fca_block_forward.1}
  #allocation0 [shape = 'u32[]', space=smem, size = 0x4, offset = 0x4, fixed_abs, tag = 'smem constant byte address 0x4 - core index']
  #allocation1 [shape = 'u32[144,128]{1,0:T(1,128)}', space=vmem, size = 0x12000, scoped, tag = 'internal scratch']
  #allocation2 [shape = 'f32[128,32]{1,0:T(8,128)}', space=vmem, size = 0x10000, scoped, tag = 'scratch operand']
  #allocation3 [shape = 'f32[96,32]{1,0:T(8,128)}', space=vmem, size = 0xc000, scoped, tag = 'scratch operand']
  %s0 = inlined_call_operand.smem [shape: u32[30], index: -1, kind: input, shape index: {}]
  %s1 = sld [smem:[%s0]]
  %s2 = scalar_lea.smem %s0, 1
  %s3 = sld [smem:[%s2]]
  %s4 = scalar_lea.smem %s0, 2
  %s5 = sld [smem:[%s4]]
  %s6 = scalar_lea.smem %s0, 3
  %s7 = sld [smem:[%s6]]
  %s8 = scalar_lea.smem %s0, 4
  %s9 = sld [smem:[%s8]]
  %s10 = scalar_lea.smem %s0, 5
  %s11 = sld [smem:[%s10]]
  %s12 = scalar_lea.smem %s0, 6
  %s13 = sld [smem:[%s12]]
  %s14 = scalar_lea.smem %s0, 7
  %s15 = sld [smem:[%s14]]
  %s16 = scalar_lea.smem %s0, 8
  %s17 = sld [smem:[%s16]]
  %s18 = scalar_lea.smem %s0, 9
  %s19 = sld [smem:[%s18]]
  %s20 = scalar_lea.smem %s0, 10
  %s21 = sld [smem:[%s20]]
  %s22 = scalar_lea.smem %s0, 11
  %s23 = sld [smem:[%s22]]
  %s24 = scalar_lea.smem %s0, 12
  %s25 = sld [smem:[%s24]]
  %s26 = scalar_lea.smem %s0, 13
  %s27 = sld [smem:[%s26]]
  %s28 = scalar_lea.smem %s0, 14
  %s29 = sld [smem:[%s28]]
  %s30 = scalar_lea.smem %s0, 15
  %s31 = sld [smem:[%s30]]
  %s32 = scalar_lea.smem %s0, 16
  %s33 = sld [smem:[%s32]]
  %s34 = scalar_lea.smem %s0, 17
  %s35 = sld [smem:[%s34]]
  %s36 = scalar_lea.smem %s0, 18
  %s37 = sld [smem:[%s36]]
  %s38 = scalar_lea.smem %s0, 19
  %s39 = sld [smem:[%s38]]
  %s40 = scalar_lea.smem %s0, 20
  %s41 = sld [smem:[%s40]]
  %s42 = scalar_lea.smem %s0, 21
  %s43 = sld [smem:[%s42]]
  %s44 = scalar_lea.smem %s0, 22
  %s45 = sld [smem:[%s44]]
  %s46 = scalar_lea.smem %s0, 23
  %s47 = sld [smem:[%s46]]
  %s48 = scalar_lea.smem %s0, 24
  %s49 = sld [smem:[%s48]]
  %s50 = scalar_lea.smem %s0, 25
  %s51 = sld [smem:[%s50]]
  %s52 = scalar_lea.smem %s0, 26
  %s53 = sld [smem:[%s52]]
  %s54 = scalar_lea.smem %s0, 27
  %s55 = sld [smem:[%s54]]
  %s56 = scalar_lea.smem %s0, 28
  %s57 = sld [smem:[%s56]]
  %s58 = scalar_lea.smem %s0, 29
  %s59 = sld [smem:[%s58]]
  %60 = xla_tuple %s57, %s59
  %s61 = sld [smem:[#allocation0]]
  $region153: #{fca_block_forward.1} parent=0
    _
  %s63 = ssub.s32 1, %s61
  %s64 = scalar_select 0, %s63, %s61
  $region1: #{fca_block_forward.1} parent=0
    #allocation4 [shape = 'u8[4096]{0}', space=vmem, size = 0x1000, scoped, tag = 'output window, operand 1']
    #allocation5 [shape = 's32[2]{0}', space=sflag, size = 0x8, scoped, tag = 'scoped memory for fca_block_forward.1']
    %65 = vsyncpa [#allocation5], 0
    %s66 = scalar_lea.sflag [#allocation5], 1
    %67 = vsyncpa %s66, 0
    loop: start=0, step=1, limit=4
    $region2: #{fca_block_forward.1} parent=1 // loop_pre_header
      _
    $region3: #{fca_block_forward.1} parent=1 // loop_header
      %s69 = sphi 0, %s73
      %p70 = scmp.ge.s32.totalorder %s69, 4
      %s79 = sphi 0, %s81
      %s82 = sphi 0, %s79
      %s83 = sphi 0, %s82
      %s99 = sphi 0, %s83
      %s105 = sphi 0, %s107
      %s108 = sphi 0, %s105
      %s109 = sphi 0, %s108
      %s125 = sphi 0, %s109
      %s129 = sphi 0, %s129
      %s131 = sphi 0, %s129
      %s132 = sphi 0, %s131
      %s146 = sphi 0, %s132
      %s150 = sphi 0, %s150
      %s152 = sphi 0, %s150
      %s153 = sphi 0, %s152
      %s167 = sphi 0, %s153
      %s171 = sphi 0, %s171
      %s173 = sphi 0, %s171
      %s174 = sphi 0, %s173
      %s188 = sphi 0, %s174
      %s192 = sphi 0, %s192
      %s194 = sphi 0, %s192
      %s195 = sphi 0, %s194
      %s209 = sphi 0, %s195
      %s213 = sphi 0, %s213
      %s215 = sphi 0, %s213
      %s216 = sphi 0, %s215
      %s230 = sphi 0, %s216
      %s234 = sphi 0, %s234
      %s236 = sphi 0, %s234
      %s237 = sphi 0, %s236
      %s251 = sphi 0, %s237
      %s255 = sphi 0, %s255
      %s257 = sphi 0, %s255
      %s258 = sphi 0, %s257
      %s272 = sphi 0, %s258
      %s276 = sphi 0, %s276
      %s278 = sphi 0, %s276
      %s279 = sphi 0, %s278
      %s293 = sphi 0, %s279
      %s297 = sphi 0, %s297
      %s299 = sphi 0, %s297
      %s300 = sphi 0, %s299
      %s314 = sphi 0, %s300
      %s318 = sphi 0, %s318
      %s320 = sphi 0, %s318
      %s321 = sphi 0, %s320
      %s335 = sphi 0, %s321
      %s339 = sphi 0, %s339
      %s341 = sphi 0, %s339
      %s342 = sphi 0, %s341
      %s356 = sphi 0, %s342
      %s360 = sphi 0, %s360
      %s362 = sphi 0, %s360
      %s363 = sphi 0, %s362
      %s377 = sphi 0, %s363
      %s381 = sphi 0, %s381
      %s383 = sphi 0, %s381
      %s384 = sphi 0, %s383
      %s398 = sphi 0, %s384
      %s402 = sphi 0, %s402
      %s404 = sphi 0, %s402
      %s405 = sphi 0, %s404
      %s419 = sphi 0, %s405
      %s423 = sphi 0, %s423
      %s425 = sphi 0, %s423
      %s426 = sphi 0, %s425
      %s440 = sphi 0, %s426
      %s444 = sphi 0, %s444
      %s446 = sphi 0, %s444
      %s447 = sphi 0, %s446
      %s461 = sphi 0, %s447
      %s465 = sphi 0, %s465
      %s467 = sphi 0, %s465
      %s468 = sphi 0, %s467
      %s482 = sphi 0, %s468
      %s486 = sphi 0, %s486
      %s488 = sphi 0, %s486
      %s489 = sphi 0, %s488
      %s503 = sphi 0, %s489
      %s507 = sphi 0, %s507
      %s509 = sphi 0, %s507
      %s510 = sphi 0, %s509
      %s524 = sphi 0, %s510
      %s528 = sphi 0, %s528
      %s530 = sphi 0, %s528
      %s531 = sphi 0, %s530
      %s545 = sphi 0, %s531
      %s549 = sphi 0, %s549
      %s551 = sphi 0, %s549
      %s552 = sphi 0, %s551
      %s566 = sphi 0, %s552
      %s570 = sphi 0, %s570
      %s572 = sphi 0, %s570
      %s573 = sphi 0, %s572
      %s587 = sphi 0, %s573
      %s591 = sphi 0, %s591
      %s593 = sphi 0, %s591
      %s594 = sphi 0, %s593
      %s608 = sphi 0, %s594
      %s612 = sphi 0, %s612
      %s614 = sphi 0, %s612
      %s615 = sphi 0, %s614
      %s629 = sphi 0, %s615
      %s633 = sphi 0, %s633
      %s635 = sphi 0, %s633
      %s636 = sphi 0, %s635
      %s650 = sphi 0, %s636
      %s654 = sphi 0, %s654
      %s656 = sphi 0, %s654
      %s657 = sphi 0, %s656
      %s671 = sphi 0, %s657
      %s677 = sphi 0, %s679
      %s680 = sphi 0, %s677
      %s681 = sphi 0, %s680
      %s697 = sphi 0, %s681
      %s703 = sphi 0, %s705
      %s706 = sphi 0, %s703
      %s707 = sphi 0, %s706
      %s723 = sphi 0, %s707
    $region4: #{fca_block_forward.1} parent=1 // loop_header_branch
      %72 = sbr.rel (%p70) target = $region8
    $region5: #{fca_block_forward.1} parent=1 // loop_body
      %s74 = ssub.s32 %s69, 1
      %s75 = ssub.s32 %s69, 2
      %s76 = sadd.s32 %s69, 1
      %s77 = ssub.s32 %s69, %s76
      %p78 = scmp.eq.s32.totalorder %s77, 0
      %s80 = sadd.s32 %s79, 1
      %s81 = scalar_select %p78, %s79, %s80
      %p84 = pneg %p78
      %p85 = scmp.eq.s32.totalorder %s69, 1
      %p86 = por %p84, %p85
      %p87 = scmp.ne.s32.totalorder %s79, %s82
      %p88 = scmp.eq.s32.totalorder %s69, 0
      %p89 = por %p87, %p88
      %p90 = scmp.ne.s32.totalorder %s79, %s82
      %p91 = scmp.eq.s32.totalorder %s74, 1
      %p92 = por %p90, %p91
      %p93 = scmp.ne.s32.totalorder %s82, %s83
      %p94 = scmp.eq.s32.totalorder %s74, 0
      %p95 = por %p93, %p94
      %p96 = scmp.ne.s32.totalorder %s82, %s83
      %p97 = scmp.eq.s32.totalorder %s75, 1
      %p98 = por %p96, %p97
      %p100 = scmp.ne.s32.totalorder %s83, %s99
      %p101 = scmp.eq.s32.totalorder %s75, 0
      %p102 = por %p100, %p101
      %s103 = ssub.s32 %s69, %s76
      %p104 = scmp.eq.s32.totalorder %s103, 0
      %s106 = sadd.s32 %s105, 1
      %s107 = scalar_select %p104, %s105, %s106
      %p110 = pneg %p104
      %p111 = scmp.eq.s32.totalorder %s69, 1
      %p112 = por %p110, %p111
      %p113 = scmp.ne.s32.totalorder %s105, %s108
      %p114 = scmp.eq.s32.totalorder %s69, 0
      %p115 = por %p113, %p114
      %p116 = scmp.ne.s32.totalorder %s105, %s108
      %p117 = scmp.eq.s32.totalorder %s74, 1
      %p118 = por %p116, %p117
      %p119 = scmp.ne.s32.totalorder %s108, %s109
      %p120 = scmp.eq.s32.totalorder %s74, 0
      %p121 = por %p119, %p120
      %p122 = scmp.ne.s32.totalorder %s108, %s109
      %p123 = scmp.eq.s32.totalorder %s75, 1
      %p124 = por %p122, %p123
      %p126 = scmp.ne.s32.totalorder %s109, %s125
      %p127 = scmp.eq.s32.totalorder %s75, 0
      %p128 = por %p126, %p127
      %s130 = sadd.s32 %s129, 1
      %p133 = scmp.eq.s32.totalorder %s69, 1
      %p134 = scmp.ne.s32.totalorder %s129, %s131
      %p135 = scmp.eq.s32.totalorder %s69, 0
      %p136 = por %p134, %p135
      %p137 = scmp.ne.s32.totalorder %s129, %s131
      %p138 = scmp.eq.s32.totalorder %s74, 1
      %p139 = por %p137, %p138
      %p140 = scmp.ne.s32.totalorder %s131, %s132
      %p141 = scmp.eq.s32.totalorder %s74, 0
      %p142 = por %p140, %p141
      %p143 = scmp.ne.s32.totalorder %s131, %s132
      %p144 = scmp.eq.s32.totalorder %s75, 1
      %p145 = por %p143, %p144
      %p147 = scmp.ne.s32.totalorder %s132, %s146
      %p148 = scmp.eq.s32.totalorder %s75, 0
      %p149 = por %p147, %p148
      %s151 = sadd.s32 %s150, 1
      %p154 = scmp.eq.s32.totalorder %s69, 1
      %p155 = scmp.ne.s32.totalorder %s150, %s152
      %p156 = scmp.eq.s32.totalorder %s69, 0
      %p157 = por %p155, %p156
      %p158 = scmp.ne.s32.totalorder %s150, %s152
      %p159 = scmp.eq.s32.totalorder %s74, 1
      %p160 = por %p158, %p159
      %p161 = scmp.ne.s32.totalorder %s152, %s153
      %p162 = scmp.eq.s32.totalorder %s74, 0
      %p163 = por %p161, %p162
      %p164 = scmp.ne.s32.totalorder %s152, %s153
      %p165 = scmp.eq.s32.totalorder %s75, 1
      %p166 = por %p164, %p165
      %p168 = scmp.ne.s32.totalorder %s153, %s167
      %p169 = scmp.eq.s32.totalorder %s75, 0
      %p170 = por %p168, %p169
      %s172 = sadd.s32 %s171, 1
      %p175 = scmp.eq.s32.totalorder %s69, 1
      %p176 = scmp.ne.s32.totalorder %s171, %s173
      %p177 = scmp.eq.s32.totalorder %s69, 0
      %p178 = por %p176, %p177
      %p179 = scmp.ne.s32.totalorder %s171, %s173
      %p180 = scmp.eq.s32.totalorder %s74, 1
      %p181 = por %p179, %p180
      %p182 = scmp.ne.s32.totalorder %s173, %s174
      %p183 = scmp.eq.s32.totalorder %s74, 0
      %p184 = por %p182, %p183
      %p185 = scmp.ne.s32.totalorder %s173, %s174
      %p186 = scmp.eq.s32.totalorder %s75, 1
      %p187 = por %p185, %p186
      %p189 = scmp.ne.s32.totalorder %s174, %s188
      %p190 = scmp.eq.s32.totalorder %s75, 0
      %p191 = por %p189, %p190
      %s193 = sadd.s32 %s192, 1
      %p196 = scmp.eq.s32.totalorder %s69, 1
      %p197 = scmp.ne.s32.totalorder %s192, %s194
      %p198 = scmp.eq.s32.totalorder %s69, 0
      %p199 = por %p197, %p198
      %p200 = scmp.ne.s32.totalorder %s192, %s194
      %p201 = scmp.eq.s32.totalorder %s74, 1
      %p202 = por %p200, %p201
      %p203 = scmp.ne.s32.totalorder %s194, %s195
      %p204 = scmp.eq.s32.totalorder %s74, 0
      %p205 = por %p203, %p204
      %p206 = scmp.ne.s32.totalorder %s194, %s195
      %p207 = scmp.eq.s32.totalorder %s75, 1
      %p208 = por %p206, %p207
      %p210 = scmp.ne.s32.totalorder %s195, %s209
      %p211 = scmp.eq.s32.totalorder %s75, 0
      %p212 = por %p210, %p211
      %s214 = sadd.s32 %s213, 1
      %p217 = scmp.eq.s32.totalorder %s69, 1
      %p218 = scmp.ne.s32.totalorder %s213, %s215
      %p219 = scmp.eq.s32.totalorder %s69, 0
      %p220 = por %p218, %p219
      %p221 = scmp.ne.s32.totalorder %s213, %s215
      %p222 = scmp.eq.s32.totalorder %s74, 1
      %p223 = por %p221, %p222
      %p224 = scmp.ne.s32.totalorder %s215, %s216
      %p225 = scmp.eq.s32.totalorder %s74, 0
      %p226 = por %p224, %p225
      %p227 = scmp.ne.s32.totalorder %s215, %s216
      %p228 = scmp.eq.s32.totalorder %s75, 1
      %p229 = por %p227, %p228
      %p231 = scmp.ne.s32.totalorder %s216, %s230
      %p232 = scmp.eq.s32.totalorder %s75, 0
      %p233 = por %p231, %p232
      %s235 = sadd.s32 %s234, 1
      %p238 = scmp.eq.s32.totalorder %s69, 1
      %p239 = scmp.ne.s32.totalorder %s234, %s236
      %p240 = scmp.eq.s32.totalorder %s69, 0
      %p241 = por %p239, %p240
      %p242 = scmp.ne.s32.totalorder %s234, %s236
      %p243 = scmp.eq.s32.totalorder %s74, 1
      %p244 = por %p242, %p243
      %p245 = scmp.ne.s32.totalorder %s236, %s237
      %p246 = scmp.eq.s32.totalorder %s74, 0
      %p247 = por %p245, %p246
      %p248 = scmp.ne.s32.totalorder %s236, %s237
      %p249 = scmp.eq.s32.totalorder %s75, 1
      %p250 = por %p248, %p249
      %p252 = scmp.ne.s32.totalorder %s237, %s251
      %p253 = scmp.eq.s32.totalorder %s75, 0
      %p254 = por %p252, %p253
      %s256 = sadd.s32 %s255, 1
      %p259 = scmp.eq.s32.totalorder %s69, 1
      %p260 = scmp.ne.s32.totalorder %s255, %s257
      %p261 = scmp.eq.s32.totalorder %s69, 0
      %p262 = por %p260, %p261
      %p263 = scmp.ne.s32.totalorder %s255, %s257
      %p264 = scmp.eq.s32.totalorder %s74, 1
      %p265 = por %p263, %p264
      %p266 = scmp.ne.s32.totalorder %s257, %s258
      %p267 = scmp.eq.s32.totalorder %s74, 0
      %p268 = por %p266, %p267
      %p269 = scmp.ne.s32.totalorder %s257, %s258
      %p270 = scmp.eq.s32.totalorder %s75, 1
      %p271 = por %p269, %p270
      %p273 = scmp.ne.s32.totalorder %s258, %s272
      %p274 = scmp.eq.s32.totalorder %s75, 0
      %p275 = por %p273, %p274
      %s277 = sadd.s32 %s276, 1
      %p280 = scmp.eq.s32.totalorder %s69, 1
      %p281 = scmp.ne.s32.totalorder %s276, %s278
      %p282 = scmp.eq.s32.totalorder %s69, 0
      %p283 = por %p281, %p282
      %p284 = scmp.ne.s32.totalorder %s276, %s278
      %p285 = scmp.eq.s32.totalorder %s74, 1
      %p286 = por %p284, %p285
      %p287 = scmp.ne.s32.totalorder %s278, %s279
      %p288 = scmp.eq.s32.totalorder %s74, 0
      %p289 = por %p287, %p288
      %p290 = scmp.ne.s32.totalorder %s278, %s279
      %p291 = scmp.eq.s32.totalorder %s75, 1
      %p292 = por %p290, %p291
      %p294 = scmp.ne.s32.totalorder %s279, %s293
      %p295 = scmp.eq.s32.totalorder %s75, 0
      %p296 = por %p294, %p295
      %s298 = sadd.s32 %s297, 1
      %p301 = scmp.eq.s32.totalorder %s69, 1
      %p302 = scmp.ne.s32.totalorder %s297, %s299
      %p303 = scmp.eq.s32.totalorder %s69, 0
      %p304 = por %p302, %p303
      %p305 = scmp.ne.s32.totalorder %s297, %s299
      %p306 = scmp.eq.s32.totalorder %s74, 1
      %p307 = por %p305, %p306
      %p308 = scmp.ne.s32.totalorder %s299, %s300
      %p309 = scmp.eq.s32.totalorder %s74, 0
      %p310 = por %p308, %p309
      %p311 = scmp.ne.s32.totalorder %s299, %s300
      %p312 = scmp.eq.s32.totalorder %s75, 1
      %p313 = por %p311, %p312
      %p315 = scmp.ne.s32.totalorder %s300, %s314
      %p316 = scmp.eq.s32.totalorder %s75, 0
      %p317 = por %p315, %p316
      %s319 = sadd.s32 %s318, 1
      %p322 = scmp.eq.s32.totalorder %s69, 1
      %p323 = scmp.ne.s32.totalorder %s318, %s320
      %p324 = scmp.eq.s32.totalorder %s69, 0
      %p325 = por %p323, %p324
      %p326 = scmp.ne.s32.totalorder %s318, %s320
      %p327 = scmp.eq.s32.totalorder %s74, 1
      %p328 = por %p326, %p327
      %p329 = scmp.ne.s32.totalorder %s320, %s321
      %p330 = scmp.eq.s32.totalorder %s74, 0
      %p331 = por %p329, %p330
      %p332 = scmp.ne.s32.totalorder %s320, %s321
      %p333 = scmp.eq.s32.totalorder %s75, 1
      %p334 = por %p332, %p333
      %p336 = scmp.ne.s32.totalorder %s321, %s335
      %p337 = scmp.eq.s32.totalorder %s75, 0
      %p338 = por %p336, %p337
      %s340 = sadd.s32 %s339, 1
      %p343 = scmp.eq.s32.totalorder %s69, 1
      %p344 = scmp.ne.s32.totalorder %s339, %s341
      %p345 = scmp.eq.s32.totalorder %s69, 0
      %p346 = por %p344, %p345
      %p347 = scmp.ne.s32.totalorder %s339, %s341
      %p348 = scmp.eq.s32.totalorder %s74, 1
      %p349 = por %p347, %p348
      %p350 = scmp.ne.s32.totalorder %s341, %s342
      %p351 = scmp.eq.s32.totalorder %s74, 0
      %p352 = por %p350, %p351
      %p353 = scmp.ne.s32.totalorder %s341, %s342
      %p354 = scmp.eq.s32.totalorder %s75, 1
      %p355 = por %p353, %p354
      %p357 = scmp.ne.s32.totalorder %s342, %s356
      %p358 = scmp.eq.s32.totalorder %s75, 0
      %p359 = por %p357, %p358
      %s361 = sadd.s32 %s360, 1
      %p364 = scmp.eq.s32.totalorder %s69, 1
      %p365 = scmp.ne.s32.totalorder %s360, %s362
      %p366 = scmp.eq.s32.totalorder %s69, 0
      %p367 = por %p365, %p366
      %p368 = scmp.ne.s32.totalorder %s360, %s362
      %p369 = scmp.eq.s32.totalorder %s74, 1
      %p370 = por %p368, %p369
      %p371 = scmp.ne.s32.totalorder %s362, %s363
      %p372 = scmp.eq.s32.totalorder %s74, 0
      %p373 = por %p371, %p372
      %p374 = scmp.ne.s32.totalorder %s362, %s363
      %p375 = scmp.eq.s32.totalorder %s75, 1
      %p376 = por %p374, %p375
      %p378 = scmp.ne.s32.totalorder %s363, %s377
      %p379 = scmp.eq.s32.totalorder %s75, 0
      %p380 = por %p378, %p379
      %s382 = sadd.s32 %s381, 1
      %p385 = scmp.eq.s32.totalorder %s69, 1
      %p386 = scmp.ne.s32.totalorder %s381, %s383
      %p387 = scmp.eq.s32.totalorder %s69, 0
      %p388 = por %p386, %p387
      %p389 = scmp.ne.s32.totalorder %s381, %s383
      %p390 = scmp.eq.s32.totalorder %s74, 1
      %p391 = por %p389, %p390
      %p392 = scmp.ne.s32.totalorder %s383, %s384
      %p393 = scmp.eq.s32.totalorder %s74, 0
      %p394 = por %p392, %p393
      %p395 = scmp.ne.s32.totalorder %s383, %s384
      %p396 = scmp.eq.s32.totalorder %s75, 1
      %p397 = por %p395, %p396
      %p399 = scmp.ne.s32.totalorder %s384, %s398
      %p400 = scmp.eq.s32.totalorder %s75, 0
      %p401 = por %p399, %p400
      %s403 = sadd.s32 %s402, 1
      %p406 = scmp.eq.s32.totalorder %s69, 1
      %p407 = scmp.ne.s32.totalorder %s402, %s404
      %p408 = scmp.eq.s32.totalorder %s69, 0
      %p409 = por %p407, %p408
      %p410 = scmp.ne.s32.totalorder %s402, %s404
      %p411 = scmp.eq.s32.totalorder %s74, 1
      %p412 = por %p410, %p411
      %p413 = scmp.ne.s32.totalorder %s404, %s405
      %p414 = scmp.eq.s32.totalorder %s74, 0
      %p415 = por %p413, %p414
      %p416 = scmp.ne.s32.totalorder %s404, %s405
      %p417 = scmp.eq.s32.totalorder %s75, 1
      %p418 = por %p416, %p417
      %p420 = scmp.ne.s32.totalorder %s405, %s419
      %p421 = scmp.eq.s32.totalorder %s75, 0
      %p422 = por %p420, %p421
      %s424 = sadd.s32 %s423, 1
      %p427 = scmp.eq.s32.totalorder %s69, 1
      %p428 = scmp.ne.s32.totalorder %s423, %s425
      %p429 = scmp.eq.s32.totalorder %s69, 0
      %p430 = por %p428, %p429
      %p431 = scmp.ne.s32.totalorder %s423, %s425
      %p432 = scmp.eq.s32.totalorder %s74, 1
      %p433 = por %p431, %p432
      %p434 = scmp.ne.s32.totalorder %s425, %s426
      %p435 = scmp.eq.s32.totalorder %s74, 0
      %p436 = por %p434, %p435
      %p437 = scmp.ne.s32.totalorder %s425, %s426
      %p438 = scmp.eq.s32.totalorder %s75, 1
      %p439 = por %p437, %p438
      %p441 = scmp.ne.s32.totalorder %s426, %s440
      %p442 = scmp.eq.s32.totalorder %s75, 0
      %p443 = por %p441, %p442
      %s445 = sadd.s32 %s444, 1
      %p448 = scmp.eq.s32.totalorder %s69, 1
      %p449 = scmp.ne.s32.totalorder %s444, %s446
      %p450 = scmp.eq.s32.totalorder %s69, 0
      %p451 = por %p449, %p450
      %p452 = scmp.ne.s32.totalorder %s444, %s446
      %p453 = scmp.eq.s32.totalorder %s74, 1
      %p454 = por %p452, %p453
      %p455 = scmp.ne.s32.totalorder %s446, %s447
      %p456 = scmp.eq.s32.totalorder %s74, 0
      %p457 = por %p455, %p456
      %p458 = scmp.ne.s32.totalorder %s446, %s447
      %p459 = scmp.eq.s32.totalorder %s75, 1
      %p460 = por %p458, %p459
      %p462 = scmp.ne.s32.totalorder %s447, %s461
      %p463 = scmp.eq.s32.totalorder %s75, 0
      %p464 = por %p462, %p463
      %s466 = sadd.s32 %s465, 1
      %p469 = scmp.eq.s32.totalorder %s69, 1
      %p470 = scmp.ne.s32.totalorder %s465, %s467
      %p471 = scmp.eq.s32.totalorder %s69, 0
      %p472 = por %p470, %p471
      %p473 = scmp.ne.s32.totalorder %s465, %s467
      %p474 = scmp.eq.s32.totalorder %s74, 1
      %p475 = por %p473, %p474
      %p476 = scmp.ne.s32.totalorder %s467, %s468
      %p477 = scmp.eq.s32.totalorder %s74, 0
      %p478 = por %p476, %p477
      %p479 = scmp.ne.s32.totalorder %s467, %s468
      %p480 = scmp.eq.s32.totalorder %s75, 1
      %p481 = por %p479, %p480
      %p483 = scmp.ne.s32.totalorder %s468, %s482
      %p484 = scmp.eq.s32.totalorder %s75, 0
      %p485 = por %p483, %p484
      %s487 = sadd.s32 %s486, 1
      %p490 = scmp.eq.s32.totalorder %s69, 1
      %p491 = scmp.ne.s32.totalorder %s486, %s488
      %p492 = scmp.eq.s32.totalorder %s69, 0
      %p493 = por %p491, %p492
      %p494 = scmp.ne.s32.totalorder %s486, %s488
      %p495 = scmp.eq.s32.totalorder %s74, 1
      %p496 = por %p494, %p495
      %p497 = scmp.ne.s32.totalorder %s488, %s489
      %p498 = scmp.eq.s32.totalorder %s74, 0
      %p499 = por %p497, %p498
      %p500 = scmp.ne.s32.totalorder %s488, %s489
      %p501 = scmp.eq.s32.totalorder %s75, 1
      %p502 = por %p500, %p501
      %p504 = scmp.ne.s32.totalorder %s489, %s503
      %p505 = scmp.eq.s32.totalorder %s75, 0
      %p506 = por %p504, %p505
      %s508 = sadd.s32 %s507, 1
      %p511 = scmp.eq.s32.totalorder %s69, 1
      %p512 = scmp.ne.s32.totalorder %s507, %s509
      %p513 = scmp.eq.s32.totalorder %s69, 0
      %p514 = por %p512, %p513
      %p515 = scmp.ne.s32.totalorder %s507, %s509
      %p516 = scmp.eq.s32.totalorder %s74, 1
      %p517 = por %p515, %p516
      %p518 = scmp.ne.s32.totalorder %s509, %s510
      %p519 = scmp.eq.s32.totalorder %s74, 0
      %p520 = por %p518, %p519
      %p521 = scmp.ne.s32.totalorder %s509, %s510
      %p522 = scmp.eq.s32.totalorder %s75, 1
      %p523 = por %p521, %p522
      %p525 = scmp.ne.s32.totalorder %s510, %s524
      %p526 = scmp.eq.s32.totalorder %s75, 0
      %p527 = por %p525, %p526
      %s529 = sadd.s32 %s528, 1
      %p532 = scmp.eq.s32.totalorder %s69, 1
      %p533 = scmp.ne.s32.totalorder %s528, %s530
      %p534 = scmp.eq.s32.totalorder %s69, 0
      %p535 = por %p533, %p534
      %p536 = scmp.ne.s32.totalorder %s528, %s530
      %p537 = scmp.eq.s32.totalorder %s74, 1
      %p538 = por %p536, %p537
      %p539 = scmp.ne.s32.totalorder %s530, %s531
      %p540 = scmp.eq.s32.totalorder %s74, 0
      %p541 = por %p539, %p540
      %p542 = scmp.ne.s32.totalorder %s530, %s531
      %p543 = scmp.eq.s32.totalorder %s75, 1
      %p544 = por %p542, %p543
      %p546 = scmp.ne.s32.totalorder %s531, %s545
      %p547 = scmp.eq.s32.totalorder %s75, 0
      %p548 = por %p546, %p547
      %s550 = sadd.s32 %s549, 1
      %p553 = scmp.eq.s32.totalorder %s69, 1
      %p554 = scmp.ne.s32.totalorder %s549, %s551
      %p555 = scmp.eq.s32.totalorder %s69, 0
      %p556 = por %p554, %p555
      %p557 = scmp.ne.s32.totalorder %s549, %s551
      %p558 = scmp.eq.s32.totalorder %s74, 1
      %p559 = por %p557, %p558
      %p560 = scmp.ne.s32.totalorder %s551, %s552
      %p561 = scmp.eq.s32.totalorder %s74, 0
      %p562 = por %p560, %p561
      %p563 = scmp.ne.s32.totalorder %s551, %s552
      %p564 = scmp.eq.s32.totalorder %s75, 1
      %p565 = por %p563, %p564
      %p567 = scmp.ne.s32.totalorder %s552, %s566
      %p568 = scmp.eq.s32.totalorder %s75, 0
      %p569 = por %p567, %p568
      %s571 = sadd.s32 %s570, 1
      %p574 = scmp.eq.s32.totalorder %s69, 1
      %p575 = scmp.ne.s32.totalorder %s570, %s572
      %p576 = scmp.eq.s32.totalorder %s69, 0
      %p577 = por %p575, %p576
      %p578 = scmp.ne.s32.totalorder %s570, %s572
      %p579 = scmp.eq.s32.totalorder %s74, 1
      %p580 = por %p578, %p579
      %p581 = scmp.ne.s32.totalorder %s572, %s573
      %p582 = scmp.eq.s32.totalorder %s74, 0
      %p583 = por %p581, %p582
      %p584 = scmp.ne.s32.totalorder %s572, %s573
      %p585 = scmp.eq.s32.totalorder %s75, 1
      %p586 = por %p584, %p585
      %p588 = scmp.ne.s32.totalorder %s573, %s587
      %p589 = scmp.eq.s32.totalorder %s75, 0
      %p590 = por %p588, %p589
      %s592 = sadd.s32 %s591, 1
      %p595 = scmp.eq.s32.totalorder %s69, 1
      %p596 = scmp.ne.s32.totalorder %s591, %s593
      %p597 = scmp.eq.s32.totalorder %s69, 0
      %p598 = por %p596, %p597
      %p599 = scmp.ne.s32.totalorder %s591, %s593
      %p600 = scmp.eq.s32.totalorder %s74, 1
      %p601 = por %p599, %p600
      %p602 = scmp.ne.s32.totalorder %s593, %s594
      %p603 = scmp.eq.s32.totalorder %s74, 0
      %p604 = por %p602, %p603
      %p605 = scmp.ne.s32.totalorder %s593, %s594
      %p606 = scmp.eq.s32.totalorder %s75, 1
      %p607 = por %p605, %p606
      %p609 = scmp.ne.s32.totalorder %s594, %s608
      %p610 = scmp.eq.s32.totalorder %s75, 0
      %p611 = por %p609, %p610
      %s613 = sadd.s32 %s612, 1
      %p616 = scmp.eq.s32.totalorder %s69, 1
      %p617 = scmp.ne.s32.totalorder %s612, %s614
      %p618 = scmp.eq.s32.totalorder %s69, 0
      %p619 = por %p617, %p618
      %p620 = scmp.ne.s32.totalorder %s612, %s614
      %p621 = scmp.eq.s32.totalorder %s74, 1
      %p622 = por %p620, %p621
      %p623 = scmp.ne.s32.totalorder %s614, %s615
      %p624 = scmp.eq.s32.totalorder %s74, 0
      %p625 = por %p623, %p624
      %p626 = scmp.ne.s32.totalorder %s614, %s615
      %p627 = scmp.eq.s32.totalorder %s75, 1
      %p628 = por %p626, %p627
      %p630 = scmp.ne.s32.totalorder %s615, %s629
      %p631 = scmp.eq.s32.totalorder %s75, 0
      %p632 = por %p630, %p631
      %s634 = sadd.s32 %s633, 1
      %p637 = scmp.eq.s32.totalorder %s69, 1
      %p638 = scmp.ne.s32.totalorder %s633, %s635
      %p639 = scmp.eq.s32.totalorder %s69, 0
      %p640 = por %p638, %p639
      %p641 = scmp.ne.s32.totalorder %s633, %s635
      %p642 = scmp.eq.s32.totalorder %s74, 1
      %p643 = por %p641, %p642
      %p644 = scmp.ne.s32.totalorder %s635, %s636
      %p645 = scmp.eq.s32.totalorder %s74, 0
      %p646 = por %p644, %p645
      %p647 = scmp.ne.s32.totalorder %s635, %s636
      %p648 = scmp.eq.s32.totalorder %s75, 1
      %p649 = por %p647, %p648
      %p651 = scmp.ne.s32.totalorder %s636, %s650
      %p652 = scmp.eq.s32.totalorder %s75, 0
      %p653 = por %p651, %p652
      %s655 = sadd.s32 %s654, 1
      %p658 = scmp.eq.s32.totalorder %s69, 1
      %p659 = scmp.ne.s32.totalorder %s654, %s656
      %p660 = scmp.eq.s32.totalorder %s69, 0
      %p661 = por %p659, %p660
      %p662 = scmp.ne.s32.totalorder %s654, %s656
      %p663 = scmp.eq.s32.totalorder %s74, 1
      %p664 = por %p662, %p663
      %p665 = scmp.ne.s32.totalorder %s656, %s657
      %p666 = scmp.eq.s32.totalorder %s74, 0
      %p667 = por %p665, %p666
      %p668 = scmp.ne.s32.totalorder %s656, %s657
      %p669 = scmp.eq.s32.totalorder %s75, 1
      %p670 = por %p668, %p669
      %p672 = scmp.ne.s32.totalorder %s657, %s671
      %p673 = scmp.eq.s32.totalorder %s75, 0
      %p674 = por %p672, %p673
      %s675 = ssub.s32 %s69, %s76
      %p676 = scmp.eq.s32.totalorder %s675, 0
      %s678 = sadd.s32 %s677, 1
      %s679 = scalar_select %p676, %s677, %s678
      %p682 = pneg %p676
      %p683 = scmp.eq.s32.totalorder %s69, 1
      %p684 = por %p682, %p683
      %p685 = scmp.ne.s32.totalorder %s677, %s680
      %p686 = scmp.eq.s32.totalorder %s69, 0
      %p687 = por %p685, %p686
      %p688 = scmp.ne.s32.totalorder %s677, %s680
      %p689 = scmp.eq.s32.totalorder %s74, 1
      %p690 = por %p688, %p689
      %p691 = scmp.ne.s32.totalorder %s680, %s681
      %p692 = scmp.eq.s32.totalorder %s74, 0
      %p693 = por %p691, %p692
      %p694 = scmp.ne.s32.totalorder %s680, %s681
      %p695 = scmp.eq.s32.totalorder %s75, 1
      %p696 = por %p694, %p695
      %p698 = scmp.ne.s32.totalorder %s681, %s697
      %p699 = scmp.eq.s32.totalorder %s75, 0
      %p700 = por %p698, %p699
      %s701 = ssub.s32 %s69, %s76
      %p702 = scmp.eq.s32.totalorder %s701, 0
      %s704 = sadd.s32 %s703, 1
      %s705 = scalar_select %p702, %s703, %s704
      %p708 = pneg %p702
      %p709 = scmp.eq.s32.totalorder %s69, 1
      %p710 = por %p708, %p709
      %p711 = scmp.ne.s32.totalorder %s703, %s706
      %p712 = scmp.eq.s32.totalorder %s69, 0
      %p713 = por %p711, %p712
      %p714 = scmp.ne.s32.totalorder %s703, %s706
      %p715 = scmp.eq.s32.totalorder %s74, 1
      %p716 = por %p714, %p715
      %p717 = scmp.ne.s32.totalorder %s706, %s707
      %p718 = scmp.eq.s32.totalorder %s74, 0
      %p719 = por %p717, %p718
      %p720 = scmp.ne.s32.totalorder %s706, %s707
      %p721 = scmp.eq.s32.totalorder %s75, 1
      %p722 = por %p720, %p721
      %p724 = scmp.ne.s32.totalorder %s707, %s723
      %p725 = scmp.eq.s32.totalorder %s75, 0
      %p726 = por %p724, %p725
      %p727 = scmp.le.s32.totalorder 1, %s69
      %p728 = scmp.lt.s32.totalorder %s69, 3
      %p729 = pnand %p727, %p728
      %p730 = pneg %p729
      // Predicated region
      $region9: #{fca_block_forward.1} parent=5 // pred_check
        _
      $region10: #{fca_block_forward.1} parent=5 // pred_check_branch
        %732 = sbr.rel (%p729) target = $region12
      $region11: #{fca_block_forward.1} parent=5 // pred_region
        %s733 = ssub.s32 %s69, 1
        // Predicated region
        $region13: #{fca_block_forward.1} parent=11 // pred_check
          %p734 = pneg %p142
        $region14: #{fca_block_forward.1} parent=11 // pred_check_branch
          %736 = sbr.rel (%p734) target = $region16
        $region15: #{fca_block_forward.1} parent=11 // pred_region
          _
        $region16: #{fca_block_forward.1} parent=11 // pred_fallthru
          _
        // Predicated region
        $region17: #{fca_block_forward.1} parent=11 // pred_check
          %p737 = pneg %p163
        $region18: #{fca_block_forward.1} parent=11 // pred_check_branch
          %739 = sbr.rel (%p737) target = $region20
        $region19: #{fca_block_forward.1} parent=11 // pred_region
          _
        $region20: #{fca_block_forward.1} parent=11 // pred_fallthru
          _
        // Predicated region
        $region21: #{fca_block_forward.1} parent=11 // pred_check
          %p740 = pneg %p184
        $region22: #{fca_block_forward.1} parent=11 // pred_check_branch
          %742 = sbr.rel (%p740) target = $region24
        $region23: #{fca_block_forward.1} parent=11 // pred_region
          _
        $region24: #{fca_block_forward.1} parent=11 // pred_fallthru
          _
        // Predicated region
        $region25: #{fca_block_forward.1} parent=11 // pred_check
          %p743 = pneg %p205
        $region26: #{fca_block_forward.1} parent=11 // pred_check_branch
          %745 = sbr.rel (%p743) target = $region28
        $region27: #{fca_block_forward.1} parent=11 // pred_region
          _
        $region28: #{fca_block_forward.1} parent=11 // pred_fallthru
          _
        // Predicated region
        $region29: #{fca_block_forward.1} parent=11 // pred_check
          %p746 = pneg %p226
        $region30: #{fca_block_forward.1} parent=11 // pred_check_branch
          %748 = sbr.rel (%p746) target = $region32
        $region31: #{fca_block_forward.1} parent=11 // pred_region
          _
        $region32: #{fca_block_forward.1} parent=11 // pred_fallthru
          _
        // Predicated region
        $region33: #{fca_block_forward.1} parent=11 // pred_check
          %p749 = pneg %p247
        $region34: #{fca_block_forward.1} parent=11 // pred_check_branch
          %751 = sbr.rel (%p749) target = $region36
        $region35: #{fca_block_forward.1} parent=11 // pred_region
          _
        $region36: #{fca_block_forward.1} parent=11 // pred_fallthru
          _
        // Predicated region
        $region37: #{fca_block_forward.1} parent=11 // pred_check
          %p752 = pneg %p268
        $region38: #{fca_block_forward.1} parent=11 // pred_check_branch
          %754 = sbr.rel (%p752) target = $region40
        $region39: #{fca_block_forward.1} parent=11 // pred_region
          _
        $region40: #{fca_block_forward.1} parent=11 // pred_fallthru
          _
        // Predicated region
        $region41: #{fca_block_forward.1} parent=11 // pred_check
          %p755 = pneg %p289
        $region42: #{fca_block_forward.1} parent=11 // pred_check_branch
          %757 = sbr.rel (%p755) target = $region44
        $region43: #{fca_block_forward.1} parent=11 // pred_region
          _
        $region44: #{fca_block_forward.1} parent=11 // pred_fallthru
          _
        // Predicated region
        $region45: #{fca_block_forward.1} parent=11 // pred_check
          %p758 = pneg %p310
        $region46: #{fca_block_forward.1} parent=11 // pred_check_branch
          %760 = sbr.rel (%p758) target = $region48
        $region47: #{fca_block_forward.1} parent=11 // pred_region
          _
        $region48: #{fca_block_forward.1} parent=11 // pred_fallthru
          _
        // Predicated region
        $region49: #{fca_block_forward.1} parent=11 // pred_check
          %p761 = pneg %p331
        $region50: #{fca_block_forward.1} parent=11 // pred_check_branch
          %763 = sbr.rel (%p761) target = $region52
        $region51: #{fca_block_forward.1} parent=11 // pred_region
          _
        $region52: #{fca_block_forward.1} parent=11 // pred_fallthru
          _
        // Predicated region
        $region53: #{fca_block_forward.1} parent=11 // pred_check
          %p764 = pneg %p352
        $region54: #{fca_block_forward.1} parent=11 // pred_check_branch
          %766 = sbr.rel (%p764) target = $region56
        $region55: #{fca_block_forward.1} parent=11 // pred_region
          _
        $region56: #{fca_block_forward.1} parent=11 // pred_fallthru
          _
        // Predicated region
        $region57: #{fca_block_forward.1} parent=11 // pred_check
          %p767 = pneg %p373
        $region58: #{fca_block_forward.1} parent=11 // pred_check_branch
          %769 = sbr.rel (%p767) target = $region60
        $region59: #{fca_block_forward.1} parent=11 // pred_region
          _
        $region60: #{fca_block_forward.1} parent=11 // pred_fallthru
          _
        // Predicated region
        $region61: #{fca_block_forward.1} parent=11 // pred_check
          %p770 = pneg %p394
        $region62: #{fca_block_forward.1} parent=11 // pred_check_branch
          %772 = sbr.rel (%p770) target = $region64
        $region63: #{fca_block_forward.1} parent=11 // pred_region
          _
        $region64: #{fca_block_forward.1} parent=11 // pred_fallthru
          _
        // Predicated region
        $region65: #{fca_block_forward.1} parent=11 // pred_check
          %p773 = pneg %p415
        $region66: #{fca_block_forward.1} parent=11 // pred_check_branch
          %775 = sbr.rel (%p773) target = $region68
        $region67: #{fca_block_forward.1} parent=11 // pred_region
          _
        $region68: #{fca_block_forward.1} parent=11 // pred_fallthru
          _
        // Predicated region
        $region69: #{fca_block_forward.1} parent=11 // pred_check
          %p776 = pneg %p436
        $region70: #{fca_block_forward.1} parent=11 // pred_check_branch
          %778 = sbr.rel (%p776) target = $region72
        $region71: #{fca_block_forward.1} parent=11 // pred_region
          _
        $region72: #{fca_block_forward.1} parent=11 // pred_fallthru
          _
        // Predicated region
        $region73: #{fca_block_forward.1} parent=11 // pred_check
          %p779 = pneg %p457
        $region74: #{fca_block_forward.1} parent=11 // pred_check_branch
          %781 = sbr.rel (%p779) target = $region76
        $region75: #{fca_block_forward.1} parent=11 // pred_region
          _
        $region76: #{fca_block_forward.1} parent=11 // pred_fallthru
          _
        // Predicated region
        $region77: #{fca_block_forward.1} parent=11 // pred_check
          %p782 = pneg %p478
        $region78: #{fca_block_forward.1} parent=11 // pred_check_branch
          %784 = sbr.rel (%p782) target = $region80
        $region79: #{fca_block_forward.1} parent=11 // pred_region
          _
        $region80: #{fca_block_forward.1} parent=11 // pred_fallthru
          _
        // Predicated region
        $region81: #{fca_block_forward.1} parent=11 // pred_check
          %p785 = pneg %p499
        $region82: #{fca_block_forward.1} parent=11 // pred_check_branch
          %787 = sbr.rel (%p785) target = $region84
        $region83: #{fca_block_forward.1} parent=11 // pred_region
          _
        $region84: #{fca_block_forward.1} parent=11 // pred_fallthru
          _
        // Predicated region
        $region85: #{fca_block_forward.1} parent=11 // pred_check
          %p788 = pneg %p520
        $region86: #{fca_block_forward.1} parent=11 // pred_check_branch
          %790 = sbr.rel (%p788) target = $region88
        $region87: #{fca_block_forward.1} parent=11 // pred_region
          _
        $region88: #{fca_block_forward.1} parent=11 // pred_fallthru
          _
        // Predicated region
        $region89: #{fca_block_forward.1} parent=11 // pred_check
          %p791 = pneg %p541
        $region90: #{fca_block_forward.1} parent=11 // pred_check_branch
          %793 = sbr.rel (%p791) target = $region92
        $region91: #{fca_block_forward.1} parent=11 // pred_region
          _
        $region92: #{fca_block_forward.1} parent=11 // pred_fallthru
          _
        // Predicated region
        $region93: #{fca_block_forward.1} parent=11 // pred_check
          %p794 = pneg %p562
        $region94: #{fca_block_forward.1} parent=11 // pred_check_branch
          %796 = sbr.rel (%p794) target = $region96
        $region95: #{fca_block_forward.1} parent=11 // pred_region
          _
        $region96: #{fca_block_forward.1} parent=11 // pred_fallthru
          _
        // Predicated region
        $region97: #{fca_block_forward.1} parent=11 // pred_check
          %p797 = pneg %p583
        $region98: #{fca_block_forward.1} parent=11 // pred_check_branch
          %799 = sbr.rel (%p797) target = $region100
        $region99: #{fca_block_forward.1} parent=11 // pred_region
          _
        $region100: #{fca_block_forward.1} parent=11 // pred_fallthru
          _
        // Predicated region
        $region101: #{fca_block_forward.1} parent=11 // pred_check
          %p800 = pneg %p604
        $region102: #{fca_block_forward.1} parent=11 // pred_check_branch
          %802 = sbr.rel (%p800) target = $region104
        $region103: #{fca_block_forward.1} parent=11 // pred_region
          _
        $region104: #{fca_block_forward.1} parent=11 // pred_fallthru
          _
        // Predicated region
        $region105: #{fca_block_forward.1} parent=11 // pred_check
          %p803 = pneg %p625
        $region106: #{fca_block_forward.1} parent=11 // pred_check_branch
          %805 = sbr.rel (%p803) target = $region108
        $region107: #{fca_block_forward.1} parent=11 // pred_region
          _
        $region108: #{fca_block_forward.1} parent=11 // pred_fallthru
          _
        // Predicated region
        $region109: #{fca_block_forward.1} parent=11 // pred_check
          %p806 = pneg %p646
        $region110: #{fca_block_forward.1} parent=11 // pred_check_branch
          %808 = sbr.rel (%p806) target = $region112
        $region111: #{fca_block_forward.1} parent=11 // pred_region
          _
        $region112: #{fca_block_forward.1} parent=11 // pred_fallthru
          _
        // Predicated region
        $region113: #{fca_block_forward.1} parent=11 // pred_check
          %p809 = pneg %p667
        $region114: #{fca_block_forward.1} parent=11 // pred_check_branch
          %811 = sbr.rel (%p809) target = $region116
        $region115: #{fca_block_forward.1} parent=11 // pred_region
          _
        $region116: #{fca_block_forward.1} parent=11 // pred_fallthru
          _
      $region12: #{fca_block_forward.1} parent=5 // pred_fallthru
        _
      %p812 = scmp.lt.s32.totalorder %s69, 2
      // Predicated region
      $region117: #{fca_block_forward.1} parent=5 // pred_check
        %p813 = pneg %p812
      $region118: #{fca_block_forward.1} parent=5 // pred_check_branch
        %815 = sbr.rel (%p813) target = $region120
      $region119: #{fca_block_forward.1} parent=5 // pred_region
        // Predicated region
        $region121: #{fca_block_forward.1} parent=119 // pred_check
          %p816 = pneg %p89
        $region122: #{fca_block_forward.1} parent=119 // pred_check_branch
          %818 = sbr.rel (%p816) target = $region124
        $region123: #{fca_block_forward.1} parent=119 // pred_region
          %p819 = scmp.lt.s32.totalorder %s69, 1
          %s820 = scalar_select %p819, %s69, 1
          %s821 = smul.addr %s820, 8
          %s822 = smul.addr %s821, 8
          %s823 = scalar_lea.vmem %s1, %s822
        $region124: #{fca_block_forward.1} parent=119 // pred_fallthru
          _
        // Predicated region
        $region125: #{fca_block_forward.1} parent=119 // pred_check
          %p824 = pneg %p115
        $region126: #{fca_block_forward.1} parent=119 // pred_check_branch
          %826 = sbr.rel (%p824) target = $region128
        $region127: #{fca_block_forward.1} parent=119 // pred_region
          %p827 = scmp.lt.s32.totalorder %s69, 1
          %s828 = scalar_select %p827, %s69, 1
          %s829 = smul.addr %s828, 4
          %s830 = scalar_lea.vmem %s3, %s829
        $region128: #{fca_block_forward.1} parent=119 // pred_fallthru
          _
      $region120: #{fca_block_forward.1} parent=5 // pred_fallthru
        _
      %p831 = scmp.le.s32.totalorder 1, %s69
      %p832 = scmp.lt.s32.totalorder %s69, 3
      %p833 = pnand %p831, %p832
      %p834 = pneg %p833
      // Predicated region
      $region129: #{fca_block_forward.1} parent=5 // pred_check
        _
      $region130: #{fca_block_forward.1} parent=5 // pred_check_branch
        %836 = sbr.rel (%p833) target = $region132
      $region131: #{fca_block_forward.1} parent=5 // pred_region
        %s837 = ssub.s32 %s69, 1
        %p838 = scmp.lt.s32.totalorder %s74, 1
        %s839 = scalar_select %p838, %s74, 1
        %s840 = smul.addr %s839, 8
        %s841 = smul.addr %s840, 8
        %s842 = scalar_lea.vmem %s1, %s841
        %p843 = pneg %p95
        %p844 = pneg %p92
        %p845 = scmp.lt.s32.totalorder %s74, 1
        %s846 = scalar_select %p845, %s74, 1
        %s847 = smul.addr %s846, 4
        %s848 = scalar_lea.vmem %s3, %s847
        %p849 = pneg %p121
        %p850 = pneg %p118
        %p851 = pneg %p142
        %p852 = pneg %p139
        %p853 = pneg %p163
        %p854 = pneg %p160
        %p855 = pneg %p184
        %p856 = pneg %p181
        %p857 = pneg %p205
        %p858 = pneg %p202
        %p859 = pneg %p226
        %p860 = pneg %p223
        %p861 = pneg %p247
        %p862 = pneg %p244
        %p863 = pneg %p268
        %p864 = pneg %p265
        %p865 = pneg %p289
        %p866 = pneg %p286
        %p867 = pneg %p310
        %p868 = pneg %p307
        %p869 = pneg %p331
        %p870 = pneg %p328
        %p871 = pneg %p352
        %p872 = pneg %p349
        %p873 = pneg %p373
        %p874 = pneg %p370
        %p875 = pneg %p394
        %p876 = pneg %p391
        %p877 = pneg %p415
        %p878 = pneg %p412
        %p879 = pneg %p436
        %p880 = pneg %p433
        %p881 = pneg %p457
        %p882 = pneg %p454
        %p883 = pneg %p478
        %p884 = pneg %p475
        %p885 = pneg %p499
        %p886 = pneg %p496
        %p887 = pneg %p520
        %p888 = pneg %p517
        %p889 = pneg %p541
        %p890 = pneg %p538
        %p891 = pneg %p562
        %p892 = pneg %p559
        %p893 = pneg %p583
        %p894 = pneg %p580
        %p895 = pneg %p604
        %p896 = pneg %p601
        %p897 = pneg %p625
        %p898 = pneg %p622
        %p899 = pneg %p646
        %p900 = pneg %p643
        %p901 = pneg %p667
        %p902 = pneg %p664
        %p903 = pneg %p693
        %p904 = pneg %p690
        %p905 = scmp.lt.s32.totalorder %s74, 1
        %s906 = scalar_select %p905, %s74, 1
        %s907 = smul.addr %s906, 8
        %s908 = smul.addr %s907, 8
        %s909 = scalar_lea.vmem %s57, %s908
        %p910 = pneg %p719
        %p911 = pneg %p716
        %s912 = sand.u32 %s706, 1
        %s913 = scalar_lea.sflag [#allocation5], %s912
        %s914 = sand.u32 %s706, 1
        %s915 = smul.addr %s914, 4
        %s916 = scalar_lea.vmem [#allocation4], %s915
        %p917 = scmp.lt.s32.totalorder %s74, 1
        %s918 = scalar_select %p917, %s74, 1
        %s919 = smul.addr %s918, 8
        %s920 = smul.addr %s919, 8
        %s921 = scalar_lea.vmem %s1, %s920
        %p922 = scmp.lt.s32.totalorder %s74, 1
        %s923 = scalar_select %p922, %s74, 1
        %s924 = smul.addr %s923, 4
        %s925 = scalar_lea.vmem %s3, %s924
        %p926 = scmp.lt.s32.totalorder %s74, 1
        %s927 = scalar_select %p926, %s74, 1
        %s928 = smul.addr %s927, 8
        %s929 = smul.addr %s928, 8
        %s930 = scalar_lea.vmem %s57, %s929
        %v932 = vld [vmem:[%s921] sm:$0xff]
        %v933 = vld [vmem:[%s921 + $0x8] sm:$0xff]
        %v934 = vld [vmem:[%s921 + $0x10] sm:$0xff]
        %v935 = vld [vmem:[%s921 + $0x18] sm:$0xff]
        %v936 = vld [vmem:[%s921 + $0x20] sm:$0xff]
        %v937 = vld [vmem:[%s921 + $0x28] sm:$0xff]
        %v938 = vld [vmem:[%s921 + $0x30] sm:$0xff]
        %v939 = vld [vmem:[%s921 + $0x38] sm:$0xff]
        %v940 = vld [vmem:[%s7] sm:$0x1]
        %v941 = vld [vmem:[%s9] sm:$0x1]
        %vm942 = vcmask 261120
        %v943 = vsel %vm942, %v932, 0.0
        %944 = vadd.xlane.f32.xlu0 %v943
        %v945 = vpop.xlane.xlu0 %944
        %v946 = vsel %vm942, %v933, 0.0
        %947 = vadd.xlane.f32.xlu0 %v946
        %v948 = vpop.xlane.xlu0 %947
        %v949 = vsel %vm942, %v934, 0.0
        %950 = vadd.xlane.f32.xlu0 %v949
        %v951 = vpop.xlane.xlu0 %950
        %v952 = vsel %vm942, %v935, 0.0
        %953 = vadd.xlane.f32.xlu0 %v952
        %v954 = vpop.xlane.xlu0 %953
        %v955 = vsel %vm942, %v936, 0.0
        %956 = vadd.xlane.f32.xlu0 %v955
        %v957 = vpop.xlane.xlu0 %956
        %v958 = vsel %vm942, %v937, 0.0
        %959 = vadd.xlane.f32.xlu0 %v958
        %v960 = vpop.xlane.xlu0 %959
        %v961 = vsel %vm942, %v938, 0.0
        %962 = vadd.xlane.f32.xlu0 %v961
        %v963 = vpop.xlane.xlu0 %962
        %v964 = vsel %vm942, %v939, 0.0
        %965 = vadd.xlane.f32.xlu0 %v964
        %v966 = vpop.xlane.xlu0 %965
        %v967 = vrcp.pop 32.0
        %v968 = vmul.f32 %v945, %v967
        %v969 = vmul.f32 %v948, %v967
        %v970 = vmul.f32 %v951, %v967
        %v971 = vmul.f32 %v954, %v967
        %v972 = vmul.f32 %v957, %v967
        %v973 = vmul.f32 %v960, %v967
        %v974 = vmul.f32 %v963, %v967
        %v975 = vmul.f32 %v966, %v967
        %v976 = vsub.f32 %v932, %v968
        %v977 = vsub.f32 %v933, %v969
        %v978 = vsub.f32 %v934, %v970
        %v979 = vsub.f32 %v935, %v971
        %v980 = vsub.f32 %v936, %v972
        %v981 = vsub.f32 %v937, %v973
        %v982 = vsub.f32 %v938, %v974
        %v983 = vsub.f32 %v939, %v975
        %v984 = vmul.f32 %v976, %v976
        %v985 = vmul.f32 %v977, %v977
        %v986 = vmul.f32 %v978, %v978
        %v987 = vmul.f32 %v979, %v979
        %v988 = vmul.f32 %v980, %v980
        %v989 = vmul.f32 %v981, %v981
        %v990 = vmul.f32 %v982, %v982
        %v991 = vmul.f32 %v983, %v983
        %v992 = vsel %vm942, %v984, 0.0
        %993 = vadd.xlane.f32.xlu0 %v992
        %v994 = vpop.xlane.xlu0 %993
        %v995 = vsel %vm942, %v985, 0.0
        %996 = vadd.xlane.f32.xlu0 %v995
        %v997 = vpop.xlane.xlu0 %996
        %v998 = vsel %vm942, %v986, 0.0
        %999 = vadd.xlane.f32.xlu0 %v998
        %v1000 = vpop.xlane.xlu0 %999
        %v1001 = vsel %vm942, %v987, 0.0
        %1002 = vadd.xlane.f32.xlu0 %v1001
        %v1003 = vpop.xlane.xlu0 %1002
        %v1004 = vsel %vm942, %v988, 0.0
        %1005 = vadd.xlane.f32.xlu0 %v1004
        %v1006 = vpop.xlane.xlu0 %1005
        %v1007 = vsel %vm942, %v989, 0.0
        %1008 = vadd.xlane.f32.xlu0 %v1007
        %v1009 = vpop.xlane.xlu0 %1008
        %v1010 = vsel %vm942, %v990, 0.0
        %1011 = vadd.xlane.f32.xlu0 %v1010
        %v1012 = vpop.xlane.xlu0 %1011
        %v1013 = vsel %vm942, %v991, 0.0
        %1014 = vadd.xlane.f32.xlu0 %v1013
        %v1015 = vpop.xlane.xlu0 %1014
        %v1016 = vmul.f32 %v994, %v967
        %v1017 = vmul.f32 %v997, %v967
        %v1018 = vmul.f32 %v1000, %v967
        %v1019 = vmul.f32 %v1003, %v967
        %v1020 = vmul.f32 %v1006, %v967
        %v1021 = vmul.f32 %v1009, %v967
        %v1022 = vmul.f32 %v1012, %v967
        %v1023 = vmul.f32 %v1015, %v967
        %v1024 = vadd.f32 %v1016, 1e-05
        %v1025 = vadd.f32 %v1017, 1e-05
        %v1026 = vadd.f32 %v1018, 1e-05
        %v1027 = vadd.f32 %v1019, 1e-05
        %v1028 = vadd.f32 %v1020, 1e-05
        %v1029 = vadd.f32 %v1021, 1e-05
        %v1030 = vadd.f32 %v1022, 1e-05
        %v1031 = vadd.f32 %v1023, 1e-05
        %v1032 = vrsqrt.pop %v1024
        %v1033 = vrsqrt.pop %v1025
        %v1034 = vrsqrt.pop %v1026
        %v1035 = vrsqrt.pop %v1027
        %v1036 = vrsqrt.pop %v1028
        %v1037 = vrsqrt.pop %v1029
        %v1038 = vrsqrt.pop %v1030
        %v1039 = vrsqrt.pop %v1031
        %v1040 = vmul.f32 %v976, %v1032
        %v1041 = vmul.f32 %v977, %v1033
        %v1042 = vmul.f32 %v978, %v1034
        %v1043 = vmul.f32 %v979, %v1035
        %v1044 = vmul.f32 %v980, %v1036
        %v1045 = vmul.f32 %v981, %v1037
        %v1046 = vmul.f32 %v982, %v1038
        %v1047 = vmul.f32 %v983, %v1039
        %v1049 = vlaneseq
        %v1050 = vshrl.u32 %v1049, 7
        %v1051 = vsub.s32 0, %v1050
        %v1052 = vrot.slane %v940, %v1051
        %v1054 = vmul.f32 %v1040, %v1052
        %v1055 = vmul.f32 %v1041, %v1052
        %v1056 = vmul.f32 %v1042, %v1052
        %v1057 = vmul.f32 %v1043, %v1052
        %v1058 = vmul.f32 %v1044, %v1052
        %v1059 = vmul.f32 %v1045, %v1052
        %v1060 = vmul.f32 %v1046, %v1052
        %v1061 = vmul.f32 %v1047, %v1052
        %v1063 = vlaneseq
        %v1064 = vshrl.u32 %v1063, 7
        %v1065 = vsub.s32 0, %v1064
        %v1066 = vrot.slane %v941, %v1065
        %v1068 = vadd.f32 %v1054, %v1066
        %v1069 = vadd.f32 %v1055, %v1066
        %v1070 = vadd.f32 %v1056, %v1066
        %v1071 = vadd.f32 %v1057, %v1066
        %v1072 = vadd.f32 %v1058, %v1066
        %v1073 = vadd.f32 %v1059, %v1066
        %v1074 = vadd.f32 %v1060, %v1066
        %v1075 = vadd.f32 %v1061, %v1066
        %v1076 = vld [vmem:[%s925] sm:$0xf]
        %v1077 = vld [vmem:[%s5] sm:$0xf]
        %1079 = vset.pattern.permute.xlu0 0
        %1080 = vperm.xlu0 %1079, %v1077
        %v1081 = vpop.permute.xlu0 %1080
        %v1083 = vmul.f32 %v1076, %v1081
        %v1084 = vld [vmem:[%s11] sm:$0x1]
        %v1085 = vld [vmem:[%s13] sm:$0x1]
        %vm1086 = vcmask 257024
        %v1087 = vsel %vm1086, %v1083, 0.0
        %1088 = vadd.xlane.f32.xlu0 %v1087
        %v1089 = vpop.xlane.xlu0 %1088
        %v1090 = vmul.f32 %v1089, %v967
        %v1091 = vsub.f32 %v1083, %v1090
        %v1092 = vmul.f32 %v1091, %v1091
        %v1093 = vsel %vm1086, %v1092, 0.0
        %1094 = vadd.xlane.f32.xlu0 %v1093
        %v1095 = vpop.xlane.xlu0 %1094
        %v1096 = vmul.f32 %v1095, %v967
        %v1097 = vadd.f32 %v1096, 1e-05
        %v1098 = vrsqrt.pop %v1097
        %v1099 = vmul.f32 %v1091, %v1098
        %v1101 = vlaneseq
        %v1102 = vshrl.u32 %v1101, 7
        %v1103 = vsub.s32 0, %v1102
        %v1104 = vrot.slane %v1084, %v1103
        %v1106 = vmul.f32 %v1099, %v1104
        %v1108 = vlaneseq
        %v1109 = vshrl.u32 %v1108, 7
        %v1110 = vsub.s32 0, %v1109
        %v1111 = vrot.slane %v1085, %v1110
        %v1113 = vadd.f32 %v1106, %v1111
        %1114 = vst.msk [vmem:[#allocation2] sm:$0xff] %vm942, 0.0
        %1115 = vst.msk [vmem:[#allocation2 + $0x8] sm:$0xff] %vm942, 0.0
        %1116 = vst.msk [vmem:[#allocation2 + $0x10] sm:$0xff] %vm942, 0.0
        %1117 = vst.msk [vmem:[#allocation2 + $0x18] sm:$0xff] %vm942, 0.0
        %1118 = vst.msk [vmem:[#allocation2 + $0x20] sm:$0xff] %vm942, 0.0
        %1119 = vst.msk [vmem:[#allocation2 + $0x28] sm:$0xff] %vm942, 0.0
        %1120 = vst.msk [vmem:[#allocation2 + $0x30] sm:$0xff] %vm942, 0.0
        %1121 = vst.msk [vmem:[#allocation2 + $0x38] sm:$0xff] %vm942, 0.0
        %1122 = vst.msk [vmem:[#allocation2 + $0x40] sm:$0xff] %vm942, 0.0
        %1123 = vst.msk [vmem:[#allocation2 + $0x48] sm:$0xff] %vm942, 0.0
        %1124 = vst.msk [vmem:[#allocation2 + $0x50] sm:$0xff] %vm942, 0.0
        %1125 = vst.msk [vmem:[#allocation2 + $0x58] sm:$0xff] %vm942, 0.0
        %1126 = vst.msk [vmem:[#allocation2 + $0x60] sm:$0xff] %vm942, 0.0
        %1127 = vst.msk [vmem:[#allocation2 + $0x68] sm:$0xff] %vm942, 0.0
        %1128 = vst.msk [vmem:[#allocation2 + $0x70] sm:$0xff] %vm942, 0.0
        %1129 = vst.msk [vmem:[#allocation2 + $0x78] sm:$0xff] %vm942, 0.0
        %1130 = vst.msk [vmem:[#allocation2] sm:$0xff] %vm942, %v1068
        %1131 = vst.msk [vmem:[#allocation2 + $0x8] sm:$0xff] %vm942, %v1069
        %1132 = vst.msk [vmem:[#allocation2 + $0x10] sm:$0xff] %vm942, %v1070
        %1133 = vst.msk [vmem:[#allocation2 + $0x18] sm:$0xff] %vm942, %v1071
        %1134 = vst.msk [vmem:[#allocation2 + $0x20] sm:$0xff] %vm942, %v1072
        %1135 = vst.msk [vmem:[#allocation2 + $0x28] sm:$0xff] %vm942, %v1073
        %1136 = vst.msk [vmem:[#allocation2 + $0x30] sm:$0xff] %vm942, %v1074
        %1137 = vst.msk [vmem:[#allocation2 + $0x38] sm:$0xff] %vm942, %v1075
        %1138 = vst.msk [vmem:[#allocation2 + $0x40] sm:$0xf] %vm1086, %v1113
        %v1139 = vld [vmem:[#allocation2] sm:$0xff]
        %v1140 = vld [vmem:[#allocation2 + $0x8] sm:$0xff]
        %v1141 = vld [vmem:[#allocation2 + $0x10] sm:$0xff]
        %v1142 = vld [vmem:[#allocation2 + $0x18] sm:$0xff]
        %v1143 = vld [vmem:[#allocation2 + $0x20] sm:$0xff]
        %v1144 = vld [vmem:[#allocation2 + $0x28] sm:$0xff]
        %v1145 = vld [vmem:[#allocation2 + $0x30] sm:$0xff]
        %v1146 = vld [vmem:[#allocation2 + $0x38] sm:$0xff]
        %v1147 = vld [vmem:[#allocation2 + $0x40] sm:$0xff]
        %v1148 = vld [vmem:[#allocation2 + $0x48] sm:$0xff]
        %v1149 = vld [vmem:[#allocation2 + $0x50] sm:$0xff]
        %v1150 = vld [vmem:[#allocation2 + $0x58] sm:$0xff]
        %v1151 = vld [vmem:[#allocation2 + $0x60] sm:$0xff]
        %v1152 = vld [vmem:[#allocation2 + $0x68] sm:$0xff]
        %v1153 = vld [vmem:[#allocation2 + $0x70] sm:$0xff]
        %v1154 = vld [vmem:[#allocation2 + $0x78] sm:$0xff]
        %v1155 = vpack.c.bf16 %v1140, %v1139
        %v1156 = vpack.c.bf16 %v1142, %v1141
        %v1157 = vpack.c.bf16 %v1144, %v1143
        %v1158 = vpack.c.bf16 %v1146, %v1145
        %v1159 = vpack.c.bf16 %v1148, %v1147
        %v1160 = vpack.c.bf16 %v1150, %v1149
        %v1161 = vpack.c.bf16 %v1152, %v1151
        %v1162 = vpack.c.bf16 %v1154, %v1153
        %1163 = vxpose.xlu0.b32.start [1/16] %v1139, 128
        %1164 = vxpose.xlu0.b32.cont [2/16] %v1140, 128
        %1165 = vxpose.xlu0.b32.cont [3/16] %v1141, 128
        %1166 = vxpose.xlu0.b32.cont [4/16] %v1142, 128
        %1167 = vxpose.xlu0.b32.cont [5/16] %v1143, 128
        %1168 = vxpose.xlu0.b32.cont [6/16] %v1144, 128
        %1169 = vxpose.xlu0.b32.cont [7/16] %v1145, 128
        %1170 = vxpose.xlu0.b32.cont [8/16] %v1146, 128
        %1171 = vxpose.xlu0.b32.cont [9/16] %v1147, 128
        %1172 = vxpose.xlu0.b32.cont [10/16] %v1148, 128
        %1173 = vxpose.xlu0.b32.cont [11/16] %v1149, 128
        %1174 = vxpose.xlu0.b32.cont [12/16] %v1150, 128
        %1175 = vxpose.xlu0.b32.cont [13/16] %v1151, 128
        %1176 = vxpose.xlu0.b32.cont [14/16] %v1152, 128
        %1177 = vxpose.xlu0.b32.cont [15/16] %v1153, 128
        %1178 = vxpose.xlu0.b32.end [16/16] %v1154, 128
        %v1179 = vpop.trf.xlu0
        %v1180 = vpop.trf.xlu0
        %v1181 = vpop.trf.xlu0
        %v1182 = vpop.trf.xlu0
        %v1183 = vpop.trf.xlu0
        %v1184 = vpop.trf.xlu0
        %v1185 = vpop.trf.xlu0
        %v1186 = vpop.trf.xlu0
        %v1187 = vpop.trf.xlu0
        %v1188 = vpop.trf.xlu0
        %v1189 = vpop.trf.xlu0
        %v1190 = vpop.trf.xlu0
        %v1191 = vpop.trf.xlu0
        %v1192 = vpop.trf.xlu0
        %v1193 = vpop.trf.xlu0
        %v1194 = vpop.trf.xlu0
        %v1195 = vpack.c.bf16 %v1180, %v1179
        %v1196 = vpack.c.bf16 %v1182, %v1181
        %v1197 = vld [vmem:[%s19] sm:$0xf]
        %v1198 = vld [vmem:[%s19 + $0x4] sm:$0xf]
        %v1199 = vld [vmem:[%s19 + $0x8] sm:$0xf]
        %v1200 = vld [vmem:[%s19 + $0xc] sm:$0xf]
        %v1201 = vld [vmem:[%s21] sm:$0x1]
        %v1203 = vlaneseq
        %v1204 = vshrl.u32 %v1203, 7
        %v1205 = vsub.s32 0, %v1204
        %v1206 = vrot.slane %v1201, %v1205
        %v1212 = vunpack.c.l.b16 %v1197
        %v1213 = vunpack.c.l.b16 %v1198
        %v1214 = vunpack.c.l.b16 %v1199
        %v1215 = vunpack.c.l.b16 %v1200
        %v1216 = vpack.c.b16 %v1213, %v1212
        %v1217 = vpack.c.b16 %v1215, %v1214
        %v1221 = vsel %vm942, %v1155, 0
        %v1224 = vsel %vm942, %v1156, 0
        %v1227 = vsel %vm942, %v1157, 0
        %v1230 = vsel %vm942, %v1158, 0
        %v1233 = vsel %vm942, %v1159, 0
        %v1236 = vsel %vm942, %v1160, 0
        %v1239 = vsel %vm942, %v1161, 0
        %v1242 = vsel %vm942, %v1162, 0
        %1244 = vmatprep.subr.bf16.mxu0 0
        %1245 = vmatpush1.bf16.msra.mxu0 %v1216
        %1246 = vmatprep.subr.bf16.mxu0 0
        %1247 = vmatpush1.bf16.msra.mxu0 %v1217
        %1248 = vmatprep.subr.bf16.mxu0 0
        %1249 = vmatpush1.bf16.msra.mxu0 0
        %1250 = vmatprep.subr.bf16.mxu0 0
        %1251 = vmatpush1.bf16.msra.mxu0 0
        %1252 = vmatprep.subr.bf16.mxu0 0
        %1253 = vmatpush1.bf16.msra.mxu0 0
        %1254 = vmatprep.subr.bf16.mxu0 0
        %1255 = vmatpush1.bf16.msra.mxu0 0
        %1256 = vmatprep.subr.bf16.mxu0 0
        %1257 = vmatpush1.bf16.msra.mxu0 0
        %1258 = vmatprep.subr.bf16.mxu0 0
        %1259 = vmatpush1.bf16.msra.mxu0 0
        %1260 = vmatprep.subr.bf16.mxu0 0
        %1261 = vmatpush1.bf16.msra.mxu0 0
        %1262 = vmatprep.subr.bf16.mxu0 0
        %1263 = vmatpush1.bf16.msra.mxu0 0
        %1264 = vmatprep.subr.bf16.mxu0 0
        %1265 = vmatpush1.bf16.msra.mxu0 0
        %1266 = vmatprep.subr.bf16.mxu0 0
        %1267 = vmatpush1.bf16.msra.mxu0 0
        %1268 = vmatprep.subr.bf16.mxu0 0
        %1269 = vmatpush1.bf16.msra.mxu0 0
        %1270 = vmatprep.subr.bf16.mxu0 0
        %1271 = vmatpush1.bf16.msra.mxu0 0
        %1272 = vmatprep.subr.bf16.mxu0 0
        %1273 = vmatpush1.bf16.msra.mxu0 0
        %1274 = vmatprep.subr.bf16.mxu0 0
        %1275 = vmatpush1.bf16.msra.mxu0 0
        %1276 = vmatprep.mubr.bf16.mxu0 0
        %1277 = vmatmul.mubr.bf16.gmra.mrb[0].mxu0 %v1221
        %v1278 = vpop.f32.mrb[0].mxu0
        %v1279 = vadd.f32 %v1206, %v1278
        %v1280 = vpop.f32.mrb[0].mxu0
        %v1281 = vpop.f32.mrb[0].mxu0
        %v1282 = vadd.f32 %v1206, %v1281
        %v1283 = vpop.f32.mrb[0].mxu0
        %1284 = vmatprep.mubr.bf16.mxu0 0
        %1285 = vmatmul.mubr.bf16.gmra.mrb[0].mxu0 %v1224
        %v1286 = vpop.f32.mrb[0].mxu0
        %v1287 = vadd.f32 %v1206, %v1286
        %v1288 = vpop.f32.mrb[0].mxu0
        %v1289 = vpop.f32.mrb[0].mxu0
        %v1290 = vadd.f32 %v1206, %v1289
        %v1291 = vpop.f32.mrb[0].mxu0
        %1292 = vmatprep.mubr.bf16.mxu0 0
        %1293 = vmatmul.mubr.bf16.gmra.mrb[0].mxu0 %v1227
        %v1294 = vpop.f32.mrb[0].mxu0
        %v1295 = vadd.f32 %v1206, %v1294
        %v1296 = vpop.f32.mrb[0].mxu0
        %v1297 = vpop.f32.mrb[0].mxu0
        %v1298 = vadd.f32 %v1206, %v1297
        %v1299 = vpop.f32.mrb[0].mxu0
        %1300 = vmatprep.mubr.bf16.mxu0 0
        %1301 = vmatmul.mubr.bf16.gmra.mrb[0].mxu0 %v1230
        %v1302 = vpop.f32.mrb[0].mxu0
        %v1303 = vadd.f32 %v1206, %v1302
        %v1304 = vpop.f32.mrb[0].mxu0
        %v1305 = vpop.f32.mrb[0].mxu0
        %v1306 = vadd.f32 %v1206, %v1305
        %v1307 = vpop.f32.mrb[0].mxu0
        %1308 = vmatprep.mubr.bf16.mxu0 0
        %1309 = vmatmul.mubr.bf16.gmra.mrb[0].mxu0 %v1233
        %v1310 = vpop.f32.mrb[0].mxu0
        %v1311 = vadd.f32 %v1206, %v1310
        %v1312 = vpop.f32.mrb[0].mxu0
        %v1313 = vpop.f32.mrb[0].mxu0
        %v1314 = vadd.f32 %v1206, %v1313
        %v1315 = vpop.f32.mrb[0].mxu0
        %1316 = vmatprep.mubr.bf16.mxu0 0
        %1317 = vmatmul.mubr.bf16.gmra.mrb[0].mxu0 %v1236
        %v1318 = vpop.f32.mrb[0].mxu0
        %v1319 = vadd.f32 %v1206, %v1318
        %v1320 = vpop.f32.mrb[0].mxu0
        %v1321 = vpop.f32.mrb[0].mxu0
        %v1322 = vadd.f32 %v1206, %v1321
        %v1323 = vpop.f32.mrb[0].mxu0
        %1324 = vmatprep.mubr.bf16.mxu0 0
        %1325 = vmatmul.mubr.bf16.gmra.mrb[0].mxu0 %v1239
        %v1326 = vpop.f32.mrb[0].mxu0
        %v1327 = vadd.f32 %v1206, %v1326
        %v1328 = vpop.f32.mrb[0].mxu0
        %v1329 = vpop.f32.mrb[0].mxu0
        %v1330 = vadd.f32 %v1206, %v1329
        %v1331 = vpop.f32.mrb[0].mxu0
        %1332 = vmatprep.mubr.bf16.mxu0 0
        %1333 = vmatmul.mubr.bf16.gmra.mrb[0].mxu0 %v1242
        %v1334 = vpop.f32.mrb[0].mxu0
        %v1335 = vadd.f32 %v1206, %v1334
        %v1336 = vpop.f32.mrb[0].mxu0
        %v1337 = vpop.f32.mrb[0].mxu0
        %v1338 = vadd.f32 %v1206, %v1337
        %v1339 = vpop.f32.mrb[0].mxu0
        %1340 = vdwg.mxu0
        %v1341 = vpack.c.bf16 %v1282, %v1279
        %v1342 = vpack.c.bf16 %v1290, %v1287
        %v1343 = vpack.c.bf16 %v1298, %v1295
        %v1344 = vpack.c.bf16 %v1306, %v1303
        %v1345 = vpack.c.bf16 %v1314, %v1311
        %v1346 = vpack.c.bf16 %v1322, %v1319
        %v1347 = vpack.c.bf16 %v1330, %v1327
        %v1348 = vpack.c.bf16 %v1338, %v1335
        %v1349 = vpack.c.bf16 %v1069, %v1068
        %v1350 = vpack.c.bf16 %v1071, %v1070
        %v1351 = vpack.c.bf16 %v1073, %v1072
        %v1352 = vpack.c.bf16 %v1075, %v1074
        %v1353 = vld [vmem:[%s15] sm:$0xf]
        %v1354 = vld [vmem:[%s15 + $0x4] sm:$0xf]
        %v1355 = vld [vmem:[%s15 + $0x8] sm:$0xf]
        %v1356 = vld [vmem:[%s15 + $0xc] sm:$0xf]
        %v1357 = vld [vmem:[%s17] sm:$0x1]
        %v1359 = vlaneseq
        %v1360 = vshrl.u32 %v1359, 7
        %v1361 = vsub.s32 0, %v1360
        %v1362 = vrot.slane %v1357, %v1361
        %v1368 = vunpack.c.l.b16 %v1353
        %v1369 = vunpack.c.l.b16 %v1354
        %v1370 = vunpack.c.l.b16 %v1355
        %v1371 = vunpack.c.l.b16 %v1356
        %v1372 = vpack.c.b16 %v1369, %v1368
        %v1373 = vpack.c.b16 %v1371, %v1370
        %v1377 = vsel %vm942, %v1349, 0
        %v1380 = vsel %vm942, %v1350, 0
        %v1383 = vsel %vm942, %v1351, 0
        %v1386 = vsel %vm942, %v1352, 0
        %1388 = vmatprep.subr.bf16.mxu0 0
        %1389 = vmatpush1.bf16.msra.mxu0 %v1372
        %1390 = vmatprep.subr.bf16.mxu0 0
        %1391 = vmatpush1.bf16.msra.mxu0 %v1373
        %1392 = vmatprep.subr.bf16.mxu0 0
        %1393 = vmatpush1.bf16.msra.mxu0 0
        %1394 = vmatprep.subr.bf16.mxu0 0
        %1395 = vmatpush1.bf16.msra.mxu0 0
        %1396 = vmatprep.subr.bf16.mxu0 0
        %1397 = vmatpush1.bf16.msra.mxu0 0
        %1398 = vmatprep.subr.bf16.mxu0 0
        %1399 = vmatpush1.bf16.msra.mxu0 0
        %1400 = vmatprep.subr.bf16.mxu0 0
        %1401 = vmatpush1.bf16.msra.mxu0 0
        %1402 = vmatprep.subr.bf16.mxu0 0
        %1403 = vmatpush1.bf16.msra.mxu0 0
        %1404 = vmatprep.subr.bf16.mxu0 0
        %1405 = vmatpush1.bf16.msra.mxu0 0
        %1406 = vmatprep.subr.bf16.mxu0 0
        %1407 = vmatpush1.bf16.msra.mxu0 0
        %1408 = vmatprep.subr.bf16.mxu0 0
        %1409 = vmatpush1.bf16.msra.mxu0 0
        %1410 = vmatprep.subr.bf16.mxu0 0
        %1411 = vmatpush1.bf16.msra.mxu0 0
        %1412 = vmatprep.subr.bf16.mxu0 0
        %1413 = vmatpush1.bf16.msra.mxu0 0
        %1414 = vmatprep.subr.bf16.mxu0 0
        %1415 = vmatpush1.bf16.msra.mxu0 0
        %1416 = vmatprep.subr.bf16.mxu0 0
        %1417 = vmatpush1.bf16.msra.mxu0 0
        %1418 = vmatprep.subr.bf16.mxu0 0
        %1419 = vmatpush1.bf16.msra.mxu0 0
        %1420 = vmatprep.mubr.bf16.mxu0 0
        %1421 = vmatmul.mubr.bf16.gmra.mrb[0].mxu0 %v1377
        %v1422 = vpop.f32.mrb[0].mxu0
        %v1423 = vadd.f32 %v1362, %v1422
        %v1424 = vpop.f32.mrb[0].mxu0
        %v1425 = vpop.f32.mrb[0].mxu0
        %v1426 = vadd.f32 %v1362, %v1425
        %v1427 = vpop.f32.mrb[0].mxu0
        %1428 = vmatprep.mubr.bf16.mxu0 0
        %1429 = vmatmul.mubr.bf16.gmra.mrb[0].mxu0 %v1380
        %v1430 = vpop.f32.mrb[0].mxu0
        %v1431 = vadd.f32 %v1362, %v1430
        %v1432 = vpop.f32.mrb[0].mxu0
        %v1433 = vpop.f32.mrb[0].mxu0
        %v1434 = vadd.f32 %v1362, %v1433
        %v1435 = vpop.f32.mrb[0].mxu0
        %1436 = vmatprep.mubr.bf16.mxu0 0
        %1437 = vmatmul.mubr.bf16.gmra.mrb[0].mxu0 %v1383
        %v1438 = vpop.f32.mrb[0].mxu0
        %v1439 = vadd.f32 %v1362, %v1438
        %v1440 = vpop.f32.mrb[0].mxu0
        %v1441 = vpop.f32.mrb[0].mxu0
        %v1442 = vadd.f32 %v1362, %v1441
        %v1443 = vpop.f32.mrb[0].mxu0
        %1444 = vmatprep.mubr.bf16.mxu0 0
        %1445 = vmatmul.mubr.bf16.gmra.mrb[0].mxu0 %v1386
        %v1446 = vpop.f32.mrb[0].mxu0
        %v1447 = vadd.f32 %v1362, %v1446
        %v1448 = vpop.f32.mrb[0].mxu0
        %v1449 = vpop.f32.mrb[0].mxu0
        %v1450 = vadd.f32 %v1362, %v1449
        %v1451 = vpop.f32.mrb[0].mxu0
        %1452 = vdwg.mxu0
        %v1453 = vpack.c.bf16 %v1426, %v1423
        %v1454 = vpack.c.bf16 %v1434, %v1431
        %v1455 = vpack.c.bf16 %v1442, %v1439
        %v1456 = vpack.c.bf16 %v1450, %v1447
        %v1457 = vld [vmem:[%s23] sm:$0xff]
        %v1458 = vld [vmem:[%s23 + $0x8] sm:$0xff]
        %v1459 = vld [vmem:[%s23 + $0x10] sm:$0xff]
        %v1460 = vld [vmem:[%s23 + $0x18] sm:$0xff]
        %v1461 = vld [vmem:[%s23 + $0x20] sm:$0xff]
        %v1462 = vld [vmem:[%s23 + $0x28] sm:$0xff]
        %v1463 = vld [vmem:[%s23 + $0x30] sm:$0xff]
        %v1464 = vld [vmem:[%s23 + $0x38] sm:$0xff]
        %v1466 = vsel %vm942, %v1453, 0
        %v1469 = vsel %vm942, %v1454, 0
        %v1472 = vsel %vm942, %v1455, 0
        %v1475 = vsel %vm942, %v1456, 0
        %1477 = vmatprep.subr.bf16.mxu0 0
        %1478 = vmatpush1.bf16.msra.mxu0 %v1195
        %1479 = vmatprep.subr.bf16.mxu0 0
        %1480 = vmatpush1.bf16.msra.mxu0 %v1196
        %1481 = vmatprep.subr.bf16.mxu0 0
        %1482 = vmatpush1.bf16.msra.mxu0 0
        %1483 = vmatprep.subr.bf16.mxu0 0
        %1484 = vmatpush1.bf16.msra.mxu0 0
        %1485 = vmatprep.subr.bf16.mxu0 0
        %1486 = vmatpush1.bf16.msra.mxu0 0
        %1487 = vmatprep.subr.bf16.mxu0 0
        %1488 = vmatpush1.bf16.msra.mxu0 0
        %1489 = vmatprep.subr.bf16.mxu0 0
        %1490 = vmatpush1.bf16.msra.mxu0 0
        %1491 = vmatprep.subr.bf16.mxu0 0
        %1492 = vmatpush1.bf16.msra.mxu0 0
        %1493 = vmatprep.subr.bf16.mxu0 0
        %1494 = vmatpush1.bf16.msra.mxu0 0
        %1495 = vmatprep.subr.bf16.mxu0 0
        %1496 = vmatpush1.bf16.msra.mxu0 0
        %1497 = vmatprep.subr.bf16.mxu0 0
        %1498 = vmatpush1.bf16.msra.mxu0 0
        %1499 = vmatprep.subr.bf16.mxu0 0
        %1500 = vmatpush1.bf16.msra.mxu0 0
        %1501 = vmatprep.subr.bf16.mxu0 0
        %1502 = vmatpush1.bf16.msra.mxu0 0
        %1503 = vmatprep.subr.bf16.mxu0 0
        %1504 = vmatpush1.bf16.msra.mxu0 0
        %1505 = vmatprep.subr.bf16.mxu0 0
        %1506 = vmatpush1.bf16.msra.mxu0 0
        %1507 = vmatprep.subr.bf16.mxu0 0
        %1508 = vmatpush1.bf16.msra.mxu0 0
        %1509 = vmatprep.mubr.bf16.mxu0 0
        %1510 = vmatmul.mubr.bf16.gmra.mrb[0].mxu0 %v1466
        %v1511 = vpop.f32.mrb[0].mxu0
        %v1512 = vadd.f32 %v1457, %v1511
        %v1513 = vpop.f32.mrb[0].mxu0
        %v1514 = vpop.f32.mrb[0].mxu0
        %v1515 = vadd.f32 %v1458, %v1514
        %v1516 = vpop.f32.mrb[0].mxu0
        %1517 = vmatprep.mubr.bf16.mxu0 0
        %1518 = vmatmul.mubr.bf16.gmra.mrb[0].mxu0 %v1469
        %v1519 = vpop.f32.mrb[0].mxu0
        %v1520 = vadd.f32 %v1459, %v1519
        %v1521 = vpop.f32.mrb[0].mxu0
        %v1522 = vpop.f32.mrb[0].mxu0
        %v1523 = vadd.f32 %v1460, %v1522
        %v1524 = vpop.f32.mrb[0].mxu0
        %1525 = vmatprep.mubr.bf16.mxu0 0
        %1526 = vmatmul.mubr.bf16.gmra.mrb[0].mxu0 %v1472
        %v1527 = vpop.f32.mrb[0].mxu0
        %v1528 = vadd.f32 %v1461, %v1527
        %v1529 = vpop.f32.mrb[0].mxu0
        %v1530 = vpop.f32.mrb[0].mxu0
        %v1531 = vadd.f32 %v1462, %v1530
        %v1532 = vpop.f32.mrb[0].mxu0
        %1533 = vmatprep.mubr.bf16.mxu0 0
        %1534 = vmatmul.mubr.bf16.gmra.mrb[0].mxu0 %v1475
        %v1535 = vpop.f32.mrb[0].mxu0
        %v1536 = vadd.f32 %v1463, %v1535
        %v1537 = vpop.f32.mrb[0].mxu0
        %v1538 = vpop.f32.mrb[0].mxu0
        %v1539 = vadd.f32 %v1464, %v1538
        %v1540 = vpop.f32.mrb[0].mxu0
        %1541 = vdwg.mxu0
        %1542 = vmax.xlane.f32.xlu0 %v1512
        %v1543 = vpop.xlane.xlu0 %1542
        %1544 = vmax.xlane.f32.xlu0 %v1515
        %v1545 = vpop.xlane.xlu0 %1544
        %1546 = vmax.xlane.f32.xlu0 %v1520
        %v1547 = vpop.xlane.xlu0 %1546
        %1548 = vmax.xlane.f32.xlu0 %v1523
        %v1549 = vpop.xlane.xlu0 %1548
        %1550 = vmax.xlane.f32.xlu0 %v1528
        %v1551 = vpop.xlane.xlu0 %1550
        %1552 = vmax.xlane.f32.xlu0 %v1531
        %v1553 = vpop.xlane.xlu0 %1552
        %1554 = vmax.xlane.f32.xlu0 %v1536
        %v1555 = vpop.xlane.xlu0 %1554
        %1556 = vmax.xlane.f32.xlu0 %v1539
        %v1557 = vpop.xlane.xlu0 %1556
        %v1558 = vsub.f32 %v1512, %v1543
        %v1559 = vsub.f32 %v1515, %v1545
        %v1560 = vsub.f32 %v1520, %v1547
        %v1561 = vsub.f32 %v1523, %v1549
        %v1562 = vsub.f32 %v1528, %v1551
        %v1563 = vsub.f32 %v1531, %v1553
        %v1564 = vsub.f32 %v1536, %v1555
        %v1565 = vsub.f32 %v1539, %v1557
        %v1566 = vmul.f32 %v1558, 1.442695
        %v1567 = vpow.pop %v1566
        %v1568 = vmul.f32 %v1559, 1.442695
        %v1569 = vpow.pop %v1568
        %v1570 = vmul.f32 %v1560, 1.442695
        %v1571 = vpow.pop %v1570
        %v1572 = vmul.f32 %v1561, 1.442695
        %v1573 = vpow.pop %v1572
        %v1574 = vmul.f32 %v1562, 1.442695
        %v1575 = vpow.pop %v1574
        %v1576 = vmul.f32 %v1563, 1.442695
        %v1577 = vpow.pop %v1576
        %v1578 = vmul.f32 %v1564, 1.442695
        %v1579 = vpow.pop %v1578
        %v1580 = vmul.f32 %v1565, 1.442695
        %v1581 = vpow.pop %v1580
        %1582 = vadd.xlane.f32.xlu0 %v1567
        %v1583 = vpop.xlane.xlu0 %1582
        %1584 = vadd.xlane.f32.xlu0 %v1569
        %v1585 = vpop.xlane.xlu0 %1584
        %1586 = vadd.xlane.f32.xlu0 %v1571
        %v1587 = vpop.xlane.xlu0 %1586
        %1588 = vadd.xlane.f32.xlu0 %v1573
        %v1589 = vpop.xlane.xlu0 %1588
        %1590 = vadd.xlane.f32.xlu0 %v1575
        %v1591 = vpop.xlane.xlu0 %1590
        %1592 = vadd.xlane.f32.xlu0 %v1577
        %v1593 = vpop.xlane.xlu0 %1592
        %1594 = vadd.xlane.f32.xlu0 %v1579
        %v1595 = vpop.xlane.xlu0 %1594
        %1596 = vadd.xlane.f32.xlu0 %v1581
        %v1597 = vpop.xlane.xlu0 %1596
        %v1598 = vrcp.pop %v1583
        %v1599 = vrcp.pop %v1585
        %v1600 = vrcp.pop %v1587
        %v1601 = vrcp.pop %v1589
        %v1602 = vrcp.pop %v1591
        %v1603 = vrcp.pop %v1593
        %v1604 = vrcp.pop %v1595
        %v1605 = vrcp.pop %v1597
        %v1606 = vpack.c.bf16 %v1569, %v1567
        %v1607 = vpack.c.bf16 %v1573, %v1571
        %v1608 = vpack.c.bf16 %v1577, %v1575
        %v1609 = vpack.c.bf16 %v1581, %v1579
        %1610 = vmatprep.subr.bf16.mxu0 0
        %1611 = vmatpush1.bf16.msra.mxu0 %v1341
        %1612 = vmatprep.subr.bf16.mxu0 0
        %1613 = vmatpush1.bf16.msra.mxu0 %v1342
        %1614 = vmatprep.subr.bf16.mxu0 0
        %1615 = vmatpush1.bf16.msra.mxu0 %v1343
        %1616 = vmatprep.subr.bf16.mxu0 0
        %1617 = vmatpush1.bf16.msra.mxu0 %v1344
        %1618 = vmatprep.subr.bf16.mxu0 0
        %1619 = vmatpush1.bf16.msra.mxu0 %v1345
        %1620 = vmatprep.subr.bf16.mxu0 0
        %1621 = vmatpush1.bf16.msra.mxu0 %v1346
        %1622 = vmatprep.subr.bf16.mxu0 0
        %1623 = vmatpush1.bf16.msra.mxu0 %v1347
        %1624 = vmatprep.subr.bf16.mxu0 0
        %1625 = vmatpush1.bf16.msra.mxu0 %v1348
        %1626 = vmatprep.subr.bf16.mxu0 0
        %1627 = vmatpush1.bf16.msra.mxu0 0
        %1628 = vmatprep.subr.bf16.mxu0 0
        %1629 = vmatpush1.bf16.msra.mxu0 0
        %1630 = vmatprep.subr.bf16.mxu0 0
        %1631 = vmatpush1.bf16.msra.mxu0 0
        %1632 = vmatprep.subr.bf16.mxu0 0
        %1633 = vmatpush1.bf16.msra.mxu0 0
        %1634 = vmatprep.subr.bf16.mxu0 0
        %1635 = vmatpush1.bf16.msra.mxu0 0
        %1636 = vmatprep.subr.bf16.mxu0 0
        %1637 = vmatpush1.bf16.msra.mxu0 0
        %1638 = vmatprep.subr.bf16.mxu0 0
        %1639 = vmatpush1.bf16.msra.mxu0 0
        %1640 = vmatprep.subr.bf16.mxu0 0
        %1641 = vmatpush1.bf16.msra.mxu0 0
        %1642 = vmatprep.mubr.bf16.mxu0 0
        %1643 = vmatmul.mubr.bf16.gmra.mrb[0].mxu0 %v1606
        %v1644 = vpop.f32.mrb[0].mxu0
        %v1645 = vadd.f32 0.0, %v1644
        %v1646 = vpop.f32.mrb[0].mxu0
        %v1647 = vpop.f32.mrb[0].mxu0
        %v1648 = vadd.f32 0.0, %v1647
        %v1649 = vpop.f32.mrb[0].mxu0
        %1650 = vmatprep.mubr.bf16.mxu0 0
        %1651 = vmatmul.mubr.bf16.gmra.mrb[0].mxu0 %v1607
        %v1652 = vpop.f32.mrb[0].mxu0
        %v1653 = vadd.f32 0.0, %v1652
        %v1654 = vpop.f32.mrb[0].mxu0
        %v1655 = vpop.f32.mrb[0].mxu0
        %v1656 = vadd.f32 0.0, %v1655
        %v1657 = vpop.f32.mrb[0].mxu0
        %1658 = vmatprep.mubr.bf16.mxu0 0
        %1659 = vmatmul.mubr.bf16.gmra.mrb[0].mxu0 %v1608
        %v1660 = vpop.f32.mrb[0].mxu0
        %v1661 = vadd.f32 0.0, %v1660
        %v1662 = vpop.f32.mrb[0].mxu0
        %v1663 = vpop.f32.mrb[0].mxu0
        %v1664 = vadd.f32 0.0, %v1663
        %v1665 = vpop.f32.mrb[0].mxu0
        %1666 = vmatprep.mubr.bf16.mxu0 0
        %1667 = vmatmul.mubr.bf16.gmra.mrb[0].mxu0 %v1609
        %v1668 = vpop.f32.mrb[0].mxu0
        %v1669 = vadd.f32 0.0, %v1668
        %v1670 = vpop.f32.mrb[0].mxu0
        %v1671 = vpop.f32.mrb[0].mxu0
        %v1672 = vadd.f32 0.0, %v1671
        %v1673 = vpop.f32.mrb[0].mxu0
        %1674 = vdwg.mxu0
        %v1675 = vmul.f32 %v1645, %v1598
        %v1676 = vmul.f32 %v1648, %v1599
        %v1677 = vmul.f32 %v1653, %v1600
        %v1678 = vmul.f32 %v1656, %v1601
        %v1679 = vmul.f32 %v1661, %v1602
        %v1680 = vmul.f32 %v1664, %v1603
        %v1681 = vmul.f32 %v1669, %v1604
        %v1682 = vmul.f32 %v1672, %v1605
        %v1683 = vpack.c.bf16 %v1676, %v1675
        %v1684 = vpack.c.bf16 %v1678, %v1677
        %v1685 = vpack.c.bf16 %v1680, %v1679
        %v1686 = vpack.c.bf16 %v1682, %v1681
        %v1687 = vld [vmem:[%s25] sm:$0xf]
        %v1688 = vld [vmem:[%s25 + $0x4] sm:$0xf]
        %v1689 = vld [vmem:[%s25 + $0x8] sm:$0xf]
        %v1690 = vld [vmem:[%s25 + $0xc] sm:$0xf]
        %s1691 = scalar_lea.vmem %s15, 16
        %v1692 = vld [vmem:[%s1691] sm:$0xf]
        %v1693 = vld [vmem:[%s1691 + $0x4] sm:$0xf]
        %v1694 = vld [vmem:[%s1691 + $0x8] sm:$0xf]
        %v1695 = vld [vmem:[%s1691 + $0xc] sm:$0xf]
        %s1696 = scalar_lea.vmem %s17, 1
        %v1697 = vld [vmem:[%s1696] sm:$0x1]
        %v1699 = vlaneseq
        %v1700 = vshrl.u32 %v1699, 7
        %v1701 = vsub.s32 0, %v1700
        %v1702 = vrot.slane %v1697, %v1701
        %v1708 = vunpack.c.l.b16 %v1692
        %v1709 = vunpack.c.l.b16 %v1693
        %v1710 = vunpack.c.l.b16 %v1694
        %v1711 = vunpack.c.l.b16 %v1695
        %v1712 = vpack.c.b16 %v1709, %v1708
        %v1713 = vpack.c.b16 %v1711, %v1710
        %1716 = vmatprep.subr.bf16.mxu0 0
        %1717 = vmatpush1.bf16.msra.mxu0 %v1712
        %1718 = vmatprep.subr.bf16.mxu0 0
        %1719 = vmatpush1.bf16.msra.mxu0 %v1713
        %1720 = vmatprep.subr.bf16.mxu0 0
        %1721 = vmatpush1.bf16.msra.mxu0 0
        %1722 = vmatprep.subr.bf16.mxu0 0
        %1723 = vmatpush1.bf16.msra.mxu0 0
        %1724 = vmatprep.subr.bf16.mxu0 0
        %1725 = vmatpush1.bf16.msra.mxu0 0
        %1726 = vmatprep.subr.bf16.mxu0 0
        %1727 = vmatpush1.bf16.msra.mxu0 0
        %1728 = vmatprep.subr.bf16.mxu0 0
        %1729 = vmatpush1.bf16.msra.mxu0 0
        %1730 = vmatprep.subr.bf16.mxu0 0
        %1731 = vmatpush1.bf16.msra.mxu0 0
        %1732 = vmatprep.subr.bf16.mxu0 0
        %1733 = vmatpush1.bf16.msra.mxu0 0
        %1734 = vmatprep.subr.bf16.mxu0 0
        %1735 = vmatpush1.bf16.msra.mxu0 0
        %1736 = vmatprep.subr.bf16.mxu0 0
        %1737 = vmatpush1.bf16.msra.mxu0 0
        %1738 = vmatprep.subr.bf16.mxu0 0
        %1739 = vmatpush1.bf16.msra.mxu0 0
        %1740 = vmatprep.subr.bf16.mxu0 0
        %1741 = vmatpush1.bf16.msra.mxu0 0
        %1742 = vmatprep.subr.bf16.mxu0 0
        %1743 = vmatpush1.bf16.msra.mxu0 0
        %1744 = vmatprep.subr.bf16.mxu0 0
        %1745 = vmatpush1.bf16.msra.mxu0 0
        %1746 = vmatprep.subr.bf16.mxu0 0
        %1747 = vmatpush1.bf16.msra.mxu0 0
        %1748 = vmatprep.mubr.bf16.mxu0 0
        %1749 = vmatmul.mubr.bf16.gmra.mrb[0].mxu0 %v1377
        %v1750 = vpop.f32.mrb[0].mxu0
        %v1751 = vadd.f32 %v1702, %v1750
        %v1752 = vpop.f32.mrb[0].mxu0
        %v1753 = vpop.f32.mrb[0].mxu0
        %v1754 = vadd.f32 %v1702, %v1753
        %v1755 = vpop.f32.mrb[0].mxu0
        %1756 = vmatprep.mubr.bf16.mxu0 0
        %1757 = vmatmul.mubr.bf16.gmra.mrb[0].mxu0 %v1380
        %v1758 = vpop.f32.mrb[0].mxu0
        %v1759 = vadd.f32 %v1702, %v1758
        %v1760 = vpop.f32.mrb[0].mxu0
        %v1761 = vpop.f32.mrb[0].mxu0
        %v1762 = vadd.f32 %v1702, %v1761
        %v1763 = vpop.f32.mrb[0].mxu0
        %1764 = vmatprep.mubr.bf16.mxu0 0
        %1765 = vmatmul.mubr.bf16.gmra.mrb[0].mxu0 %v1383
        %v1766 = vpop.f32.mrb[0].mxu0
        %v1767 = vadd.f32 %v1702, %v1766
        %v1768 = vpop.f32.mrb[0].mxu0
        %v1769 = vpop.f32.mrb[0].mxu0
        %v1770 = vadd.f32 %v1702, %v1769
        %v1771 = vpop.f32.mrb[0].mxu0
        %1772 = vmatprep.mubr.bf16.mxu0 0
        %1773 = vmatmul.mubr.bf16.gmra.mrb[0].mxu0 %v1386
        %v1774 = vpop.f32.mrb[0].mxu0
        %v1775 = vadd.f32 %v1702, %v1774
        %v1776 = vpop.f32.mrb[0].mxu0
        %v1777 = vpop.f32.mrb[0].mxu0
        %v1778 = vadd.f32 %v1702, %v1777
        %v1779 = vpop.f32.mrb[0].mxu0
        %1780 = vdwg.mxu0
        %v1781 = vpack.c.bf16 %v1754, %v1751
        %v1782 = vpack.c.bf16 %v1762, %v1759
        %v1783 = vpack.c.bf16 %v1770, %v1767
        %v1784 = vpack.c.bf16 %v1778, %v1775
        %s1785 = scalar_lea.vmem %s23, 64
        %v1786 = vld [vmem:[%s1785] sm:$0xff]
        %v1787 = vld [vmem:[%s1785 + $0x8] sm:$0xff]
        %v1788 = vld [vmem:[%s1785 + $0x10] sm:$0xff]
        %v1789 = vld [vmem:[%s1785 + $0x18] sm:$0xff]
        %v1790 = vld [vmem:[%s1785 + $0x20] sm:$0xff]
        %v1791 = vld [vmem:[%s1785 + $0x28] sm:$0xff]
        %v1792 = vld [vmem:[%s1785 + $0x30] sm:$0xff]
        %v1793 = vld [vmem:[%s1785 + $0x38] sm:$0xff]
        %v1795 = vsel %vm942, %v1781, 0
        %v1798 = vsel %vm942, %v1782, 0
        %v1801 = vsel %vm942, %v1783, 0
        %v1804 = vsel %vm942, %v1784, 0
        %1806 = vmatprep.subr.bf16.mxu0 0
        %1807 = vmatpush1.bf16.msra.mxu0 %v1195
        %1808 = vmatprep.subr.bf16.mxu0 0
        %1809 = vmatpush1.bf16.msra.mxu0 %v1196
        %1810 = vmatprep.subr.bf16.mxu0 0
        %1811 = vmatpush1.bf16.msra.mxu0 0
        %1812 = vmatprep.subr.bf16.mxu0 0
        %1813 = vmatpush1.bf16.msra.mxu0 0
        %1814 = vmatprep.subr.bf16.mxu0 0
        %1815 = vmatpush1.bf16.msra.mxu0 0
        %1816 = vmatprep.subr.bf16.mxu0 0
        %1817 = vmatpush1.bf16.msra.mxu0 0
        %1818 = vmatprep.subr.bf16.mxu0 0
        %1819 = vmatpush1.bf16.msra.mxu0 0
        %1820 = vmatprep.subr.bf16.mxu0 0
        %1821 = vmatpush1.bf16.msra.mxu0 0
        %1822 = vmatprep.subr.bf16.mxu0 0
        %1823 = vmatpush1.bf16.msra.mxu0 0
        %1824 = vmatprep.subr.bf16.mxu0 0
        %1825 = vmatpush1.bf16.msra.mxu0 0
        %1826 = vmatprep.subr.bf16.mxu0 0
        %1827 = vmatpush1.bf16.msra.mxu0 0
        %1828 = vmatprep.subr.bf16.mxu0 0
        %1829 = vmatpush1.bf16.msra.mxu0 0
        %1830 = vmatprep.subr.bf16.mxu0 0
        %1831 = vmatpush1.bf16.msra.mxu0 0
        %1832 = vmatprep.subr.bf16.mxu0 0
        %1833 = vmatpush1.bf16.msra.mxu0 0
        %1834 = vmatprep.subr.bf16.mxu0 0
        %1835 = vmatpush1.bf16.msra.mxu0 0
        %1836 = vmatprep.subr.bf16.mxu0 0
        %1837 = vmatpush1.bf16.msra.mxu0 0
        %1838 = vmatprep.mubr.bf16.mxu0 0
        %1839 = vmatmul.mubr.bf16.gmra.mrb[0].mxu0 %v1795
        %v1840 = vpop.f32.mrb[0].mxu0
        %v1841 = vadd.f32 %v1786, %v1840
        %v1842 = vpop.f32.mrb[0].mxu0
        %v1843 = vpop.f32.mrb[0].mxu0
        %v1844 = vadd.f32 %v1787, %v1843
        %v1845 = vpop.f32.mrb[0].mxu0
        %1846 = vmatprep.mubr.bf16.mxu0 0
        %1847 = vmatmul.mubr.bf16.gmra.mrb[0].mxu0 %v1798
        %v1848 = vpop.f32.mrb[0].mxu0
        %v1849 = vadd.f32 %v1788, %v1848
        %v1850 = vpop.f32.mrb[0].mxu0
        %v1851 = vpop.f32.mrb[0].mxu0
        %v1852 = vadd.f32 %v1789, %v1851
        %v1853 = vpop.f32.mrb[0].mxu0
        %1854 = vmatprep.mubr.bf16.mxu0 0
        %1855 = vmatmul.mubr.bf16.gmra.mrb[0].mxu0 %v1801
        %v1856 = vpop.f32.mrb[0].mxu0
        %v1857 = vadd.f32 %v1790, %v1856
        %v1858 = vpop.f32.mrb[0].mxu0
        %v1859 = vpop.f32.mrb[0].mxu0
        %v1860 = vadd.f32 %v1791, %v1859
        %v1861 = vpop.f32.mrb[0].mxu0
        %1862 = vmatprep.mubr.bf16.mxu0 0
        %1863 = vmatmul.mubr.bf16.gmra.mrb[0].mxu0 %v1804
        %v1864 = vpop.f32.mrb[0].mxu0
        %v1865 = vadd.f32 %v1792, %v1864
        %v1866 = vpop.f32.mrb[0].mxu0
        %v1867 = vpop.f32.mrb[0].mxu0
        %v1868 = vadd.f32 %v1793, %v1867
        %v1869 = vpop.f32.mrb[0].mxu0
        %1870 = vdwg.mxu0
        %1871 = vmax.xlane.f32.xlu0 %v1841
        %v1872 = vpop.xlane.xlu0 %1871
        %1873 = vmax.xlane.f32.xlu0 %v1844
        %v1874 = vpop.xlane.xlu0 %1873
        %1875 = vmax.xlane.f32.xlu0 %v1849
        %v1876 = vpop.xlane.xlu0 %1875
        %1877 = vmax.xlane.f32.xlu0 %v1852
        %v1878 = vpop.xlane.xlu0 %1877
        %1879 = vmax.xlane.f32.xlu0 %v1857
        %v1880 = vpop.xlane.xlu0 %1879
        %1881 = vmax.xlane.f32.xlu0 %v1860
        %v1882 = vpop.xlane.xlu0 %1881
        %1883 = vmax.xlane.f32.xlu0 %v1865
        %v1884 = vpop.xlane.xlu0 %1883
        %1885 = vmax.xlane.f32.xlu0 %v1868
        %v1886 = vpop.xlane.xlu0 %1885
        %v1887 = vsub.f32 %v1841, %v1872
        %v1888 = vsub.f32 %v1844, %v1874
        %v1889 = vsub.f32 %v1849, %v1876
        %v1890 = vsub.f32 %v1852, %v1878
        %v1891 = vsub.f32 %v1857, %v1880
        %v1892 = vsub.f32 %v1860, %v1882
        %v1893 = vsub.f32 %v1865, %v1884
        %v1894 = vsub.f32 %v1868, %v1886
        %v1895 = vmul.f32 %v1887, 1.442695
        %v1896 = vpow.pop %v1895
        %v1897 = vmul.f32 %v1888, 1.442695
        %v1898 = vpow.pop %v1897
        %v1899 = vmul.f32 %v1889, 1.442695
        %v1900 = vpow.pop %v1899
        %v1901 = vmul.f32 %v1890, 1.442695
        %v1902 = vpow.pop %v1901
        %v1903 = vmul.f32 %v1891, 1.442695
        %v1904 = vpow.pop %v1903
        %v1905 = vmul.f32 %v1892, 1.442695
        %v1906 = vpow.pop %v1905
        %v1907 = vmul.f32 %v1893, 1.442695
        %v1908 = vpow.pop %v1907
        %v1909 = vmul.f32 %v1894, 1.442695
        %v1910 = vpow.pop %v1909
        %1911 = vadd.xlane.f32.xlu0 %v1896
        %v1912 = vpop.xlane.xlu0 %1911
        %1913 = vadd.xlane.f32.xlu0 %v1898
        %v1914 = vpop.xlane.xlu0 %1913
        %1915 = vadd.xlane.f32.xlu0 %v1900
        %v1916 = vpop.xlane.xlu0 %1915
        %1917 = vadd.xlane.f32.xlu0 %v1902
        %v1918 = vpop.xlane.xlu0 %1917
        %1919 = vadd.xlane.f32.xlu0 %v1904
        %v1920 = vpop.xlane.xlu0 %1919
        %1921 = vadd.xlane.f32.xlu0 %v1906
        %v1922 = vpop.xlane.xlu0 %1921
        %1923 = vadd.xlane.f32.xlu0 %v1908
        %v1924 = vpop.xlane.xlu0 %1923
        %1925 = vadd.xlane.f32.xlu0 %v1910
        %v1926 = vpop.xlane.xlu0 %1925
        %v1927 = vrcp.pop %v1912
        %v1928 = vrcp.pop %v1914
        %v1929 = vrcp.pop %v1916
        %v1930 = vrcp.pop %v1918
        %v1931 = vrcp.pop %v1920
        %v1932 = vrcp.pop %v1922
        %v1933 = vrcp.pop %v1924
        %v1934 = vrcp.pop %v1926
        %v1935 = vpack.c.bf16 %v1898, %v1896
        %v1936 = vpack.c.bf16 %v1902, %v1900
        %v1937 = vpack.c.bf16 %v1906, %v1904
        %v1938 = vpack.c.bf16 %v1910, %v1908
        %1939 = vmatprep.subr.bf16.mxu0 0
        %1940 = vmatpush1.bf16.msra.mxu0 %v1341
        %1941 = vmatprep.subr.bf16.mxu0 0
        %1942 = vmatpush1.bf16.msra.mxu0 %v1342
        %1943 = vmatprep.subr.bf16.mxu0 0
        %1944 = vmatpush1.bf16.msra.mxu0 %v1343
        %1945 = vmatprep.subr.bf16.mxu0 0
        %1946 = vmatpush1.bf16.msra.mxu0 %v1344
        %1947 = vmatprep.subr.bf16.mxu0 0
        %1948 = vmatpush1.bf16.msra.mxu0 %v1345
        %1949 = vmatprep.subr.bf16.mxu0 0
        %1950 = vmatpush1.bf16.msra.mxu0 %v1346
        %1951 = vmatprep.subr.bf16.mxu0 0
        %1952 = vmatpush1.bf16.msra.mxu0 %v1347
        %1953 = vmatprep.subr.bf16.mxu0 0
        %1954 = vmatpush1.bf16.msra.mxu0 %v1348
        %1955 = vmatprep.subr.bf16.mxu0 0
        %1956 = vmatpush1.bf16.msra.mxu0 0
        %1957 = vmatprep.subr.bf16.mxu0 0
        %1958 = vmatpush1.bf16.msra.mxu0 0
        %1959 = vmatprep.subr.bf16.mxu0 0
        %1960 = vmatpush1.bf16.msra.mxu0 0
        %1961 = vmatprep.subr.bf16.mxu0 0
        %1962 = vmatpush1.bf16.msra.mxu0 0
        %1963 = vmatprep.subr.bf16.mxu0 0
        %1964 = vmatpush1.bf16.msra.mxu0 0
        %1965 = vmatprep.subr.bf16.mxu0 0
        %1966 = vmatpush1.bf16.msra.mxu0 0
        %1967 = vmatprep.subr.bf16.mxu0 0
        %1968 = vmatpush1.bf16.msra.mxu0 0
        %1969 = vmatprep.subr.bf16.mxu0 0
        %1970 = vmatpush1.bf16.msra.mxu0 0
        %1971 = vmatprep.mubr.bf16.mxu0 0
        %1972 = vmatmul.mubr.bf16.gmra.mrb[0].mxu0 %v1935
        %v1973 = vpop.f32.mrb[0].mxu0
        %v1974 = vadd.f32 0.0, %v1973
        %v1975 = vpop.f32.mrb[0].mxu0
        %v1976 = vpop.f32.mrb[0].mxu0
        %v1977 = vadd.f32 0.0, %v1976
        %v1978 = vpop.f32.mrb[0].mxu0
        %1979 = vmatprep.mubr.bf16.mxu0 0
        %1980 = vmatmul.mubr.bf16.gmra.mrb[0].mxu0 %v1936
        %v1981 = vpop.f32.mrb[0].mxu0
        %v1982 = vadd.f32 0.0, %v1981
        %v1983 = vpop.f32.mrb[0].mxu0
        %v1984 = vpop.f32.mrb[0].mxu0
        %v1985 = vadd.f32 0.0, %v1984
        %v1986 = vpop.f32.mrb[0].mxu0
        %1987 = vmatprep.mubr.bf16.mxu0 0
        %1988 = vmatmul.mubr.bf16.gmra.mrb[0].mxu0 %v1937
        %v1989 = vpop.f32.mrb[0].mxu0
        %v1990 = vadd.f32 0.0, %v1989
        %v1991 = vpop.f32.mrb[0].mxu0
        %v1992 = vpop.f32.mrb[0].mxu0
        %v1993 = vadd.f32 0.0, %v1992
        %v1994 = vpop.f32.mrb[0].mxu0
        %1995 = vmatprep.mubr.bf16.mxu0 0
        %1996 = vmatmul.mubr.bf16.gmra.mrb[0].mxu0 %v1938
        %v1997 = vpop.f32.mrb[0].mxu0
        %v1998 = vadd.f32 0.0, %v1997
        %v1999 = vpop.f32.mrb[0].mxu0
        %v2000 = vpop.f32.mrb[0].mxu0
        %v2001 = vadd.f32 0.0, %v2000
        %v2002 = vpop.f32.mrb[0].mxu0
        %2003 = vdwg.mxu0
        %v2004 = vmul.f32 %v1974, %v1927
        %v2005 = vmul.f32 %v1977, %v1928
        %v2006 = vmul.f32 %v1982, %v1929
        %v2007 = vmul.f32 %v1985, %v1930
        %v2008 = vmul.f32 %v1990, %v1931
        %v2009 = vmul.f32 %v1993, %v1932
        %v2010 = vmul.f32 %v1998, %v1933
        %v2011 = vmul.f32 %v2001, %v1934
        %v2012 = vpack.c.bf16 %v2005, %v2004
        %v2013 = vpack.c.bf16 %v2007, %v2006
        %v2014 = vpack.c.bf16 %v2009, %v2008
        %v2015 = vpack.c.bf16 %v2011, %v2010
        %s2016 = scalar_lea.vmem %s25, 16
        %v2017 = vld [vmem:[%s2016] sm:$0xf]
        %v2018 = vld [vmem:[%s2016 + $0x4] sm:$0xf]
        %v2019 = vld [vmem:[%s2016 + $0x8] sm:$0xf]
        %v2020 = vld [vmem:[%s2016 + $0xc] sm:$0xf]
        %v2025 = vunpack.c.l.b16 %v2017
        %v2026 = vunpack.c.l.b16 %v2018
        %v2027 = vunpack.c.l.b16 %v2019
        %v2028 = vunpack.c.l.b16 %v2020
        %v2029 = vpack.c.b16 %v2026, %v2025
        %v2030 = vpack.c.b16 %v2028, %v2027
        %v2034 = vsel %vm942, %v2012, 0
        %v2037 = vsel %vm942, %v2013, 0
        %v2040 = vsel %vm942, %v2014, 0
        %v2043 = vsel %vm942, %v2015, 0
        %2045 = vmatprep.subr.bf16.mxu0 0
        %2046 = vmatpush1.bf16.msra.mxu0 %v2029
        %2047 = vmatprep.subr.bf16.mxu0 0
        %2048 = vmatpush1.bf16.msra.mxu0 %v2030
        %2049 = vmatprep.subr.bf16.mxu0 0
        %2050 = vmatpush1.bf16.msra.mxu0 0
        %2051 = vmatprep.subr.bf16.mxu0 0
        %2052 = vmatpush1.bf16.msra.mxu0 0
        %2053 = vmatprep.subr.bf16.mxu0 0
        %2054 = vmatpush1.bf16.msra.mxu0 0
        %2055 = vmatprep.subr.bf16.mxu0 0
        %2056 = vmatpush1.bf16.msra.mxu0 0
        %2057 = vmatprep.subr.bf16.mxu0 0
        %2058 = vmatpush1.bf16.msra.mxu0 0
        %2059 = vmatprep.subr.bf16.mxu0 0
        %2060 = vmatpush1.bf16.msra.mxu0 0
        %2061 = vmatprep.subr.bf16.mxu0 0
        %2062 = vmatpush1.bf16.msra.mxu0 0
        %2063 = vmatprep.subr.bf16.mxu0 0
        %2064 = vmatpush1.bf16.msra.mxu0 0
        %2065 = vmatprep.subr.bf16.mxu0 0
        %2066 = vmatpush1.bf16.msra.mxu0 0
        %2067 = vmatprep.subr.bf16.mxu0 0
        %2068 = vmatpush1.bf16.msra.mxu0 0
        %2069 = vmatprep.subr.bf16.mxu0 0
        %2070 = vmatpush1.bf16.msra.mxu0 0
        %2071 = vmatprep.subr.bf16.mxu0 0
        %2072 = vmatpush1.bf16.msra.mxu0 0
        %2073 = vmatprep.subr.bf16.mxu0 0
        %2074 = vmatpush1.bf16.msra.mxu0 0
        %2075 = vmatprep.subr.bf16.mxu0 0
        %2076 = vmatpush1.bf16.msra.mxu0 0
        %2077 = vmatprep.mubr.bf16.mxu0 0
        %2078 = vmatmul.mubr.bf16.gmra.mrb[0].mxu0 %v2034
        %v2079 = vpop.f32.mrb[0].mxu0
        %v2080 = vadd.f32 0.0, %v2079
        %v2081 = vpop.f32.mrb[0].mxu0
        %v2082 = vpop.f32.mrb[0].mxu0
        %v2083 = vadd.f32 0.0, %v2082
        %v2084 = vpop.f32.mrb[0].mxu0
        %2085 = vmatprep.mubr.bf16.mxu0 0
        %2086 = vmatmul.mubr.bf16.gmra.mrb[0].mxu0 %v2037
        %v2087 = vpop.f32.mrb[0].mxu0
        %v2088 = vadd.f32 0.0, %v2087
        %v2089 = vpop.f32.mrb[0].mxu0
        %v2090 = vpop.f32.mrb[0].mxu0
        %v2091 = vadd.f32 0.0, %v2090
        %v2092 = vpop.f32.mrb[0].mxu0
        %2093 = vmatprep.mubr.bf16.mxu0 0
        %2094 = vmatmul.mubr.bf16.gmra.mrb[0].mxu0 %v2040
        %v2095 = vpop.f32.mrb[0].mxu0
        %v2096 = vadd.f32 0.0, %v2095
        %v2097 = vpop.f32.mrb[0].mxu0
        %v2098 = vpop.f32.mrb[0].mxu0
        %v2099 = vadd.f32 0.0, %v2098
        %v2100 = vpop.f32.mrb[0].mxu0
        %2101 = vmatprep.mubr.bf16.mxu0 0
        %2102 = vmatmul.mubr.bf16.gmra.mrb[0].mxu0 %v2043
        %v2103 = vpop.f32.mrb[0].mxu0
        %v2104 = vadd.f32 0.0, %v2103
        %v2105 = vpop.f32.mrb[0].mxu0
        %v2106 = vpop.f32.mrb[0].mxu0
        %v2107 = vadd.f32 0.0, %v2106
        %v2108 = vpop.f32.mrb[0].mxu0
        %2109 = vdwg.mxu0
        %v2114 = vunpack.c.l.b16 %v1687
        %v2115 = vunpack.c.l.b16 %v1688
        %v2116 = vunpack.c.l.b16 %v1689
        %v2117 = vunpack.c.l.b16 %v1690
        %v2118 = vpack.c.b16 %v2115, %v2114
        %v2119 = vpack.c.b16 %v2117, %v2116
        %v2123 = vsel %vm942, %v1683, 0
        %v2126 = vsel %vm942, %v1684, 0
        %v2129 = vsel %vm942, %v1685, 0
        %v2132 = vsel %vm942, %v1686, 0
        %2134 = vmatprep.subr.bf16.mxu0 0
        %2135 = vmatpush1.bf16.msra.mxu0 %v2118
        %2136 = vmatprep.subr.bf16.mxu0 0
        %2137 = vmatpush1.bf16.msra.mxu0 %v2119
        %2138 = vmatprep.subr.bf16.mxu0 0
        %2139 = vmatpush1.bf16.msra.mxu0 0
        %2140 = vmatprep.subr.bf16.mxu0 0
        %2141 = vmatpush1.bf16.msra.mxu0 0
        %2142 = vmatprep.subr.bf16.mxu0 0
        %2143 = vmatpush1.bf16.msra.mxu0 0
        %2144 = vmatprep.subr.bf16.mxu0 0
        %2145 = vmatpush1.bf16.msra.mxu0 0
        %2146 = vmatprep.subr.bf16.mxu0 0
        %2147 = vmatpush1.bf16.msra.mxu0 0
        %2148 = vmatprep.subr.bf16.mxu0 0
        %2149 = vmatpush1.bf16.msra.mxu0 0
        %2150 = vmatprep.subr.bf16.mxu0 0
        %2151 = vmatpush1.bf16.msra.mxu0 0
        %2152 = vmatprep.subr.bf16.mxu0 0
        %2153 = vmatpush1.bf16.msra.mxu0 0
        %2154 = vmatprep.subr.bf16.mxu0 0
        %2155 = vmatpush1.bf16.msra.mxu0 0
        %2156 = vmatprep.subr.bf16.mxu0 0
        %2157 = vmatpush1.bf16.msra.mxu0 0
        %2158 = vmatprep.subr.bf16.mxu0 0
        %2159 = vmatpush1.bf16.msra.mxu0 0
        %2160 = vmatprep.subr.bf16.mxu0 0
        %2161 = vmatpush1.bf16.msra.mxu0 0
        %2162 = vmatprep.subr.bf16.mxu0 0
        %2163 = vmatpush1.bf16.msra.mxu0 0
        %2164 = vmatprep.subr.bf16.mxu0 0
        %2165 = vmatpush1.bf16.msra.mxu0 0
        %2166 = vmatprep.mubr.bf16.mxu0 0
        %2167 = vmatmul.mubr.bf16.gmra.mrb[0].mxu0 %v2123
        %v2168 = vpop.f32.mrb[0].mxu0
        %v2169 = vadd.f32 %v2080, %v2168
        %v2170 = vpop.f32.mrb[0].mxu0
        %v2171 = vpop.f32.mrb[0].mxu0
        %v2172 = vadd.f32 %v2083, %v2171
        %v2173 = vpop.f32.mrb[0].mxu0
        %2174 = vmatprep.mubr.bf16.mxu0 0
        %2175 = vmatmul.mubr.bf16.gmra.mrb[0].mxu0 %v2126
        %v2176 = vpop.f32.mrb[0].mxu0
        %v2177 = vadd.f32 %v2088, %v2176
        %v2178 = vpop.f32.mrb[0].mxu0
        %v2179 = vpop.f32.mrb[0].mxu0
        %v2180 = vadd.f32 %v2091, %v2179
        %v2181 = vpop.f32.mrb[0].mxu0
        %2182 = vmatprep.mubr.bf16.mxu0 0
        %2183 = vmatmul.mubr.bf16.gmra.mrb[0].mxu0 %v2129
        %v2184 = vpop.f32.mrb[0].mxu0
        %v2185 = vadd.f32 %v2096, %v2184
        %v2186 = vpop.f32.mrb[0].mxu0
        %v2187 = vpop.f32.mrb[0].mxu0
        %v2188 = vadd.f32 %v2099, %v2187
        %v2189 = vpop.f32.mrb[0].mxu0
        %2190 = vmatprep.mubr.bf16.mxu0 0
        %2191 = vmatmul.mubr.bf16.gmra.mrb[0].mxu0 %v2132
        %v2192 = vpop.f32.mrb[0].mxu0
        %v2193 = vadd.f32 %v2104, %v2192
        %v2194 = vpop.f32.mrb[0].mxu0
        %v2195 = vpop.f32.mrb[0].mxu0
        %v2196 = vadd.f32 %v2107, %v2195
        %v2197 = vpop.f32.mrb[0].mxu0
        %2198 = vdwg.mxu0
        %s2199 = scalar_lea.vmem %s15, 32
        %v2200 = vld [vmem:[%s2199] sm:$0xf]
        %v2201 = vld [vmem:[%s2199 + $0x4] sm:$0xf]
        %v2202 = vld [vmem:[%s2199 + $0x8] sm:$0xf]
        %v2203 = vld [vmem:[%s2199 + $0xc] sm:$0xf]
        %s2204 = scalar_lea.vmem %s17, 2
        %v2205 = vld [vmem:[%s2204] sm:$0x1]
        %v2207 = vlaneseq
        %v2208 = vshrl.u32 %v2207, 7
        %v2209 = vsub.s32 0, %v2208
        %v2210 = vrot.slane %v2205, %v2209
        %v2216 = vunpack.c.l.b16 %v2200
        %v2217 = vunpack.c.l.b16 %v2201
        %v2218 = vunpack.c.l.b16 %v2202
        %v2219 = vunpack.c.l.b16 %v2203
        %v2220 = vpack.c.b16 %v2217, %v2216
        %v2221 = vpack.c.b16 %v2219, %v2218
        %2224 = vmatprep.subr.bf16.mxu0 0
        %2225 = vmatpush1.bf16.msra.mxu0 %v2220
        %2226 = vmatprep.subr.bf16.mxu0 0
        %2227 = vmatpush1.bf16.msra.mxu0 %v2221
        %2228 = vmatprep.subr.bf16.mxu0 0
        %2229 = vmatpush1.bf16.msra.mxu0 0
        %2230 = vmatprep.subr.bf16.mxu0 0
        %2231 = vmatpush1.bf16.msra.mxu0 0
        %2232 = vmatprep.subr.bf16.mxu0 0
        %2233 = vmatpush1.bf16.msra.mxu0 0
        %2234 = vmatprep.subr.bf16.mxu0 0
        %2235 = vmatpush1.bf16.msra.mxu0 0
        %2236 = vmatprep.subr.bf16.mxu0 0
        %2237 = vmatpush1.bf16.msra.mxu0 0
        %2238 = vmatprep.subr.bf16.mxu0 0
        %2239 = vmatpush1.bf16.msra.mxu0 0
        %2240 = vmatprep.subr.bf16.mxu0 0
        %2241 = vmatpush1.bf16.msra.mxu0 0
        %2242 = vmatprep.subr.bf16.mxu0 0
        %2243 = vmatpush1.bf16.msra.mxu0 0
        %2244 = vmatprep.subr.bf16.mxu0 0
        %2245 = vmatpush1.bf16.msra.mxu0 0
        %2246 = vmatprep.subr.bf16.mxu0 0
        %2247 = vmatpush1.bf16.msra.mxu0 0
        %2248 = vmatprep.subr.bf16.mxu0 0
        %2249 = vmatpush1.bf16.msra.mxu0 0
        %2250 = vmatprep.subr.bf16.mxu0 0
        %2251 = vmatpush1.bf16.msra.mxu0 0
        %2252 = vmatprep.subr.bf16.mxu0 0
        %2253 = vmatpush1.bf16.msra.mxu0 0
        %2254 = vmatprep.subr.bf16.mxu0 0
        %2255 = vmatpush1.bf16.msra.mxu0 0
        %2256 = vmatprep.mubr.bf16.mxu0 0
        %2257 = vmatmul.mubr.bf16.gmra.mrb[0].mxu0 %v1377
        %v2258 = vpop.f32.mrb[0].mxu0
        %v2259 = vadd.f32 %v2210, %v2258
        %v2260 = vpop.f32.mrb[0].mxu0
        %v2261 = vpop.f32.mrb[0].mxu0
        %v2262 = vadd.f32 %v2210, %v2261
        %v2263 = vpop.f32.mrb[0].mxu0
        %2264 = vmatprep.mubr.bf16.mxu0 0
        %2265 = vmatmul.mubr.bf16.gmra.mrb[0].mxu0 %v1380
        %v2266 = vpop.f32.mrb[0].mxu0
        %v2267 = vadd.f32 %v2210, %v2266
        %v2268 = vpop.f32.mrb[0].mxu0
        %v2269 = vpop.f32.mrb[0].mxu0
        %v2270 = vadd.f32 %v2210, %v2269
        %v2271 = vpop.f32.mrb[0].mxu0
        %2272 = vmatprep.mubr.bf16.mxu0 0
        %2273 = vmatmul.mubr.bf16.gmra.mrb[0].mxu0 %v1383
        %v2274 = vpop.f32.mrb[0].mxu0
        %v2275 = vadd.f32 %v2210, %v2274
        %v2276 = vpop.f32.mrb[0].mxu0
        %v2277 = vpop.f32.mrb[0].mxu0
        %v2278 = vadd.f32 %v2210, %v2277
        %v2279 = vpop.f32.mrb[0].mxu0
        %2280 = vmatprep.mubr.bf16.mxu0 0
        %2281 = vmatmul.mubr.bf16.gmra.mrb[0].mxu0 %v1386
        %v2282 = vpop.f32.mrb[0].mxu0
        %v2283 = vadd.f32 %v2210, %v2282
        %v2284 = vpop.f32.mrb[0].mxu0
        %v2285 = vpop.f32.mrb[0].mxu0
        %v2286 = vadd.f32 %v2210, %v2285
        %v2287 = vpop.f32.mrb[0].mxu0
        %2288 = vdwg.mxu0
        %v2289 = vpack.c.bf16 %v2262, %v2259
        %v2290 = vpack.c.bf16 %v2270, %v2267
        %v2291 = vpack.c.bf16 %v2278, %v2275
        %v2292 = vpack.c.bf16 %v2286, %v2283
        %s2293 = scalar_lea.vmem %s23, 128
        %v2294 = vld [vmem:[%s2293] sm:$0xff]
        %v2295 = vld [vmem:[%s2293 + $0x8] sm:$0xff]
        %v2296 = vld [vmem:[%s2293 + $0x10] sm:$0xff]
        %v2297 = vld [vmem:[%s2293 + $0x18] sm:$0xff]
        %v2298 = vld [vmem:[%s2293 + $0x20] sm:$0xff]
        %v2299 = vld [vmem:[%s2293 + $0x28] sm:$0xff]
        %v2300 = vld [vmem:[%s2293 + $0x30] sm:$0xff]
        %v2301 = vld [vmem:[%s2293 + $0x38] sm:$0xff]
        %v2303 = vsel %vm942, %v2289, 0
        %v2306 = vsel %vm942, %v2290, 0
        %v2309 = vsel %vm942, %v2291, 0
        %v2312 = vsel %vm942, %v2292, 0
        %2314 = vmatprep.subr.bf16.mxu0 0
        %2315 = vmatpush1.bf16.msra.mxu0 %v1195
        %2316 = vmatprep.subr.bf16.mxu0 0
        %2317 = vmatpush1.bf16.msra.mxu0 %v1196
        %2318 = vmatprep.subr.bf16.mxu0 0
        %2319 = vmatpush1.bf16.msra.mxu0 0
        %2320 = vmatprep.subr.bf16.mxu0 0
        %2321 = vmatpush1.bf16.msra.mxu0 0
        %2322 = vmatprep.subr.bf16.mxu0 0
        %2323 = vmatpush1.bf16.msra.mxu0 0
        %2324 = vmatprep.subr.bf16.mxu0 0
        %2325 = vmatpush1.bf16.msra.mxu0 0
        %2326 = vmatprep.subr.bf16.mxu0 0
        %2327 = vmatpush1.bf16.msra.mxu0 0
        %2328 = vmatprep.subr.bf16.mxu0 0
        %2329 = vmatpush1.bf16.msra.mxu0 0
        %2330 = vmatprep.subr.bf16.mxu0 0
        %2331 = vmatpush1.bf16.msra.mxu0 0
        %2332 = vmatprep.subr.bf16.mxu0 0
        %2333 = vmatpush1.bf16.msra.mxu0 0
        %2334 = vmatprep.subr.bf16.mxu0 0
        %2335 = vmatpush1.bf16.msra.mxu0 0
        %2336 = vmatprep.subr.bf16.mxu0 0
        %2337 = vmatpush1.bf16.msra.mxu0 0
        %2338 = vmatprep.subr.bf16.mxu0 0
        %2339 = vmatpush1.bf16.msra.mxu0 0
        %2340 = vmatprep.subr.bf16.mxu0 0
        %2341 = vmatpush1.bf16.msra.mxu0 0
        %2342 = vmatprep.subr.bf16.mxu0 0
        %2343 = vmatpush1.bf16.msra.mxu0 0
        %2344 = vmatprep.subr.bf16.mxu0 0
        %2345 = vmatpush1.bf16.msra.mxu0 0
        %2346 = vmatprep.mubr.bf16.mxu0 0
        %2347 = vmatmul.mubr.bf16.gmra.mrb[0].mxu0 %v2303
        %v2348 = vpop.f32.mrb[0].mxu0
        %v2349 = vadd.f32 %v2294, %v2348
        %v2350 = vpop.f32.mrb[0].mxu0
        %v2351 = vpop.f32.mrb[0].mxu0
        %v2352 = vadd.f32 %v2295, %v2351
        %v2353 = vpop.f32.mrb[0].mxu0
        %2354 = vmatprep.mubr.bf16.mxu0 0
        %2355 = vmatmul.mubr.bf16.gmra.mrb[0].mxu0 %v2306
        %v2356 = vpop.f32.mrb[0].mxu0
        %v2357 = vadd.f32 %v2296, %v2356
        %v2358 = vpop.f32.mrb[0].mxu0
        %v2359 = vpop.f32.mrb[0].mxu0
        %v2360 = vadd.f32 %v2297, %v2359
        %v2361 = vpop.f32.mrb[0].mxu0
        %2362 = vmatprep.mubr.bf16.mxu0 0
        %2363 = vmatmul.mubr.bf16.gmra.mrb[0].mxu0 %v2309
        %v2364 = vpop.f32.mrb[0].mxu0
        %v2365 = vadd.f32 %v2298, %v2364
        %v2366 = vpop.f32.mrb[0].mxu0
        %v2367 = vpop.f32.mrb[0].mxu0
        %v2368 = vadd.f32 %v2299, %v2367
        %v2369 = vpop.f32.mrb[0].mxu0
        %2370 = vmatprep.mubr.bf16.mxu0 0
        %2371 = vmatmul.mubr.bf16.gmra.mrb[0].mxu0 %v2312
        %v2372 = vpop.f32.mrb[0].mxu0
        %v2373 = vadd.f32 %v2300, %v2372
        %v2374 = vpop.f32.mrb[0].mxu0
        %v2375 = vpop.f32.mrb[0].mxu0
        %v2376 = vadd.f32 %v2301, %v2375
        %v2377 = vpop.f32.mrb[0].mxu0
        %2378 = vdwg.mxu0
        %2379 = vmax.xlane.f32.xlu0 %v2349
        %v2380 = vpop.xlane.xlu0 %2379
        %2381 = vmax.xlane.f32.xlu0 %v2352
        %v2382 = vpop.xlane.xlu0 %2381
        %2383 = vmax.xlane.f32.xlu0 %v2357
        %v2384 = vpop.xlane.xlu0 %2383
        %2385 = vmax.xlane.f32.xlu0 %v2360
        %v2386 = vpop.xlane.xlu0 %2385
        %2387 = vmax.xlane.f32.xlu0 %v2365
        %v2388 = vpop.xlane.xlu0 %2387
        %2389 = vmax.xlane.f32.xlu0 %v2368
        %v2390 = vpop.xlane.xlu0 %2389
        %2391 = vmax.xlane.f32.xlu0 %v2373
        %v2392 = vpop.xlane.xlu0 %2391
        %2393 = vmax.xlane.f32.xlu0 %v2376
        %v2394 = vpop.xlane.xlu0 %2393
        %v2395 = vsub.f32 %v2349, %v2380
        %v2396 = vsub.f32 %v2352, %v2382
        %v2397 = vsub.f32 %v2357, %v2384
        %v2398 = vsub.f32 %v2360, %v2386
        %v2399 = vsub.f32 %v2365, %v2388
        %v2400 = vsub.f32 %v2368, %v2390
        %v2401 = vsub.f32 %v2373, %v2392
        %v2402 = vsub.f32 %v2376, %v2394
        %v2403 = vmul.f32 %v2395, 1.442695
        %v2404 = vpow.pop %v2403
        %v2405 = vmul.f32 %v2396, 1.442695
        %v2406 = vpow.pop %v2405
        %v2407 = vmul.f32 %v2397, 1.442695
        %v2408 = vpow.pop %v2407
        %v2409 = vmul.f32 %v2398, 1.442695
        %v2410 = vpow.pop %v2409
        %v2411 = vmul.f32 %v2399, 1.442695
        %v2412 = vpow.pop %v2411
        %v2413 = vmul.f32 %v2400, 1.442695
        %v2414 = vpow.pop %v2413
        %v2415 = vmul.f32 %v2401, 1.442695
        %v2416 = vpow.pop %v2415
        %v2417 = vmul.f32 %v2402, 1.442695
        %v2418 = vpow.pop %v2417
        %2419 = vadd.xlane.f32.xlu0 %v2404
        %v2420 = vpop.xlane.xlu0 %2419
        %2421 = vadd.xlane.f32.xlu0 %v2406
        %v2422 = vpop.xlane.xlu0 %2421
        %2423 = vadd.xlane.f32.xlu0 %v2408
        %v2424 = vpop.xlane.xlu0 %2423
        %2425 = vadd.xlane.f32.xlu0 %v2410
        %v2426 = vpop.xlane.xlu0 %2425
        %2427 = vadd.xlane.f32.xlu0 %v2412
        %v2428 = vpop.xlane.xlu0 %2427
        %2429 = vadd.xlane.f32.xlu0 %v2414
        %v2430 = vpop.xlane.xlu0 %2429
        %2431 = vadd.xlane.f32.xlu0 %v2416
        %v2432 = vpop.xlane.xlu0 %2431
        %2433 = vadd.xlane.f32.xlu0 %v2418
        %v2434 = vpop.xlane.xlu0 %2433
        %v2435 = vrcp.pop %v2420
        %v2436 = vrcp.pop %v2422
        %v2437 = vrcp.pop %v2424
        %v2438 = vrcp.pop %v2426
        %v2439 = vrcp.pop %v2428
        %v2440 = vrcp.pop %v2430
        %v2441 = vrcp.pop %v2432
        %v2442 = vrcp.pop %v2434
        %v2443 = vpack.c.bf16 %v2406, %v2404
        %v2444 = vpack.c.bf16 %v2410, %v2408
        %v2445 = vpack.c.bf16 %v2414, %v2412
        %v2446 = vpack.c.bf16 %v2418, %v2416
        %2447 = vmatprep.subr.bf16.mxu0 0
        %2448 = vmatpush1.bf16.msra.mxu0 %v1341
        %2449 = vmatprep.subr.bf16.mxu0 0
        %2450 = vmatpush1.bf16.msra.mxu0 %v1342
        %2451 = vmatprep.subr.bf16.mxu0 0
        %2452 = vmatpush1.bf16.msra.mxu0 %v1343
        %2453 = vmatprep.subr.bf16.mxu0 0
        %2454 = vmatpush1.bf16.msra.mxu0 %v1344
        %2455 = vmatprep.subr.bf16.mxu0 0
        %2456 = vmatpush1.bf16.msra.mxu0 %v1345
        %2457 = vmatprep.subr.bf16.mxu0 0
        %2458 = vmatpush1.bf16.msra.mxu0 %v1346
        %2459 = vmatprep.subr.bf16.mxu0 0
        %2460 = vmatpush1.bf16.msra.mxu0 %v1347
        %2461 = vmatprep.subr.bf16.mxu0 0
        %2462 = vmatpush1.bf16.msra.mxu0 %v1348
        %2463 = vmatprep.subr.bf16.mxu0 0
        %2464 = vmatpush1.bf16.msra.mxu0 0
        %2465 = vmatprep.subr.bf16.mxu0 0
        %2466 = vmatpush1.bf16.msra.mxu0 0
        %2467 = vmatprep.subr.bf16.mxu0 0
        %2468 = vmatpush1.bf16.msra.mxu0 0
        %2469 = vmatprep.subr.bf16.mxu0 0
        %2470 = vmatpush1.bf16.msra.mxu0 0
        %2471 = vmatprep.subr.bf16.mxu0 0
        %2472 = vmatpush1.bf16.msra.mxu0 0
        %2473 = vmatprep.subr.bf16.mxu0 0
        %2474 = vmatpush1.bf16.msra.mxu0 0
        %2475 = vmatprep.subr.bf16.mxu0 0
        %2476 = vmatpush1.bf16.msra.mxu0 0
        %2477 = vmatprep.subr.bf16.mxu0 0
        %2478 = vmatpush1.bf16.msra.mxu0 0
        %2479 = vmatprep.mubr.bf16.mxu0 0
        %2480 = vmatmul.mubr.bf16.gmra.mrb[0].mxu0 %v2443
        %v2481 = vpop.f32.mrb[0].mxu0
        %v2482 = vadd.f32 0.0, %v2481
        %v2483 = vpop.f32.mrb[0].mxu0
        %v2484 = vpop.f32.mrb[0].mxu0
        %v2485 = vadd.f32 0.0, %v2484
        %v2486 = vpop.f32.mrb[0].mxu0
        %2487 = vmatprep.mubr.bf16.mxu0 0
        %2488 = vmatmul.mubr.bf16.gmra.mrb[0].mxu0 %v2444
        %v2489 = vpop.f32.mrb[0].mxu0
        %v2490 = vadd.f32 0.0, %v2489
        %v2491 = vpop.f32.mrb[0].mxu0
        %v2492 = vpop.f32.mrb[0].mxu0
        %v2493 = vadd.f32 0.0, %v2492
        %v2494 = vpop.f32.mrb[0].mxu0
        %2495 = vmatprep.mubr.bf16.mxu0 0
        %2496 = vmatmul.mubr.bf16.gmra.mrb[0].mxu0 %v2445
        %v2497 = vpop.f32.mrb[0].mxu0
        %v2498 = vadd.f32 0.0, %v2497
        %v2499 = vpop.f32.mrb[0].mxu0
        %v2500 = vpop.f32.mrb[0].mxu0
        %v2501 = vadd.f32 0.0, %v2500
        %v2502 = vpop.f32.mrb[0].mxu0
        %2503 = vmatprep.mubr.bf16.mxu0 0
        %2504 = vmatmul.mubr.bf16.gmra.mrb[0].mxu0 %v2446
        %v2505 = vpop.f32.mrb[0].mxu0
        %v2506 = vadd.f32 0.0, %v2505
        %v2507 = vpop.f32.mrb[0].mxu0
        %v2508 = vpop.f32.mrb[0].mxu0
        %v2509 = vadd.f32 0.0, %v2508
        %v2510 = vpop.f32.mrb[0].mxu0
        %2511 = vdwg.mxu0
        %v2512 = vmul.f32 %v2482, %v2435
        %v2513 = vmul.f32 %v2485, %v2436
        %v2514 = vmul.f32 %v2490, %v2437
        %v2515 = vmul.f32 %v2493, %v2438
        %v2516 = vmul.f32 %v2498, %v2439
        %v2517 = vmul.f32 %v2501, %v2440
        %v2518 = vmul.f32 %v2506, %v2441
        %v2519 = vmul.f32 %v2509, %v2442
        %v2520 = vpack.c.bf16 %v2513, %v2512
        %v2521 = vpack.c.bf16 %v2515, %v2514
        %v2522 = vpack.c.bf16 %v2517, %v2516
        %v2523 = vpack.c.bf16 %v2519, %v2518
        %s2524 = scalar_lea.vmem %s25, 32
        %v2525 = vld [vmem:[%s2524] sm:$0xf]
        %v2526 = vld [vmem:[%s2524 + $0x4] sm:$0xf]
        %v2527 = vld [vmem:[%s2524 + $0x8] sm:$0xf]
        %v2528 = vld [vmem:[%s2524 + $0xc] sm:$0xf]
        %v2533 = vunpack.c.l.b16 %v2525
        %v2534 = vunpack.c.l.b16 %v2526
        %v2535 = vunpack.c.l.b16 %v2527
        %v2536 = vunpack.c.l.b16 %v2528
        %v2537 = vpack.c.b16 %v2534, %v2533
        %v2538 = vpack.c.b16 %v2536, %v2535
        %v2542 = vsel %vm942, %v2520, 0
        %v2545 = vsel %vm942, %v2521, 0
        %v2548 = vsel %vm942, %v2522, 0
        %v2551 = vsel %vm942, %v2523, 0
        %2553 = vmatprep.subr.bf16.mxu0 0
        %2554 = vmatpush1.bf16.msra.mxu0 %v2537
        %2555 = vmatprep.subr.bf16.mxu0 0
        %2556 = vmatpush1.bf16.msra.mxu0 %v2538
        %2557 = vmatprep.subr.bf16.mxu0 0
        %2558 = vmatpush1.bf16.msra.mxu0 0
        %2559 = vmatprep.subr.bf16.mxu0 0
        %2560 = vmatpush1.bf16.msra.mxu0 0
        %2561 = vmatprep.subr.bf16.mxu0 0
        %2562 = vmatpush1.bf16.msra.mxu0 0
        %2563 = vmatprep.subr.bf16.mxu0 0
        %2564 = vmatpush1.bf16.msra.mxu0 0
        %2565 = vmatprep.subr.bf16.mxu0 0
        %2566 = vmatpush1.bf16.msra.mxu0 0
        %2567 = vmatprep.subr.bf16.mxu0 0
        %2568 = vmatpush1.bf16.msra.mxu0 0
        %2569 = vmatprep.subr.bf16.mxu0 0
        %2570 = vmatpush1.bf16.msra.mxu0 0
        %2571 = vmatprep.subr.bf16.mxu0 0
        %2572 = vmatpush1.bf16.msra.mxu0 0
        %2573 = vmatprep.subr.bf16.mxu0 0
        %2574 = vmatpush1.bf16.msra.mxu0 0
        %2575 = vmatprep.subr.bf16.mxu0 0
        %2576 = vmatpush1.bf16.msra.mxu0 0
        %2577 = vmatprep.subr.bf16.mxu0 0
        %2578 = vmatpush1.bf16.msra.mxu0 0
        %2579 = vmatprep.subr.bf16.mxu0 0
        %2580 = vmatpush1.bf16.msra.mxu0 0
        %2581 = vmatprep.subr.bf16.mxu0 0
        %2582 = vmatpush1.bf16.msra.mxu0 0
        %2583 = vmatprep.subr.bf16.mxu0 0
        %2584 = vmatpush1.bf16.msra.mxu0 0
        %2585 = vmatprep.mubr.bf16.mxu0 0
        %2586 = vmatmul.mubr.bf16.gmra.mrb[0].mxu0 %v2542
        %v2587 = vpop.f32.mrb[0].mxu0
        %v2588 = vadd.f32 0.0, %v2587
        %v2589 = vpop.f32.mrb[0].mxu0
        %v2590 = vpop.f32.mrb[0].mxu0
        %v2591 = vadd.f32 0.0, %v2590
        %v2592 = vpop.f32.mrb[0].mxu0
        %2593 = vmatprep.mubr.bf16.mxu0 0
        %2594 = vmatmul.mubr.bf16.gmra.mrb[0].mxu0 %v2545
        %v2595 = vpop.f32.mrb[0].mxu0
        %v2596 = vadd.f32 0.0, %v2595
        %v2597 = vpop.f32.mrb[0].mxu0
        %v2598 = vpop.f32.mrb[0].mxu0
        %v2599 = vadd.f32 0.0, %v2598
        %v2600 = vpop.f32.mrb[0].mxu0
        %2601 = vmatprep.mubr.bf16.mxu0 0
        %2602 = vmatmul.mubr.bf16.gmra.mrb[0].mxu0 %v2548
        %v2603 = vpop.f32.mrb[0].mxu0
        %v2604 = vadd.f32 0.0, %v2603
        %v2605 = vpop.f32.mrb[0].mxu0
        %v2606 = vpop.f32.mrb[0].mxu0
        %v2607 = vadd.f32 0.0, %v2606
        %v2608 = vpop.f32.mrb[0].mxu0
        %2609 = vmatprep.mubr.bf16.mxu0 0
        %2610 = vmatmul.mubr.bf16.gmra.mrb[0].mxu0 %v2551
        %v2611 = vpop.f32.mrb[0].mxu0
        %v2612 = vadd.f32 0.0, %v2611
        %v2613 = vpop.f32.mrb[0].mxu0
        %v2614 = vpop.f32.mrb[0].mxu0
        %v2615 = vadd.f32 0.0, %v2614
        %v2616 = vpop.f32.mrb[0].mxu0
        %2617 = vdwg.mxu0
        %v2618 = vadd.f32 %v2169, %v2588
        %v2619 = vadd.f32 %v2172, %v2591
        %v2620 = vadd.f32 %v2177, %v2596
        %v2621 = vadd.f32 %v2180, %v2599
        %v2622 = vadd.f32 %v2185, %v2604
        %v2623 = vadd.f32 %v2188, %v2607
        %v2624 = vadd.f32 %v2193, %v2612
        %v2625 = vadd.f32 %v2196, %v2615
        %s2626 = scalar_lea.vmem %s15, 48
        %v2627 = vld [vmem:[%s2626] sm:$0xf]
        %v2628 = vld [vmem:[%s2626 + $0x4] sm:$0xf]
        %v2629 = vld [vmem:[%s2626 + $0x8] sm:$0xf]
        %v2630 = vld [vmem:[%s2626 + $0xc] sm:$0xf]
        %s2631 = scalar_lea.vmem %s17, 3
        %v2632 = vld [vmem:[%s2631] sm:$0x1]
        %v2634 = vlaneseq
        %v2635 = vshrl.u32 %v2634, 7
        %v2636 = vsub.s32 0, %v2635
        %v2637 = vrot.slane %v2632, %v2636
        %v2643 = vunpack.c.l.b16 %v2627
        %v2644 = vunpack.c.l.b16 %v2628
        %v2645 = vunpack.c.l.b16 %v2629
        %v2646 = vunpack.c.l.b16 %v2630
        %v2647 = vpack.c.b16 %v2644, %v2643
        %v2648 = vpack.c.b16 %v2646, %v2645
        %2651 = vmatprep.subr.bf16.mxu0 0
        %2652 = vmatpush1.bf16.msra.mxu0 %v2647
        %2653 = vmatprep.subr.bf16.mxu0 0
        %2654 = vmatpush1.bf16.msra.mxu0 %v2648
        %2655 = vmatprep.subr.bf16.mxu0 0
        %2656 = vmatpush1.bf16.msra.mxu0 0
        %2657 = vmatprep.subr.bf16.mxu0 0
        %2658 = vmatpush1.bf16.msra.mxu0 0
        %2659 = vmatprep.subr.bf16.mxu0 0
        %2660 = vmatpush1.bf16.msra.mxu0 0
        %2661 = vmatprep.subr.bf16.mxu0 0
        %2662 = vmatpush1.bf16.msra.mxu0 0
        %2663 = vmatprep.subr.bf16.mxu0 0
        %2664 = vmatpush1.bf16.msra.mxu0 0
        %2665 = vmatprep.subr.bf16.mxu0 0
        %2666 = vmatpush1.bf16.msra.mxu0 0
        %2667 = vmatprep.subr.bf16.mxu0 0
        %2668 = vmatpush1.bf16.msra.mxu0 0
        %2669 = vmatprep.subr.bf16.mxu0 0
        %2670 = vmatpush1.bf16.msra.mxu0 0
        %2671 = vmatprep.subr.bf16.mxu0 0
        %2672 = vmatpush1.bf16.msra.mxu0 0
        %2673 = vmatprep.subr.bf16.mxu0 0
        %2674 = vmatpush1.bf16.msra.mxu0 0
        %2675 = vmatprep.subr.bf16.mxu0 0
        %2676 = vmatpush1.bf16.msra.mxu0 0
        %2677 = vmatprep.subr.bf16.mxu0 0
        %2678 = vmatpush1.bf16.msra.mxu0 0
        %2679 = vmatprep.subr.bf16.mxu0 0
        %2680 = vmatpush1.bf16.msra.mxu0 0
        %2681 = vmatprep.subr.bf16.mxu0 0
        %2682 = vmatpush1.bf16.msra.mxu0 0
        %2683 = vmatprep.mubr.bf16.mxu0 0
        %2684 = vmatmul.mubr.bf16.gmra.mrb[0].mxu0 %v1377
        %v2685 = vpop.f32.mrb[0].mxu0
        %v2686 = vadd.f32 %v2637, %v2685
        %v2687 = vpop.f32.mrb[0].mxu0
        %v2688 = vpop.f32.mrb[0].mxu0
        %v2689 = vadd.f32 %v2637, %v2688
        %v2690 = vpop.f32.mrb[0].mxu0
        %2691 = vmatprep.mubr.bf16.mxu0 0
        %2692 = vmatmul.mubr.bf16.gmra.mrb[0].mxu0 %v1380
        %v2693 = vpop.f32.mrb[0].mxu0
        %v2694 = vadd.f32 %v2637, %v2693
        %v2695 = vpop.f32.mrb[0].mxu0
        %v2696 = vpop.f32.mrb[0].mxu0
        %v2697 = vadd.f32 %v2637, %v2696
        %v2698 = vpop.f32.mrb[0].mxu0
        %2699 = vmatprep.mubr.bf16.mxu0 0
        %2700 = vmatmul.mubr.bf16.gmra.mrb[0].mxu0 %v1383
        %v2701 = vpop.f32.mrb[0].mxu0
        %v2702 = vadd.f32 %v2637, %v2701
        %v2703 = vpop.f32.mrb[0].mxu0
        %v2704 = vpop.f32.mrb[0].mxu0
        %v2705 = vadd.f32 %v2637, %v2704
        %v2706 = vpop.f32.mrb[0].mxu0
        %2707 = vmatprep.mubr.bf16.mxu0 0
        %2708 = vmatmul.mubr.bf16.gmra.mrb[0].mxu0 %v1386
        %v2709 = vpop.f32.mrb[0].mxu0
        %v2710 = vadd.f32 %v2637, %v2709
        %v2711 = vpop.f32.mrb[0].mxu0
        %v2712 = vpop.f32.mrb[0].mxu0
        %v2713 = vadd.f32 %v2637, %v2712
        %v2714 = vpop.f32.mrb[0].mxu0
        %2715 = vdwg.mxu0
        %v2716 = vpack.c.bf16 %v2689, %v2686
        %v2717 = vpack.c.bf16 %v2697, %v2694
        %v2718 = vpack.c.bf16 %v2705, %v2702
        %v2719 = vpack.c.bf16 %v2713, %v2710
        %s2720 = scalar_lea.vmem %s23, 192
        %v2721 = vld [vmem:[%s2720] sm:$0xff]
        %v2722 = vld [vmem:[%s2720 + $0x8] sm:$0xff]
        %v2723 = vld [vmem:[%s2720 + $0x10] sm:$0xff]
        %v2724 = vld [vmem:[%s2720 + $0x18] sm:$0xff]
        %v2725 = vld [vmem:[%s2720 + $0x20] sm:$0xff]
        %v2726 = vld [vmem:[%s2720 + $0x28] sm:$0xff]
        %v2727 = vld [vmem:[%s2720 + $0x30] sm:$0xff]
        %v2728 = vld [vmem:[%s2720 + $0x38] sm:$0xff]
        %v2730 = vsel %vm942, %v2716, 0
        %v2733 = vsel %vm942, %v2717, 0
        %v2736 = vsel %vm942, %v2718, 0
        %v2739 = vsel %vm942, %v2719, 0
        %2741 = vmatprep.subr.bf16.mxu0 0
        %2742 = vmatpush1.bf16.msra.mxu0 %v1195
        %2743 = vmatprep.subr.bf16.mxu0 0
        %2744 = vmatpush1.bf16.msra.mxu0 %v1196
        %2745 = vmatprep.subr.bf16.mxu0 0
        %2746 = vmatpush1.bf16.msra.mxu0 0
        %2747 = vmatprep.subr.bf16.mxu0 0
        %2748 = vmatpush1.bf16.msra.mxu0 0
        %2749 = vmatprep.subr.bf16.mxu0 0
        %2750 = vmatpush1.bf16.msra.mxu0 0
        %2751 = vmatprep.subr.bf16.mxu0 0
        %2752 = vmatpush1.bf16.msra.mxu0 0
        %2753 = vmatprep.subr.bf16.mxu0 0
        %2754 = vmatpush1.bf16.msra.mxu0 0
        %2755 = vmatprep.subr.bf16.mxu0 0
        %2756 = vmatpush1.bf16.msra.mxu0 0
        %2757 = vmatprep.subr.bf16.mxu0 0
        %2758 = vmatpush1.bf16.msra.mxu0 0
        %2759 = vmatprep.subr.bf16.mxu0 0
        %2760 = vmatpush1.bf16.msra.mxu0 0
        %2761 = vmatprep.subr.bf16.mxu0 0
        %2762 = vmatpush1.bf16.msra.mxu0 0
        %2763 = vmatprep.subr.bf16.mxu0 0
        %2764 = vmatpush1.bf16.msra.mxu0 0
        %2765 = vmatprep.subr.bf16.mxu0 0
        %2766 = vmatpush1.bf16.msra.mxu0 0
        %2767 = vmatprep.subr.bf16.mxu0 0
        %2768 = vmatpush1.bf16.msra.mxu0 0
        %2769 = vmatprep.subr.bf16.mxu0 0
        %2770 = vmatpush1.bf16.msra.mxu0 0
        %2771 = vmatprep.subr.bf16.mxu0 0
        %2772 = vmatpush1.bf16.msra.mxu0 0
        %2773 = vmatprep.mubr.bf16.mxu0 0
        %2774 = vmatmul.mubr.bf16.gmra.mrb[0].mxu0 %v2730
        %v2775 = vpop.f32.mrb[0].mxu0
        %v2776 = vadd.f32 %v2721, %v2775
        %v2777 = vpop.f32.mrb[0].mxu0
        %v2778 = vpop.f32.mrb[0].mxu0
        %v2779 = vadd.f32 %v2722, %v2778
        %v2780 = vpop.f32.mrb[0].mxu0
        %2781 = vmatprep.mubr.bf16.mxu0 0
        %2782 = vmatmul.mubr.bf16.gmra.mrb[0].mxu0 %v2733
        %v2783 = vpop.f32.mrb[0].mxu0
        %v2784 = vadd.f32 %v2723, %v2783
        %v2785 = vpop.f32.mrb[0].mxu0
        %v2786 = vpop.f32.mrb[0].mxu0
        %v2787 = vadd.f32 %v2724, %v2786
        %v2788 = vpop.f32.mrb[0].mxu0
        %2789 = vmatprep.mubr.bf16.mxu0 0
        %2790 = vmatmul.mubr.bf16.gmra.mrb[0].mxu0 %v2736
        %v2791 = vpop.f32.mrb[0].mxu0
        %v2792 = vadd.f32 %v2725, %v2791
        %v2793 = vpop.f32.mrb[0].mxu0
        %v2794 = vpop.f32.mrb[0].mxu0
        %v2795 = vadd.f32 %v2726, %v2794
        %v2796 = vpop.f32.mrb[0].mxu0
        %2797 = vmatprep.mubr.bf16.mxu0 0
        %2798 = vmatmul.mubr.bf16.gmra.mrb[0].mxu0 %v2739
        %v2799 = vpop.f32.mrb[0].mxu0
        %v2800 = vadd.f32 %v2727, %v2799
        %v2801 = vpop.f32.mrb[0].mxu0
        %v2802 = vpop.f32.mrb[0].mxu0
        %v2803 = vadd.f32 %v2728, %v2802
        %v2804 = vpop.f32.mrb[0].mxu0
        %2805 = vdwg.mxu0
        %2806 = vmax.xlane.f32.xlu0 %v2776
        %v2807 = vpop.xlane.xlu0 %2806
        %2808 = vmax.xlane.f32.xlu0 %v2779
        %v2809 = vpop.xlane.xlu0 %2808
        %2810 = vmax.xlane.f32.xlu0 %v2784
        %v2811 = vpop.xlane.xlu0 %2810
        %2812 = vmax.xlane.f32.xlu0 %v2787
        %v2813 = vpop.xlane.xlu0 %2812
        %2814 = vmax.xlane.f32.xlu0 %v2792
        %v2815 = vpop.xlane.xlu0 %2814
        %2816 = vmax.xlane.f32.xlu0 %v2795
        %v2817 = vpop.xlane.xlu0 %2816
        %2818 = vmax.xlane.f32.xlu0 %v2800
        %v2819 = vpop.xlane.xlu0 %2818
        %2820 = vmax.xlane.f32.xlu0 %v2803
        %v2821 = vpop.xlane.xlu0 %2820
        %v2822 = vsub.f32 %v2776, %v2807
        %v2823 = vsub.f32 %v2779, %v2809
        %v2824 = vsub.f32 %v2784, %v2811
        %v2825 = vsub.f32 %v2787, %v2813
        %v2826 = vsub.f32 %v2792, %v2815
        %v2827 = vsub.f32 %v2795, %v2817
        %v2828 = vsub.f32 %v2800, %v2819
        %v2829 = vsub.f32 %v2803, %v2821
        %v2830 = vmul.f32 %v2822, 1.442695
        %v2831 = vpow.pop %v2830
        %v2832 = vmul.f32 %v2823, 1.442695
        %v2833 = vpow.pop %v2832
        %v2834 = vmul.f32 %v2824, 1.442695
        %v2835 = vpow.pop %v2834
        %v2836 = vmul.f32 %v2825, 1.442695
        %v2837 = vpow.pop %v2836
        %v2838 = vmul.f32 %v2826, 1.442695
        %v2839 = vpow.pop %v2838
        %v2840 = vmul.f32 %v2827, 1.442695
        %v2841 = vpow.pop %v2840
        %v2842 = vmul.f32 %v2828, 1.442695
        %v2843 = vpow.pop %v2842
        %v2844 = vmul.f32 %v2829, 1.442695
        %v2845 = vpow.pop %v2844
        %2846 = vadd.xlane.f32.xlu0 %v2831
        %v2847 = vpop.xlane.xlu0 %2846
        %2848 = vadd.xlane.f32.xlu0 %v2833
        %v2849 = vpop.xlane.xlu0 %2848
        %2850 = vadd.xlane.f32.xlu0 %v2835
        %v2851 = vpop.xlane.xlu0 %2850
        %2852 = vadd.xlane.f32.xlu0 %v2837
        %v2853 = vpop.xlane.xlu0 %2852
        %2854 = vadd.xlane.f32.xlu0 %v2839
        %v2855 = vpop.xlane.xlu0 %2854
        %2856 = vadd.xlane.f32.xlu0 %v2841
        %v2857 = vpop.xlane.xlu0 %2856
        %2858 = vadd.xlane.f32.xlu0 %v2843
        %v2859 = vpop.xlane.xlu0 %2858
        %2860 = vadd.xlane.f32.xlu0 %v2845
        %v2861 = vpop.xlane.xlu0 %2860
        %v2862 = vrcp.pop %v2847
        %v2863 = vrcp.pop %v2849
        %v2864 = vrcp.pop %v2851
        %v2865 = vrcp.pop %v2853
        %v2866 = vrcp.pop %v2855
        %v2867 = vrcp.pop %v2857
        %v2868 = vrcp.pop %v2859
        %v2869 = vrcp.pop %v2861
        %v2870 = vpack.c.bf16 %v2833, %v2831
        %v2871 = vpack.c.bf16 %v2837, %v2835
        %v2872 = vpack.c.bf16 %v2841, %v2839
        %v2873 = vpack.c.bf16 %v2845, %v2843
        %2874 = vmatprep.subr.bf16.mxu0 0
        %2875 = vmatpush1.bf16.msra.mxu0 %v1341
        %2876 = vmatprep.subr.bf16.mxu0 0
        %2877 = vmatpush1.bf16.msra.mxu0 %v1342
        %2878 = vmatprep.subr.bf16.mxu0 0
        %2879 = vmatpush1.bf16.msra.mxu0 %v1343
        %2880 = vmatprep.subr.bf16.mxu0 0
        %2881 = vmatpush1.bf16.msra.mxu0 %v1344
        %2882 = vmatprep.subr.bf16.mxu0 0
        %2883 = vmatpush1.bf16.msra.mxu0 %v1345
        %2884 = vmatprep.subr.bf16.mxu0 0
        %2885 = vmatpush1.bf16.msra.mxu0 %v1346
        %2886 = vmatprep.subr.bf16.mxu0 0
        %2887 = vmatpush1.bf16.msra.mxu0 %v1347
        %2888 = vmatprep.subr.bf16.mxu0 0
        %2889 = vmatpush1.bf16.msra.mxu0 %v1348
        %2890 = vmatprep.subr.bf16.mxu0 0
        %2891 = vmatpush1.bf16.msra.mxu0 0
        %2892 = vmatprep.subr.bf16.mxu0 0
        %2893 = vmatpush1.bf16.msra.mxu0 0
        %2894 = vmatprep.subr.bf16.mxu0 0
        %2895 = vmatpush1.bf16.msra.mxu0 0
        %2896 = vmatprep.subr.bf16.mxu0 0
        %2897 = vmatpush1.bf16.msra.mxu0 0
        %2898 = vmatprep.subr.bf16.mxu0 0
        %2899 = vmatpush1.bf16.msra.mxu0 0
        %2900 = vmatprep.subr.bf16.mxu0 0
        %2901 = vmatpush1.bf16.msra.mxu0 0
        %2902 = vmatprep.subr.bf16.mxu0 0
        %2903 = vmatpush1.bf16.msra.mxu0 0
        %2904 = vmatprep.subr.bf16.mxu0 0
        %2905 = vmatpush1.bf16.msra.mxu0 0
        %2906 = vmatprep.mubr.bf16.mxu0 0
        %2907 = vmatmul.mubr.bf16.gmra.mrb[0].mxu0 %v2870
        %v2908 = vpop.f32.mrb[0].mxu0
        %v2909 = vadd.f32 0.0, %v2908
        %v2910 = vpop.f32.mrb[0].mxu0
        %v2911 = vpop.f32.mrb[0].mxu0
        %v2912 = vadd.f32 0.0, %v2911
        %v2913 = vpop.f32.mrb[0].mxu0
        %2914 = vmatprep.mubr.bf16.mxu0 0
        %2915 = vmatmul.mubr.bf16.gmra.mrb[0].mxu0 %v2871
        %v2916 = vpop.f32.mrb[0].mxu0
        %v2917 = vadd.f32 0.0, %v2916
        %v2918 = vpop.f32.mrb[0].mxu0
        %v2919 = vpop.f32.mrb[0].mxu0
        %v2920 = vadd.f32 0.0, %v2919
        %v2921 = vpop.f32.mrb[0].mxu0
        %2922 = vmatprep.mubr.bf16.mxu0 0
        %2923 = vmatmul.mubr.bf16.gmra.mrb[0].mxu0 %v2872
        %v2924 = vpop.f32.mrb[0].mxu0
        %v2925 = vadd.f32 0.0, %v2924
        %v2926 = vpop.f32.mrb[0].mxu0
        %v2927 = vpop.f32.mrb[0].mxu0
        %v2928 = vadd.f32 0.0, %v2927
        %v2929 = vpop.f32.mrb[0].mxu0
        %2930 = vmatprep.mubr.bf16.mxu0 0
        %2931 = vmatmul.mubr.bf16.gmra.mrb[0].mxu0 %v2873
        %v2932 = vpop.f32.mrb[0].mxu0
        %v2933 = vadd.f32 0.0, %v2932
        %v2934 = vpop.f32.mrb[0].mxu0
        %v2935 = vpop.f32.mrb[0].mxu0
        %v2936 = vadd.f32 0.0, %v2935
        %v2937 = vpop.f32.mrb[0].mxu0
        %2938 = vdwg.mxu0
        %v2939 = vmul.f32 %v2909, %v2862
        %v2940 = vmul.f32 %v2912, %v2863
        %v2941 = vmul.f32 %v2917, %v2864
        %v2942 = vmul.f32 %v2920, %v2865
        %v2943 = vmul.f32 %v2925, %v2866
        %v2944 = vmul.f32 %v2928, %v2867
        %v2945 = vmul.f32 %v2933, %v2868
        %v2946 = vmul.f32 %v2936, %v2869
        %v2947 = vpack.c.bf16 %v2940, %v2939
        %v2948 = vpack.c.bf16 %v2942, %v2941
        %v2949 = vpack.c.bf16 %v2944, %v2943
        %v2950 = vpack.c.bf16 %v2946, %v2945
        %s2951 = scalar_lea.vmem %s25, 48
        %v2952 = vld [vmem:[%s2951] sm:$0xf]
        %v2953 = vld [vmem:[%s2951 + $0x4] sm:$0xf]
        %v2954 = vld [vmem:[%s2951 + $0x8] sm:$0xf]
        %v2955 = vld [vmem:[%s2951 + $0xc] sm:$0xf]
        %v2960 = vunpack.c.l.b16 %v2952
        %v2961 = vunpack.c.l.b16 %v2953
        %v2962 = vunpack.c.l.b16 %v2954
        %v2963 = vunpack.c.l.b16 %v2955
        %v2964 = vpack.c.b16 %v2961, %v2960
        %v2965 = vpack.c.b16 %v2963, %v2962
        %v2969 = vsel %vm942, %v2947, 0
        %v2972 = vsel %vm942, %v2948, 0
        %v2975 = vsel %vm942, %v2949, 0
        %v2978 = vsel %vm942, %v2950, 0
        %2980 = vmatprep.subr.bf16.mxu0 0
        %2981 = vmatpush1.bf16.msra.mxu0 %v2964
        %2982 = vmatprep.subr.bf16.mxu0 0
        %2983 = vmatpush1.bf16.msra.mxu0 %v2965
        %2984 = vmatprep.subr.bf16.mxu0 0
        %2985 = vmatpush1.bf16.msra.mxu0 0
        %2986 = vmatprep.subr.bf16.mxu0 0
        %2987 = vmatpush1.bf16.msra.mxu0 0
        %2988 = vmatprep.subr.bf16.mxu0 0
        %2989 = vmatpush1.bf16.msra.mxu0 0
        %2990 = vmatprep.subr.bf16.mxu0 0
        %2991 = vmatpush1.bf16.msra.mxu0 0
        %2992 = vmatprep.subr.bf16.mxu0 0
        %2993 = vmatpush1.bf16.msra.mxu0 0
        %2994 = vmatprep.subr.bf16.mxu0 0
        %2995 = vmatpush1.bf16.msra.mxu0 0
        %2996 = vmatprep.subr.bf16.mxu0 0
        %2997 = vmatpush1.bf16.msra.mxu0 0
        %2998 = vmatprep.subr.bf16.mxu0 0
        %2999 = vmatpush1.bf16.msra.mxu0 0
        %3000 = vmatprep.subr.bf16.mxu0 0
        %3001 = vmatpush1.bf16.msra.mxu0 0
        %3002 = vmatprep.subr.bf16.mxu0 0
        %3003 = vmatpush1.bf16.msra.mxu0 0
        %3004 = vmatprep.subr.bf16.mxu0 0
        %3005 = vmatpush1.bf16.msra.mxu0 0
        %3006 = vmatprep.subr.bf16.mxu0 0
        %3007 = vmatpush1.bf16.msra.mxu0 0
        %3008 = vmatprep.subr.bf16.mxu0 0
        %3009 = vmatpush1.bf16.msra.mxu0 0
        %3010 = vmatprep.subr.bf16.mxu0 0
        %3011 = vmatpush1.bf16.msra.mxu0 0
        %3012 = vmatprep.mubr.bf16.mxu0 0
        %3013 = vmatmul.mubr.bf16.gmra.mrb[0].mxu0 %v2969
        %v3014 = vpop.f32.mrb[0].mxu0
        %v3015 = vadd.f32 0.0, %v3014
        %v3016 = vpop.f32.mrb[0].mxu0
        %v3017 = vpop.f32.mrb[0].mxu0
        %v3018 = vadd.f32 0.0, %v3017
        %v3019 = vpop.f32.mrb[0].mxu0
        %3020 = vmatprep.mubr.bf16.mxu0 0
        %3021 = vmatmul.mubr.bf16.gmra.mrb[0].mxu0 %v2972
        %v3022 = vpop.f32.mrb[0].mxu0
        %v3023 = vadd.f32 0.0, %v3022
        %v3024 = vpop.f32.mrb[0].mxu0
        %v3025 = vpop.f32.mrb[0].mxu0
        %v3026 = vadd.f32 0.0, %v3025
        %v3027 = vpop.f32.mrb[0].mxu0
        %3028 = vmatprep.mubr.bf16.mxu0 0
        %3029 = vmatmul.mubr.bf16.gmra.mrb[0].mxu0 %v2975
        %v3030 = vpop.f32.mrb[0].mxu0
        %v3031 = vadd.f32 0.0, %v3030
        %v3032 = vpop.f32.mrb[0].mxu0
        %v3033 = vpop.f32.mrb[0].mxu0
        %v3034 = vadd.f32 0.0, %v3033
        %v3035 = vpop.f32.mrb[0].mxu0
        %3036 = vmatprep.mubr.bf16.mxu0 0
        %3037 = vmatmul.mubr.bf16.gmra.mrb[0].mxu0 %v2978
        %v3038 = vpop.f32.mrb[0].mxu0
        %v3039 = vadd.f32 0.0, %v3038
        %v3040 = vpop.f32.mrb[0].mxu0
        %v3041 = vpop.f32.mrb[0].mxu0
        %v3042 = vadd.f32 0.0, %v3041
        %v3043 = vpop.f32.mrb[0].mxu0
        %3044 = vdwg.mxu0
        %v3045 = vadd.f32 %v2618, %v3015
        %v3046 = vadd.f32 %v2619, %v3018
        %v3047 = vadd.f32 %v2620, %v3023
        %v3048 = vadd.f32 %v2621, %v3026
        %v3049 = vadd.f32 %v2622, %v3031
        %v3050 = vadd.f32 %v2623, %v3034
        %v3051 = vadd.f32 %v2624, %v3039
        %v3052 = vadd.f32 %v2625, %v3042
        %v3053 = vld [vmem:[%s921] sm:$0xff]
        %v3054 = vld [vmem:[%s921 + $0x8] sm:$0xff]
        %v3055 = vld [vmem:[%s921 + $0x10] sm:$0xff]
        %v3056 = vld [vmem:[%s921 + $0x18] sm:$0xff]
        %v3057 = vld [vmem:[%s921 + $0x20] sm:$0xff]
        %v3058 = vld [vmem:[%s921 + $0x28] sm:$0xff]
        %v3059 = vld [vmem:[%s921 + $0x30] sm:$0xff]
        %v3060 = vld [vmem:[%s921 + $0x38] sm:$0xff]
        %v3061 = vld [vmem:[%s29] sm:$0x1]
        %v3062 = vld [vmem:[%s27] sm:$0x1]
        %v3064 = vlaneseq
        %v3065 = vshrl.u32 %v3064, 7
        %v3066 = vsub.s32 0, %v3065
        %v3067 = vrot.slane %v3062, %v3066
        %v3069 = vadd.f32 %v3045, %v3067
        %v3070 = vadd.f32 %v3046, %v3067
        %v3071 = vadd.f32 %v3047, %v3067
        %v3072 = vadd.f32 %v3048, %v3067
        %v3073 = vadd.f32 %v3049, %v3067
        %v3074 = vadd.f32 %v3050, %v3067
        %v3075 = vadd.f32 %v3051, %v3067
        %v3076 = vadd.f32 %v3052, %v3067
        %v3078 = vlaneseq
        %v3079 = vshrl.u32 %v3078, 7
        %v3080 = vsub.s32 0, %v3079
        %v3081 = vrot.slane %v3061, %v3080
        %v3083 = vmul.f32 %v3081, %v3069
        %v3084 = vmul.f32 %v3081, %v3070
        %v3085 = vmul.f32 %v3081, %v3071
        %v3086 = vmul.f32 %v3081, %v3072
        %v3087 = vmul.f32 %v3081, %v3073
        %v3088 = vmul.f32 %v3081, %v3074
        %v3089 = vmul.f32 %v3081, %v3075
        %v3090 = vmul.f32 %v3081, %v3076
        %v3091 = vadd.f32 %v3053, %v3083
        %v3092 = vadd.f32 %v3054, %v3084
        %v3093 = vadd.f32 %v3055, %v3085
        %v3094 = vadd.f32 %v3056, %v3086
        %v3095 = vadd.f32 %v3057, %v3087
        %v3096 = vadd.f32 %v3058, %v3088
        %v3097 = vadd.f32 %v3059, %v3089
        %v3098 = vadd.f32 %v3060, %v3090
        %v3099 = vld [vmem:[%s31] sm:$0xff]
        %v3100 = vld [vmem:[%s31 + $0x8] sm:$0xff]
        %v3101 = vld [vmem:[%s31 + $0x10] sm:$0xff]
        %v3102 = vld [vmem:[%s31 + $0x18] sm:$0xff]
        %v3103 = vld [vmem:[%s31 + $0x20] sm:$0xff]
        %v3104 = vld [vmem:[%s31 + $0x28] sm:$0xff]
        %v3105 = vld [vmem:[%s31 + $0x30] sm:$0xff]
        %v3106 = vld [vmem:[%s31 + $0x38] sm:$0xff]
        %v3107 = vmul.f32 %v3099, %v3091
        %v3108 = vmul.f32 %v3100, %v3092
        %v3109 = vmul.f32 %v3101, %v3093
        %v3110 = vmul.f32 %v3102, %v3094
        %v3111 = vmul.f32 %v3103, %v3095
        %v3112 = vmul.f32 %v3104, %v3096
        %v3113 = vmul.f32 %v3105, %v3097
        %v3114 = vmul.f32 %v3106, %v3098
        %v3115 = vsel %vm942, %v3107, 0.0
        %v3116 = vsel %vm942, %v3108, 0.0
        %v3117 = vadd.f32 %v3115, %v3116
        %v3118 = vsel %vm942, %v3109, 0.0
        %v3119 = vadd.f32 %v3117, %v3118
        %v3120 = vsel %vm942, %v3110, 0.0
        %v3121 = vadd.f32 %v3119, %v3120
        %v3122 = vsel %vm942, %v3111, 0.0
        %v3123 = vadd.f32 %v3121, %v3122
        %v3124 = vsel %vm942, %v3112, 0.0
        %v3125 = vadd.f32 %v3123, %v3124
        %v3126 = vsel %vm942, %v3113, 0.0
        %v3127 = vadd.f32 %v3125, %v3126
        %v3128 = vsel %vm942, %v3114, 0.0
        %v3129 = vadd.f32 %v3127, %v3128
        %v3130 = vrot.slane %v3129, 4
        %v3131 = vadd.f32 %v3129, %v3130
        %v3132 = vrot.slane %v3131, 2
        %v3133 = vadd.f32 %v3131, %v3132
        %v3134 = vrot.slane %v3133, 1
        %v3135 = vadd.f32 %v3133, %v3134
        %s3136 = scalar_lea.vmem %s31, 64
        %v3137 = vld [vmem:[%s3136] sm:$0xff]
        %v3138 = vld [vmem:[%s3136 + $0x8] sm:$0xff]
        %v3139 = vld [vmem:[%s3136 + $0x10] sm:$0xff]
        %v3140 = vld [vmem:[%s3136 + $0x18] sm:$0xff]
        %v3141 = vld [vmem:[%s3136 + $0x20] sm:$0xff]
        %v3142 = vld [vmem:[%s3136 + $0x28] sm:$0xff]
        %v3143 = vld [vmem:[%s3136 + $0x30] sm:$0xff]
        %v3144 = vld [vmem:[%s3136 + $0x38] sm:$0xff]
        %v3145 = vmul.f32 %v3137, %v3091
        %v3146 = vmul.f32 %v3138, %v3092
        %v3147 = vmul.f32 %v3139, %v3093
        %v3148 = vmul.f32 %v3140, %v3094
        %v3149 = vmul.f32 %v3141, %v3095
        %v3150 = vmul.f32 %v3142, %v3096
        %v3151 = vmul.f32 %v3143, %v3097
        %v3152 = vmul.f32 %v3144, %v3098
        %v3153 = vsel %vm942, %v3145, 0.0
        %v3154 = vsel %vm942, %v3146, 0.0
        %v3155 = vadd.f32 %v3153, %v3154
        %v3156 = vsel %vm942, %v3147, 0.0
        %v3157 = vadd.f32 %v3155, %v3156
        %v3158 = vsel %vm942, %v3148, 0.0
        %v3159 = vadd.f32 %v3157, %v3158
        %v3160 = vsel %vm942, %v3149, 0.0
        %v3161 = vadd.f32 %v3159, %v3160
        %v3162 = vsel %vm942, %v3150, 0.0
        %v3163 = vadd.f32 %v3161, %v3162
        %v3164 = vsel %vm942, %v3151, 0.0
        %v3165 = vadd.f32 %v3163, %v3164
        %v3166 = vsel %vm942, %v3152, 0.0
        %v3167 = vadd.f32 %v3165, %v3166
        %v3168 = vrot.slane %v3167, 4
        %v3169 = vadd.f32 %v3167, %v3168
        %v3170 = vrot.slane %v3169, 2
        %v3171 = vadd.f32 %v3169, %v3170
        %v3172 = vrot.slane %v3171, 1
        %v3173 = vadd.f32 %v3171, %v3172
        %s3174 = scalar_lea.vmem %s31, 128
        %v3175 = vld [vmem:[%s3174] sm:$0xff]
        %v3176 = vld [vmem:[%s3174 + $0x8] sm:$0xff]
        %v3177 = vld [vmem:[%s3174 + $0x10] sm:$0xff]
        %v3178 = vld [vmem:[%s3174 + $0x18] sm:$0xff]
        %v3179 = vld [vmem:[%s3174 + $0x20] sm:$0xff]
        %v3180 = vld [vmem:[%s3174 + $0x28] sm:$0xff]
        %v3181 = vld [vmem:[%s3174 + $0x30] sm:$0xff]
        %v3182 = vld [vmem:[%s3174 + $0x38] sm:$0xff]
        %v3183 = vmul.f32 %v3175, %v3091
        %v3184 = vmul.f32 %v3176, %v3092
        %v3185 = vmul.f32 %v3177, %v3093
        %v3186 = vmul.f32 %v3178, %v3094
        %v3187 = vmul.f32 %v3179, %v3095
        %v3188 = vmul.f32 %v3180, %v3096
        %v3189 = vmul.f32 %v3181, %v3097
        %v3190 = vmul.f32 %v3182, %v3098
        %v3191 = vsel %vm942, %v3183, 0.0
        %v3192 = vsel %vm942, %v3184, 0.0
        %v3193 = vadd.f32 %v3191, %v3192
        %v3194 = vsel %vm942, %v3185, 0.0
        %v3195 = vadd.f32 %v3193, %v3194
        %v3196 = vsel %vm942, %v3186, 0.0
        %v3197 = vadd.f32 %v3195, %v3196
        %v3198 = vsel %vm942, %v3187, 0.0
        %v3199 = vadd.f32 %v3197, %v3198
        %v3200 = vsel %vm942, %v3188, 0.0
        %v3201 = vadd.f32 %v3199, %v3200
        %v3202 = vsel %vm942, %v3189, 0.0
        %v3203 = vadd.f32 %v3201, %v3202
        %v3204 = vsel %vm942, %v3190, 0.0
        %v3205 = vadd.f32 %v3203, %v3204
        %v3206 = vrot.slane %v3205, 4
        %v3207 = vadd.f32 %v3205, %v3206
        %v3208 = vrot.slane %v3207, 2
        %v3209 = vadd.f32 %v3207, %v3208
        %v3210 = vrot.slane %v3209, 1
        %v3211 = vadd.f32 %v3209, %v3210
        %s3212 = scalar_lea.vmem %s31, 192
        %v3213 = vld [vmem:[%s3212] sm:$0xff]
        %v3214 = vld [vmem:[%s3212 + $0x8] sm:$0xff]
        %v3215 = vld [vmem:[%s3212 + $0x10] sm:$0xff]
        %v3216 = vld [vmem:[%s3212 + $0x18] sm:$0xff]
        %v3217 = vld [vmem:[%s3212 + $0x20] sm:$0xff]
        %v3218 = vld [vmem:[%s3212 + $0x28] sm:$0xff]
        %v3219 = vld [vmem:[%s3212 + $0x30] sm:$0xff]
        %v3220 = vld [vmem:[%s3212 + $0x38] sm:$0xff]
        %v3221 = vmul.f32 %v3213, %v3091
        %v3222 = vmul.f32 %v3214, %v3092
        %v3223 = vmul.f32 %v3215, %v3093
        %v3224 = vmul.f32 %v3216, %v3094
        %v3225 = vmul.f32 %v3217, %v3095
        %v3226 = vmul.f32 %v3218, %v3096
        %v3227 = vmul.f32 %v3219, %v3097
        %v3228 = vmul.f32 %v3220, %v3098
        %v3229 = vsel %vm942, %v3221, 0.0
        %v3230 = vsel %vm942, %v3222, 0.0
        %v3231 = vadd.f32 %v3229, %v3230
        %v3232 = vsel %vm942, %v3223, 0.0
        %v3233 = vadd.f32 %v3231, %v3232
        %v3234 = vsel %vm942, %v3224, 0.0
        %v3235 = vadd.f32 %v3233, %v3234
        %v3236 = vsel %vm942, %v3225, 0.0
        %v3237 = vadd.f32 %v3235, %v3236
        %v3238 = vsel %vm942, %v3226, 0.0
        %v3239 = vadd.f32 %v3237, %v3238
        %v3240 = vsel %vm942, %v3227, 0.0
        %v3241 = vadd.f32 %v3239, %v3240
        %v3242 = vsel %vm942, %v3228, 0.0
        %v3243 = vadd.f32 %v3241, %v3242
        %v3244 = vrot.slane %v3243, 4
        %v3245 = vadd.f32 %v3243, %v3244
        %v3246 = vrot.slane %v3245, 2
        %v3247 = vadd.f32 %v3245, %v3246
        %v3248 = vrot.slane %v3247, 1
        %v3249 = vadd.f32 %v3247, %v3248
        %vm3250 = vcmask 1040384
        %v3251 = vsel %vm3250, %v3135, %v3173
        %vm3252 = vcmask 1041408
        %v3253 = vsel %vm3252, %v3251, %v3211
        %vm3254 = vcmask 1042432
        %v3255 = vsel %vm3254, %v3253, %v3249
        %3256 = vst.msk [vmem:[%s916] sm:$0xf] %vm1086, %v3255
        %3257 = vst.msk [vmem:[#allocation3] sm:$0xff] %vm942, 0.0
        %3258 = vst.msk [vmem:[#allocation3 + $0x8] sm:$0xff] %vm942, 0.0
        %3259 = vst.msk [vmem:[#allocation3 + $0x10] sm:$0xff] %vm942, 0.0
        %3260 = vst.msk [vmem:[#allocation3 + $0x18] sm:$0xff] %vm942, 0.0
        %3261 = vst.msk [vmem:[#allocation3 + $0x20] sm:$0xff] %vm942, 0.0
        %3262 = vst.msk [vmem:[#allocation3 + $0x28] sm:$0xff] %vm942, 0.0
        %3263 = vst.msk [vmem:[#allocation3 + $0x30] sm:$0xff] %vm942, 0.0
        %3264 = vst.msk [vmem:[#allocation3 + $0x38] sm:$0xff] %vm942, 0.0
        %3265 = vst.msk [vmem:[#allocation3 + $0x40] sm:$0xff] %vm942, 0.0
        %3266 = vst.msk [vmem:[#allocation3 + $0x48] sm:$0xff] %vm942, 0.0
        %3267 = vst.msk [vmem:[#allocation3 + $0x50] sm:$0xff] %vm942, 0.0
        %3268 = vst.msk [vmem:[#allocation3 + $0x58] sm:$0xff] %vm942, 0.0
        %3269 = vst.msk [vmem:[#allocation3 + $0x10] sm:$0xff] %vm942, %v3091
        %3270 = vst.msk [vmem:[#allocation3 + $0x18] sm:$0xff] %vm942, %v3092
        %3271 = vst.msk [vmem:[#allocation3 + $0x20] sm:$0xff] %vm942, %v3093
        %3272 = vst.msk [vmem:[#allocation3 + $0x28] sm:$0xff] %vm942, %v3094
        %3273 = vst.msk [vmem:[#allocation3 + $0x30] sm:$0xff] %vm942, %v3095
        %3274 = vst.msk [vmem:[#allocation3 + $0x38] sm:$0xff] %vm942, %v3096
        %3275 = vst.msk [vmem:[#allocation3 + $0x40] sm:$0xff] %vm942, %v3097
        %3276 = vst.msk [vmem:[#allocation3 + $0x48] sm:$0xff] %vm942, %v3098
        %v3277 = vld [vmem:[#allocation3 + $0x7] sm:$0xff]
        %v3278 = vld [vmem:[#allocation3 + $0xf] sm:$0xff]
        %v3279 = vld [vmem:[#allocation3 + $0x17] sm:$0xff]
        %v3280 = vld [vmem:[#allocation3 + $0x1f] sm:$0xff]
        %v3281 = vld [vmem:[#allocation3 + $0x27] sm:$0xff]
        %v3282 = vld [vmem:[#allocation3 + $0x2f] sm:$0xff]
        %v3283 = vld [vmem:[#allocation3 + $0x37] sm:$0xff]
        %v3284 = vld [vmem:[#allocation3 + $0x3f] sm:$0xff]
        %v3285 = vld [vmem:[%s33] sm:$0xff]
        %v3286 = vld [vmem:[%s33 + $0x8] sm:$0xff]
        %v3287 = vld [vmem:[%s33 + $0x10] sm:$0xff]
        %v3288 = vld [vmem:[%s33 + $0x18] sm:$0xff]
        %v3289 = vld [vmem:[%s33 + $0x20] sm:$0xff]
        %v3290 = vld [vmem:[%s33 + $0x28] sm:$0xff]
        %v3291 = vld [vmem:[%s33 + $0x30] sm:$0xff]
        %v3292 = vld [vmem:[%s33 + $0x38] sm:$0xff]
        %v3293 = vmul.f32 %v3277, %v3285
        %v3294 = vmul.f32 %v3278, %v3286
        %v3295 = vmul.f32 %v3279, %v3287
        %v3296 = vmul.f32 %v3280, %v3288
        %v3297 = vmul.f32 %v3281, %v3289
        %v3298 = vmul.f32 %v3282, %v3290
        %v3299 = vmul.f32 %v3283, %v3291
        %v3300 = vmul.f32 %v3284, %v3292
        %v3301 = vadd.f32 %v3293, 0.0
        %v3302 = vadd.f32 %v3294, 0.0
        %v3303 = vadd.f32 %v3295, 0.0
        %v3304 = vadd.f32 %v3296, 0.0
        %v3305 = vadd.f32 %v3297, 0.0
        %v3306 = vadd.f32 %v3298, 0.0
        %v3307 = vadd.f32 %v3299, 0.0
        %v3308 = vadd.f32 %v3300, 0.0
        %v3309 = vld [vmem:[#allocation3 + $0x8] sm:$0xff]
        %v3310 = vld [vmem:[#allocation3 + $0x10] sm:$0xff]
        %v3311 = vld [vmem:[#allocation3 + $0x18] sm:$0xff]
        %v3312 = vld [vmem:[#allocation3 + $0x20] sm:$0xff]
        %v3313 = vld [vmem:[#allocation3 + $0x28] sm:$0xff]
        %v3314 = vld [vmem:[#allocation3 + $0x30] sm:$0xff]
        %v3315 = vld [vmem:[#allocation3 + $0x38] sm:$0xff]
        %v3316 = vld [vmem:[#allocation3 + $0x40] sm:$0xff]
        %s3317 = scalar_lea.vmem %s33, 64
        %v3318 = vld [vmem:[%s3317] sm:$0xff]
        %v3319 = vld [vmem:[%s3317 + $0x8] sm:$0xff]
        %v3320 = vld [vmem:[%s3317 + $0x10] sm:$0xff]
        %v3321 = vld [vmem:[%s3317 + $0x18] sm:$0xff]
        %v3322 = vld [vmem:[%s3317 + $0x20] sm:$0xff]
        %v3323 = vld [vmem:[%s3317 + $0x28] sm:$0xff]
        %v3324 = vld [vmem:[%s3317 + $0x30] sm:$0xff]
        %v3325 = vld [vmem:[%s3317 + $0x38] sm:$0xff]
        %v3326 = vmul.f32 %v3309, %v3318
        %v3327 = vmul.f32 %v3310, %v3319
        %v3328 = vmul.f32 %v3311, %v3320
        %v3329 = vmul.f32 %v3312, %v3321
        %v3330 = vmul.f32 %v3313, %v3322
        %v3331 = vmul.f32 %v3314, %v3323
        %v3332 = vmul.f32 %v3315, %v3324
        %v3333 = vmul.f32 %v3316, %v3325
        %v3334 = vadd.f32 %v3301, %v3326
        %v3335 = vadd.f32 %v3302, %v3327
        %v3336 = vadd.f32 %v3303, %v3328
        %v3337 = vadd.f32 %v3304, %v3329
        %v3338 = vadd.f32 %v3305, %v3330
        %v3339 = vadd.f32 %v3306, %v3331
        %v3340 = vadd.f32 %v3307, %v3332
        %v3341 = vadd.f32 %v3308, %v3333
        %v3342 = vld [vmem:[#allocation3 + $0x9] sm:$0xff]
        %v3343 = vld [vmem:[#allocation3 + $0x11] sm:$0xff]
        %v3344 = vld [vmem:[#allocation3 + $0x19] sm:$0xff]
        %v3345 = vld [vmem:[#allocation3 + $0x21] sm:$0xff]
        %v3346 = vld [vmem:[#allocation3 + $0x29] sm:$0xff]
        %v3347 = vld [vmem:[#allocation3 + $0x31] sm:$0xff]
        %v3348 = vld [vmem:[#allocation3 + $0x39] sm:$0xff]
        %v3349 = vld [vmem:[#allocation3 + $0x41] sm:$0xff]
        %s3350 = scalar_lea.vmem %s33, 128
        %v3351 = vld [vmem:[%s3350] sm:$0xff]
        %v3352 = vld [vmem:[%s3350 + $0x8] sm:$0xff]
        %v3353 = vld [vmem:[%s3350 + $0x10] sm:$0xff]
        %v3354 = vld [vmem:[%s3350 + $0x18] sm:$0xff]
        %v3355 = vld [vmem:[%s3350 + $0x20] sm:$0xff]
        %v3356 = vld [vmem:[%s3350 + $0x28] sm:$0xff]
        %v3357 = vld [vmem:[%s3350 + $0x30] sm:$0xff]
        %v3358 = vld [vmem:[%s3350 + $0x38] sm:$0xff]
        %v3359 = vmul.f32 %v3342, %v3351
        %v3360 = vmul.f32 %v3343, %v3352
        %v3361 = vmul.f32 %v3344, %v3353
        %v3362 = vmul.f32 %v3345, %v3354
        %v3363 = vmul.f32 %v3346, %v3355
        %v3364 = vmul.f32 %v3347, %v3356
        %v3365 = vmul.f32 %v3348, %v3357
        %v3366 = vmul.f32 %v3349, %v3358
        %v3367 = vadd.f32 %v3334, %v3359
        %v3368 = vadd.f32 %v3335, %v3360
        %v3369 = vadd.f32 %v3336, %v3361
        %v3370 = vadd.f32 %v3337, %v3362
        %v3371 = vadd.f32 %v3338, %v3363
        %v3372 = vadd.f32 %v3339, %v3364
        %v3373 = vadd.f32 %v3340, %v3365
        %v3374 = vadd.f32 %v3341, %v3366
        %v3375 = vld [vmem:[#allocation3 + $0x47] sm:$0xff]
        %s3376 = scalar_lea.vmem %s33, 192
        %v3377 = vld [vmem:[%s3376] sm:$0xff]
        %v3378 = vld [vmem:[%s3376 + $0x8] sm:$0xff]
        %v3379 = vld [vmem:[%s3376 + $0x10] sm:$0xff]
        %v3380 = vld [vmem:[%s3376 + $0x18] sm:$0xff]
        %v3381 = vld [vmem:[%s3376 + $0x20] sm:$0xff]
        %v3382 = vld [vmem:[%s3376 + $0x28] sm:$0xff]
        %v3383 = vld [vmem:[%s3376 + $0x30] sm:$0xff]
        %v3384 = vld [vmem:[%s3376 + $0x38] sm:$0xff]
        %v3385 = vmul.f32 %v3278, %v3377
        %v3386 = vmul.f32 %v3279, %v3378
        %v3387 = vmul.f32 %v3280, %v3379
        %v3388 = vmul.f32 %v3281, %v3380
        %v3389 = vmul.f32 %v3282, %v3381
        %v3390 = vmul.f32 %v3283, %v3382
        %v3391 = vmul.f32 %v3284, %v3383
        %v3392 = vmul.f32 %v3375, %v3384
        %v3393 = vadd.f32 %v3367, %v3385
        %v3394 = vadd.f32 %v3368, %v3386
        %v3395 = vadd.f32 %v3369, %v3387
        %v3396 = vadd.f32 %v3370, %v3388
        %v3397 = vadd.f32 %v3371, %v3389
        %v3398 = vadd.f32 %v3372, %v3390
        %v3399 = vadd.f32 %v3373, %v3391
        %v3400 = vadd.f32 %v3374, %v3392
        %v3401 = vld [vmem:[#allocation3 + $0x48] sm:$0xff]
        %s3402 = scalar_lea.vmem %s33, 256
        %v3403 = vld [vmem:[%s3402] sm:$0xff]
        %v3404 = vld [vmem:[%s3402 + $0x8] sm:$0xff]
        %v3405 = vld [vmem:[%s3402 + $0x10] sm:$0xff]
        %v3406 = vld [vmem:[%s3402 + $0x18] sm:$0xff]
        %v3407 = vld [vmem:[%s3402 + $0x20] sm:$0xff]
        %v3408 = vld [vmem:[%s3402 + $0x28] sm:$0xff]
        %v3409 = vld [vmem:[%s3402 + $0x30] sm:$0xff]
        %v3410 = vld [vmem:[%s3402 + $0x38] sm:$0xff]
        %v3411 = vmul.f32 %v3310, %v3403
        %v3412 = vmul.f32 %v3311, %v3404
        %v3413 = vmul.f32 %v3312, %v3405
        %v3414 = vmul.f32 %v3313, %v3406
        %v3415 = vmul.f32 %v3314, %v3407
        %v3416 = vmul.f32 %v3315, %v3408
        %v3417 = vmul.f32 %v3316, %v3409
        %v3418 = vmul.f32 %v3401, %v3410
        %v3419 = vadd.f32 %v3393, %v3411
        %v3420 = vadd.f32 %v3394, %v3412
        %v3421 = vadd.f32 %v3395, %v3413
        %v3422 = vadd.f32 %v3396, %v3414
        %v3423 = vadd.f32 %v3397, %v3415
        %v3424 = vadd.f32 %v3398, %v3416
        %v3425 = vadd.f32 %v3399, %v3417
        %v3426 = vadd.f32 %v3400, %v3418
        %v3427 = vld [vmem:[#allocation3 + $0x49] sm:$0xff]
        %s3428 = scalar_lea.vmem %s33, 320
        %v3429 = vld [vmem:[%s3428] sm:$0xff]
        %v3430 = vld [vmem:[%s3428 + $0x8] sm:$0xff]
        %v3431 = vld [vmem:[%s3428 + $0x10] sm:$0xff]
        %v3432 = vld [vmem:[%s3428 + $0x18] sm:$0xff]
        %v3433 = vld [vmem:[%s3428 + $0x20] sm:$0xff]
        %v3434 = vld [vmem:[%s3428 + $0x28] sm:$0xff]
        %v3435 = vld [vmem:[%s3428 + $0x30] sm:$0xff]
        %v3436 = vld [vmem:[%s3428 + $0x38] sm:$0xff]
        %v3437 = vmul.f32 %v3343, %v3429
        %v3438 = vmul.f32 %v3344, %v3430
        %v3439 = vmul.f32 %v3345, %v3431
        %v3440 = vmul.f32 %v3346, %v3432
        %v3441 = vmul.f32 %v3347, %v3433
        %v3442 = vmul.f32 %v3348, %v3434
        %v3443 = vmul.f32 %v3349, %v3435
        %v3444 = vmul.f32 %v3427, %v3436
        %v3445 = vadd.f32 %v3419, %v3437
        %v3446 = vadd.f32 %v3420, %v3438
        %v3447 = vadd.f32 %v3421, %v3439
        %v3448 = vadd.f32 %v3422, %v3440
        %v3449 = vadd.f32 %v3423, %v3441
        %v3450 = vadd.f32 %v3424, %v3442
        %v3451 = vadd.f32 %v3425, %v3443
        %v3452 = vadd.f32 %v3426, %v3444
        %v3453 = vld [vmem:[#allocation3 + $0x4f] sm:$0xff]
        %s3454 = scalar_lea.vmem %s33, 384
        %v3455 = vld [vmem:[%s3454] sm:$0xff]
        %v3456 = vld [vmem:[%s3454 + $0x8] sm:$0xff]
        %v3457 = vld [vmem:[%s3454 + $0x10] sm:$0xff]
        %v3458 = vld [vmem:[%s3454 + $0x18] sm:$0xff]
        %v3459 = vld [vmem:[%s3454 + $0x20] sm:$0xff]
        %v3460 = vld [vmem:[%s3454 + $0x28] sm:$0xff]
        %v3461 = vld [vmem:[%s3454 + $0x30] sm:$0xff]
        %v3462 = vld [vmem:[%s3454 + $0x38] sm:$0xff]
        %v3463 = vmul.f32 %v3279, %v3455
        %v3464 = vmul.f32 %v3280, %v3456
        %v3465 = vmul.f32 %v3281, %v3457
        %v3466 = vmul.f32 %v3282, %v3458
        %v3467 = vmul.f32 %v3283, %v3459
        %v3468 = vmul.f32 %v3284, %v3460
        %v3469 = vmul.f32 %v3375, %v3461
        %v3470 = vmul.f32 %v3453, %v3462
        %v3471 = vadd.f32 %v3445, %v3463
        %v3472 = vadd.f32 %v3446, %v3464
        %v3473 = vadd.f32 %v3447, %v3465
        %v3474 = vadd.f32 %v3448, %v3466
        %v3475 = vadd.f32 %v3449, %v3467
        %v3476 = vadd.f32 %v3450, %v3468
        %v3477 = vadd.f32 %v3451, %v3469
        %v3478 = vadd.f32 %v3452, %v3470
        %v3479 = vld [vmem:[#allocation3 + $0x50] sm:$0xff]
        %s3480 = scalar_lea.vmem %s33, 448
        %v3481 = vld [vmem:[%s3480] sm:$0xff]
        %v3482 = vld [vmem:[%s3480 + $0x8] sm:$0xff]
        %v3483 = vld [vmem:[%s3480 + $0x10] sm:$0xff]
        %v3484 = vld [vmem:[%s3480 + $0x18] sm:$0xff]
        %v3485 = vld [vmem:[%s3480 + $0x20] sm:$0xff]
        %v3486 = vld [vmem:[%s3480 + $0x28] sm:$0xff]
        %v3487 = vld [vmem:[%s3480 + $0x30] sm:$0xff]
        %v3488 = vld [vmem:[%s3480 + $0x38] sm:$0xff]
        %v3489 = vmul.f32 %v3311, %v3481
        %v3490 = vmul.f32 %v3312, %v3482
        %v3491 = vmul.f32 %v3313, %v3483
        %v3492 = vmul.f32 %v3314, %v3484
        %v3493 = vmul.f32 %v3315, %v3485
        %v3494 = vmul.f32 %v3316, %v3486
        %v3495 = vmul.f32 %v3401, %v3487
        %v3496 = vmul.f32 %v3479, %v3488
        %v3497 = vadd.f32 %v3471, %v3489
        %v3498 = vadd.f32 %v3472, %v3490
        %v3499 = vadd.f32 %v3473, %v3491
        %v3500 = vadd.f32 %v3474, %v3492
        %v3501 = vadd.f32 %v3475, %v3493
        %v3502 = vadd.f32 %v3476, %v3494
        %v3503 = vadd.f32 %v3477, %v3495
        %v3504 = vadd.f32 %v3478, %v3496
        %v3505 = vld [vmem:[#allocation3 + $0x51] sm:$0xff]
        %s3506 = scalar_lea.vmem %s33, 512
        %v3507 = vld [vmem:[%s3506] sm:$0xff]
        %v3508 = vld [vmem:[%s3506 + $0x8] sm:$0xff]
        %v3509 = vld [vmem:[%s3506 + $0x10] sm:$0xff]
        %v3510 = vld [vmem:[%s3506 + $0x18] sm:$0xff]
        %v3511 = vld [vmem:[%s3506 + $0x20] sm:$0xff]
        %v3512 = vld [vmem:[%s3506 + $0x28] sm:$0xff]
        %v3513 = vld [vmem:[%s3506 + $0x30] sm:$0xff]
        %v3514 = vld [vmem:[%s3506 + $0x38] sm:$0xff]
        %v3515 = vmul.f32 %v3344, %v3507
        %v3516 = vmul.f32 %v3345, %v3508
        %v3517 = vmul.f32 %v3346, %v3509
        %v3518 = vmul.f32 %v3347, %v3510
        %v3519 = vmul.f32 %v3348, %v3511
        %v3520 = vmul.f32 %v3349, %v3512
        %v3521 = vmul.f32 %v3427, %v3513
        %v3522 = vmul.f32 %v3505, %v3514
        %v3523 = vadd.f32 %v3497, %v3515
        %v3524 = vadd.f32 %v3498, %v3516
        %v3525 = vadd.f32 %v3499, %v3517
        %v3526 = vadd.f32 %v3500, %v3518
        %v3527 = vadd.f32 %v3501, %v3519
        %v3528 = vadd.f32 %v3502, %v3520
        %v3529 = vadd.f32 %v3503, %v3521
        %v3530 = vadd.f32 %v3504, %v3522
        %v3531 = vld [vmem:[%s35] sm:$0x1]
        %v3533 = vlaneseq
        %v3534 = vshrl.u32 %v3533, 7
        %v3535 = vsub.s32 0, %v3534
        %v3536 = vrot.slane %v3531, %v3535
        %v3538 = vmul.f32 %v3523, %v3536
        %v3539 = vmul.f32 %v3524, %v3536
        %v3540 = vmul.f32 %v3525, %v3536
        %v3541 = vmul.f32 %v3526, %v3536
        %v3542 = vmul.f32 %v3527, %v3536
        %v3543 = vmul.f32 %v3528, %v3536
        %v3544 = vmul.f32 %v3529, %v3536
        %v3545 = vmul.f32 %v3530, %v3536
        %v3546 = vld [vmem:[%s37] sm:$0x1]
        %v3548 = vlaneseq
        %v3549 = vshrl.u32 %v3548, 7
        %v3550 = vsub.s32 0, %v3549
        %v3551 = vrot.slane %v3546, %v3550
        %v3553 = vadd.f32 %v3538, %v3551
        %v3554 = vadd.f32 %v3539, %v3551
        %v3555 = vadd.f32 %v3540, %v3551
        %v3556 = vadd.f32 %v3541, %v3551
        %v3557 = vadd.f32 %v3542, %v3551
        %v3558 = vadd.f32 %v3543, %v3551
        %v3559 = vadd.f32 %v3544, %v3551
        %v3560 = vadd.f32 %v3545, %v3551
        %v3561 = vld [vmem:[%s39] sm:$0x1]
        %v3562 = vld [vmem:[%s41] sm:$0x1]
        %v3563 = vsel %vm942, %v3553, 0.0
        %3564 = vadd.xlane.f32.xlu0 %v3563
        %v3565 = vpop.xlane.xlu0 %3564
        %v3566 = vsel %vm942, %v3554, 0.0
        %3567 = vadd.xlane.f32.xlu0 %v3566
        %v3568 = vpop.xlane.xlu0 %3567
        %v3569 = vsel %vm942, %v3555, 0.0
        %3570 = vadd.xlane.f32.xlu0 %v3569
        %v3571 = vpop.xlane.xlu0 %3570
        %v3572 = vsel %vm942, %v3556, 0.0
        %3573 = vadd.xlane.f32.xlu0 %v3572
        %v3574 = vpop.xlane.xlu0 %3573
        %v3575 = vsel %vm942, %v3557, 0.0
        %3576 = vadd.xlane.f32.xlu0 %v3575
        %v3577 = vpop.xlane.xlu0 %3576
        %v3578 = vsel %vm942, %v3558, 0.0
        %3579 = vadd.xlane.f32.xlu0 %v3578
        %v3580 = vpop.xlane.xlu0 %3579
        %v3581 = vsel %vm942, %v3559, 0.0
        %3582 = vadd.xlane.f32.xlu0 %v3581
        %v3583 = vpop.xlane.xlu0 %3582
        %v3584 = vsel %vm942, %v3560, 0.0
        %3585 = vadd.xlane.f32.xlu0 %v3584
        %v3586 = vpop.xlane.xlu0 %3585
        %v3587 = vmul.f32 %v3565, %v967
        %v3588 = vmul.f32 %v3568, %v967
        %v3589 = vmul.f32 %v3571, %v967
        %v3590 = vmul.f32 %v3574, %v967
        %v3591 = vmul.f32 %v3577, %v967
        %v3592 = vmul.f32 %v3580, %v967
        %v3593 = vmul.f32 %v3583, %v967
        %v3594 = vmul.f32 %v3586, %v967
        %v3595 = vsub.f32 %v3553, %v3587
        %v3596 = vsub.f32 %v3554, %v3588
        %v3597 = vsub.f32 %v3555, %v3589
        %v3598 = vsub.f32 %v3556, %v3590
        %v3599 = vsub.f32 %v3557, %v3591
        %v3600 = vsub.f32 %v3558, %v3592
        %v3601 = vsub.f32 %v3559, %v3593
        %v3602 = vsub.f32 %v3560, %v3594
        %v3603 = vmul.f32 %v3595, %v3595
        %v3604 = vmul.f32 %v3596, %v3596
        %v3605 = vmul.f32 %v3597, %v3597
        %v3606 = vmul.f32 %v3598, %v3598
        %v3607 = vmul.f32 %v3599, %v3599
        %v3608 = vmul.f32 %v3600, %v3600
        %v3609 = vmul.f32 %v3601, %v3601
        %v3610 = vmul.f32 %v3602, %v3602
        %v3611 = vsel %vm942, %v3603, 0.0
        %3612 = vadd.xlane.f32.xlu0 %v3611
        %v3613 = vpop.xlane.xlu0 %3612
        %v3614 = vsel %vm942, %v3604, 0.0
        %3615 = vadd.xlane.f32.xlu0 %v3614
        %v3616 = vpop.xlane.xlu0 %3615
        %v3617 = vsel %vm942, %v3605, 0.0
        %3618 = vadd.xlane.f32.xlu0 %v3617
        %v3619 = vpop.xlane.xlu0 %3618
        %v3620 = vsel %vm942, %v3606, 0.0
        %3621 = vadd.xlane.f32.xlu0 %v3620
        %v3622 = vpop.xlane.xlu0 %3621
        %v3623 = vsel %vm942, %v3607, 0.0
        %3624 = vadd.xlane.f32.xlu0 %v3623
        %v3625 = vpop.xlane.xlu0 %3624
        %v3626 = vsel %vm942, %v3608, 0.0
        %3627 = vadd.xlane.f32.xlu0 %v3626
        %v3628 = vpop.xlane.xlu0 %3627
        %v3629 = vsel %vm942, %v3609, 0.0
        %3630 = vadd.xlane.f32.xlu0 %v3629
        %v3631 = vpop.xlane.xlu0 %3630
        %v3632 = vsel %vm942, %v3610, 0.0
        %3633 = vadd.xlane.f32.xlu0 %v3632
        %v3634 = vpop.xlane.xlu0 %3633
        %v3635 = vmul.f32 %v3613, %v967
        %v3636 = vmul.f32 %v3616, %v967
        %v3637 = vmul.f32 %v3619, %v967
        %v3638 = vmul.f32 %v3622, %v967
        %v3639 = vmul.f32 %v3625, %v967
        %v3640 = vmul.f32 %v3628, %v967
        %v3641 = vmul.f32 %v3631, %v967
        %v3642 = vmul.f32 %v3634, %v967
        %v3643 = vadd.f32 %v3635, 1e-05
        %v3644 = vadd.f32 %v3636, 1e-05
        %v3645 = vadd.f32 %v3637, 1e-05
        %v3646 = vadd.f32 %v3638, 1e-05
        %v3647 = vadd.f32 %v3639, 1e-05
        %v3648 = vadd.f32 %v3640, 1e-05
        %v3649 = vadd.f32 %v3641, 1e-05
        %v3650 = vadd.f32 %v3642, 1e-05
        %v3651 = vrsqrt.pop %v3643
        %v3652 = vrsqrt.pop %v3644
        %v3653 = vrsqrt.pop %v3645
        %v3654 = vrsqrt.pop %v3646
        %v3655 = vrsqrt.pop %v3647
        %v3656 = vrsqrt.pop %v3648
        %v3657 = vrsqrt.pop %v3649
        %v3658 = vrsqrt.pop %v3650
        %v3659 = vmul.f32 %v3595, %v3651
        %v3660 = vmul.f32 %v3596, %v3652
        %v3661 = vmul.f32 %v3597, %v3653
        %v3662 = vmul.f32 %v3598, %v3654
        %v3663 = vmul.f32 %v3599, %v3655
        %v3664 = vmul.f32 %v3600, %v3656
        %v3665 = vmul.f32 %v3601, %v3657
        %v3666 = vmul.f32 %v3602, %v3658
        %v3668 = vlaneseq
        %v3669 = vshrl.u32 %v3668, 7
        %v3670 = vsub.s32 0, %v3669
        %v3671 = vrot.slane %v3561, %v3670
        %v3673 = vmul.f32 %v3659, %v3671
        %v3674 = vmul.f32 %v3660, %v3671
        %v3675 = vmul.f32 %v3661, %v3671
        %v3676 = vmul.f32 %v3662, %v3671
        %v3677 = vmul.f32 %v3663, %v3671
        %v3678 = vmul.f32 %v3664, %v3671
        %v3679 = vmul.f32 %v3665, %v3671
        %v3680 = vmul.f32 %v3666, %v3671
        %v3682 = vlaneseq
        %v3683 = vshrl.u32 %v3682, 7
        %v3684 = vsub.s32 0, %v3683
        %v3685 = vrot.slane %v3562, %v3684
        %v3687 = vadd.f32 %v3673, %v3685
        %v3688 = vadd.f32 %v3674, %v3685
        %v3689 = vadd.f32 %v3675, %v3685
        %v3690 = vadd.f32 %v3676, %v3685
        %v3691 = vadd.f32 %v3677, %v3685
        %v3692 = vadd.f32 %v3678, %v3685
        %v3693 = vadd.f32 %v3679, %v3685
        %v3694 = vadd.f32 %v3680, %v3685
        %v3695 = vld [vmem:[%s43] sm:$0x1]
        %v3696 = vld [vmem:[%s45] sm:$0x1]
        %v3697 = vsel %vm942, %v3687, 0.0
        %3698 = vadd.xlane.f32.xlu0 %v3697
        %v3699 = vpop.xlane.xlu0 %3698
        %v3700 = vsel %vm942, %v3688, 0.0
        %3701 = vadd.xlane.f32.xlu0 %v3700
        %v3702 = vpop.xlane.xlu0 %3701
        %v3703 = vsel %vm942, %v3689, 0.0
        %3704 = vadd.xlane.f32.xlu0 %v3703
        %v3705 = vpop.xlane.xlu0 %3704
        %v3706 = vsel %vm942, %v3690, 0.0
        %3707 = vadd.xlane.f32.xlu0 %v3706
        %v3708 = vpop.xlane.xlu0 %3707
        %v3709 = vsel %vm942, %v3691, 0.0
        %3710 = vadd.xlane.f32.xlu0 %v3709
        %v3711 = vpop.xlane.xlu0 %3710
        %v3712 = vsel %vm942, %v3692, 0.0
        %3713 = vadd.xlane.f32.xlu0 %v3712
        %v3714 = vpop.xlane.xlu0 %3713
        %v3715 = vsel %vm942, %v3693, 0.0
        %3716 = vadd.xlane.f32.xlu0 %v3715
        %v3717 = vpop.xlane.xlu0 %3716
        %v3718 = vsel %vm942, %v3694, 0.0
        %3719 = vadd.xlane.f32.xlu0 %v3718
        %v3720 = vpop.xlane.xlu0 %3719
        %v3721 = vmul.f32 %v3699, %v967
        %v3722 = vmul.f32 %v3702, %v967
        %v3723 = vmul.f32 %v3705, %v967
        %v3724 = vmul.f32 %v3708, %v967
        %v3725 = vmul.f32 %v3711, %v967
        %v3726 = vmul.f32 %v3714, %v967
        %v3727 = vmul.f32 %v3717, %v967
        %v3728 = vmul.f32 %v3720, %v967
        %v3729 = vsub.f32 %v3687, %v3721
        %v3730 = vsub.f32 %v3688, %v3722
        %v3731 = vsub.f32 %v3689, %v3723
        %v3732 = vsub.f32 %v3690, %v3724
        %v3733 = vsub.f32 %v3691, %v3725
        %v3734 = vsub.f32 %v3692, %v3726
        %v3735 = vsub.f32 %v3693, %v3727
        %v3736 = vsub.f32 %v3694, %v3728
        %v3737 = vmul.f32 %v3729, %v3729
        %v3738 = vmul.f32 %v3730, %v3730
        %v3739 = vmul.f32 %v3731, %v3731
        %v3740 = vmul.f32 %v3732, %v3732
        %v3741 = vmul.f32 %v3733, %v3733
        %v3742 = vmul.f32 %v3734, %v3734
        %v3743 = vmul.f32 %v3735, %v3735
        %v3744 = vmul.f32 %v3736, %v3736
        %v3745 = vsel %vm942, %v3737, 0.0
        %3746 = vadd.xlane.f32.xlu0 %v3745
        %v3747 = vpop.xlane.xlu0 %3746
        %v3748 = vsel %vm942, %v3738, 0.0
        %3749 = vadd.xlane.f32.xlu0 %v3748
        %v3750 = vpop.xlane.xlu0 %3749
        %v3751 = vsel %vm942, %v3739, 0.0
        %3752 = vadd.xlane.f32.xlu0 %v3751
        %v3753 = vpop.xlane.xlu0 %3752
        %v3754 = vsel %vm942, %v3740, 0.0
        %3755 = vadd.xlane.f32.xlu0 %v3754
        %v3756 = vpop.xlane.xlu0 %3755
        %v3757 = vsel %vm942, %v3741, 0.0
        %3758 = vadd.xlane.f32.xlu0 %v3757
        %v3759 = vpop.xlane.xlu0 %3758
        %v3760 = vsel %vm942, %v3742, 0.0
        %3761 = vadd.xlane.f32.xlu0 %v3760
        %v3762 = vpop.xlane.xlu0 %3761
        %v3763 = vsel %vm942, %v3743, 0.0
        %3764 = vadd.xlane.f32.xlu0 %v3763
        %v3765 = vpop.xlane.xlu0 %3764
        %v3766 = vsel %vm942, %v3744, 0.0
        %3767 = vadd.xlane.f32.xlu0 %v3766
        %v3768 = vpop.xlane.xlu0 %3767
        %v3769 = vmul.f32 %v3747, %v967
        %v3770 = vmul.f32 %v3750, %v967
        %v3771 = vmul.f32 %v3753, %v967
        %v3772 = vmul.f32 %v3756, %v967
        %v3773 = vmul.f32 %v3759, %v967
        %v3774 = vmul.f32 %v3762, %v967
        %v3775 = vmul.f32 %v3765, %v967
        %v3776 = vmul.f32 %v3768, %v967
        %v3777 = vadd.f32 %v3769, 1e-05
        %v3778 = vadd.f32 %v3770, 1e-05
        %v3779 = vadd.f32 %v3771, 1e-05
        %v3780 = vadd.f32 %v3772, 1e-05
        %v3781 = vadd.f32 %v3773, 1e-05
        %v3782 = vadd.f32 %v3774, 1e-05
        %v3783 = vadd.f32 %v3775, 1e-05
        %v3784 = vadd.f32 %v3776, 1e-05
        %v3785 = vrsqrt.pop %v3777
        %v3786 = vrsqrt.pop %v3778
        %v3787 = vrsqrt.pop %v3779
        %v3788 = vrsqrt.pop %v3780
        %v3789 = vrsqrt.pop %v3781
        %v3790 = vrsqrt.pop %v3782
        %v3791 = vrsqrt.pop %v3783
        %v3792 = vrsqrt.pop %v3784
        %v3793 = vmul.f32 %v3729, %v3785
        %v3794 = vmul.f32 %v3730, %v3786
        %v3795 = vmul.f32 %v3731, %v3787
        %v3796 = vmul.f32 %v3732, %v3788
        %v3797 = vmul.f32 %v3733, %v3789
        %v3798 = vmul.f32 %v3734, %v3790
        %v3799 = vmul.f32 %v3735, %v3791
        %v3800 = vmul.f32 %v3736, %v3792
        %v3802 = vlaneseq
        %v3803 = vshrl.u32 %v3802, 7
        %v3804 = vsub.s32 0, %v3803
        %v3805 = vrot.slane %v3695, %v3804
        %v3807 = vmul.f32 %v3793, %v3805
        %v3808 = vmul.f32 %v3794, %v3805
        %v3809 = vmul.f32 %v3795, %v3805
        %v3810 = vmul.f32 %v3796, %v3805
        %v3811 = vmul.f32 %v3797, %v3805
        %v3812 = vmul.f32 %v3798, %v3805
        %v3813 = vmul.f32 %v3799, %v3805
        %v3814 = vmul.f32 %v3800, %v3805
        %v3816 = vlaneseq
        %v3817 = vshrl.u32 %v3816, 7
        %v3818 = vsub.s32 0, %v3817
        %v3819 = vrot.slane %v3696, %v3818
        %v3821 = vadd.f32 %v3807, %v3819
        %v3822 = vadd.f32 %v3808, %v3819
        %v3823 = vadd.f32 %v3809, %v3819
        %v3824 = vadd.f32 %v3810, %v3819
        %v3825 = vadd.f32 %v3811, %v3819
        %v3826 = vadd.f32 %v3812, %v3819
        %v3827 = vadd.f32 %v3813, %v3819
        %v3828 = vadd.f32 %v3814, %v3819
        %v3829 = vpack.c.bf16 %v3822, %v3821
        %v3830 = vpack.c.bf16 %v3824, %v3823
        %v3831 = vpack.c.bf16 %v3826, %v3825
        %v3832 = vpack.c.bf16 %v3828, %v3827
        %v3833 = vld [vmem:[%s47] sm:$0xf]
        %v3834 = vld [vmem:[%s47 + $0x4] sm:$0xf]
        %v3835 = vld [vmem:[%s47 + $0x8] sm:$0xf]
        %v3836 = vld [vmem:[%s47 + $0xc] sm:$0xf]
        %v3837 = vld [vmem:[%s49] sm:$0x1]
        %v3839 = vlaneseq
        %v3840 = vshrl.u32 %v3839, 7
        %v3841 = vsub.s32 0, %v3840
        %v3842 = vrot.slane %v3837, %v3841
        %v3848 = vunpack.c.l.b16 %v3833
        %v3849 = vunpack.c.l.b16 %v3834
        %v3850 = vunpack.c.l.b16 %v3835
        %v3851 = vunpack.c.l.b16 %v3836
        %v3852 = vpack.c.b16 %v3849, %v3848
        %v3853 = vpack.c.b16 %v3851, %v3850
        %v3857 = vsel %vm942, %v3829, 0
        %v3860 = vsel %vm942, %v3830, 0
        %v3863 = vsel %vm942, %v3831, 0
        %v3866 = vsel %vm942, %v3832, 0
        %3868 = vmatprep.subr.bf16.mxu0 0
        %3869 = vmatpush1.bf16.msra.mxu0 %v3852
        %3870 = vmatprep.subr.bf16.mxu0 0
        %3871 = vmatpush1.bf16.msra.mxu0 %v3853
        %3872 = vmatprep.subr.bf16.mxu0 0
        %3873 = vmatpush1.bf16.msra.mxu0 0
        %3874 = vmatprep.subr.bf16.mxu0 0
        %3875 = vmatpush1.bf16.msra.mxu0 0
        %3876 = vmatprep.subr.bf16.mxu0 0
        %3877 = vmatpush1.bf16.msra.mxu0 0
        %3878 = vmatprep.subr.bf16.mxu0 0
        %3879 = vmatpush1.bf16.msra.mxu0 0
        %3880 = vmatprep.subr.bf16.mxu0 0
        %3881 = vmatpush1.bf16.msra.mxu0 0
        %3882 = vmatprep.subr.bf16.mxu0 0
        %3883 = vmatpush1.bf16.msra.mxu0 0
        %3884 = vmatprep.subr.bf16.mxu0 0
        %3885 = vmatpush1.bf16.msra.mxu0 0
        %3886 = vmatprep.subr.bf16.mxu0 0
        %3887 = vmatpush1.bf16.msra.mxu0 0
        %3888 = vmatprep.subr.bf16.mxu0 0
        %3889 = vmatpush1.bf16.msra.mxu0 0
        %3890 = vmatprep.subr.bf16.mxu0 0
        %3891 = vmatpush1.bf16.msra.mxu0 0
        %3892 = vmatprep.subr.bf16.mxu0 0
        %3893 = vmatpush1.bf16.msra.mxu0 0
        %3894 = vmatprep.subr.bf16.mxu0 0
        %3895 = vmatpush1.bf16.msra.mxu0 0
        %3896 = vmatprep.subr.bf16.mxu0 0
        %3897 = vmatpush1.bf16.msra.mxu0 0
        %3898 = vmatprep.subr.bf16.mxu0 0
        %3899 = vmatpush1.bf16.msra.mxu0 0
        %3900 = vmatprep.mubr.bf16.mxu0 0
        %3901 = vmatmul.mubr.bf16.gmra.mrb[0].mxu0 %v3857
        %v3902 = vpop.f32.mrb[0].mxu0
        %v3903 = vadd.f32 %v3842, %v3902
        %v3904 = vpop.f32.mrb[0].mxu0
        %v3905 = vpop.f32.mrb[0].mxu0
        %v3906 = vadd.f32 %v3842, %v3905
        %v3907 = vpop.f32.mrb[0].mxu0
        %3908 = vmatprep.mubr.bf16.mxu0 0
        %3909 = vmatmul.mubr.bf16.gmra.mrb[0].mxu0 %v3860
        %v3910 = vpop.f32.mrb[0].mxu0
        %v3911 = vadd.f32 %v3842, %v3910
        %v3912 = vpop.f32.mrb[0].mxu0
        %v3913 = vpop.f32.mrb[0].mxu0
        %v3914 = vadd.f32 %v3842, %v3913
        %v3915 = vpop.f32.mrb[0].mxu0
        %3916 = vmatprep.mubr.bf16.mxu0 0
        %3917 = vmatmul.mubr.bf16.gmra.mrb[0].mxu0 %v3863
        %v3918 = vpop.f32.mrb[0].mxu0
        %v3919 = vadd.f32 %v3842, %v3918
        %v3920 = vpop.f32.mrb[0].mxu0
        %v3921 = vpop.f32.mrb[0].mxu0
        %v3922 = vadd.f32 %v3842, %v3921
        %v3923 = vpop.f32.mrb[0].mxu0
        %3924 = vmatprep.mubr.bf16.mxu0 0
        %3925 = vmatmul.mubr.bf16.gmra.mrb[0].mxu0 %v3866
        %v3926 = vpop.f32.mrb[0].mxu0
        %v3927 = vadd.f32 %v3842, %v3926
        %v3928 = vpop.f32.mrb[0].mxu0
        %v3929 = vpop.f32.mrb[0].mxu0
        %v3930 = vadd.f32 %v3842, %v3929
        %v3931 = vpop.f32.mrb[0].mxu0
        %3932 = vdwg.mxu0
        %v3933 = vmul.f32 %v3903, 0.5
        %v3934 = vmul.f32 %v3906, 0.5
        %v3935 = vmul.f32 %v3911, 0.5
        %v3936 = vmul.f32 %v3914, 0.5
        %v3937 = vmul.f32 %v3919, 0.5
        %v3938 = vmul.f32 %v3922, 0.5
        %v3939 = vmul.f32 %v3927, 0.5
        %v3940 = vmul.f32 %v3930, 0.5
        %v3941 = vmul.f32 %v3903, 0.044715
        %v3942 = vmul.f32 %v3906, 0.044715
        %v3943 = vmul.f32 %v3911, 0.044715
        %v3944 = vmul.f32 %v3914, 0.044715
        %v3945 = vmul.f32 %v3919, 0.044715
        %v3946 = vmul.f32 %v3922, 0.044715
        %v3947 = vmul.f32 %v3927, 0.044715
        %v3948 = vmul.f32 %v3930, 0.044715
        %v3949 = vmul.f32 %v3941, %v3903
        %v3950 = vmul.f32 %v3942, %v3906
        %v3951 = vmul.f32 %v3943, %v3911
        %v3952 = vmul.f32 %v3944, %v3914
        %v3953 = vmul.f32 %v3945, %v3919
        %v3954 = vmul.f32 %v3946, %v3922
        %v3955 = vmul.f32 %v3947, %v3927
        %v3956 = vmul.f32 %v3948, %v3930
        %v3957 = vmul.f32 %v3949, %v3903
        %v3958 = vmul.f32 %v3950, %v3906
        %v3959 = vmul.f32 %v3951, %v3911
        %v3960 = vmul.f32 %v3952, %v3914
        %v3961 = vmul.f32 %v3953, %v3919
        %v3962 = vmul.f32 %v3954, %v3922
        %v3963 = vmul.f32 %v3955, %v3927
        %v3964 = vmul.f32 %v3956, %v3930
        %v3965 = vadd.f32 %v3903, %v3957
        %v3966 = vadd.f32 %v3906, %v3958
        %v3967 = vadd.f32 %v3911, %v3959
        %v3968 = vadd.f32 %v3914, %v3960
        %v3969 = vadd.f32 %v3919, %v3961
        %v3970 = vadd.f32 %v3922, %v3962
        %v3971 = vadd.f32 %v3927, %v3963
        %v3972 = vadd.f32 %v3930, %v3964
        %v3973 = vmul.f32 %v3965, 0.7978846
        %v3974 = vmul.f32 %v3966, 0.7978846
        %v3975 = vmul.f32 %v3967, 0.7978846
        %v3976 = vmul.f32 %v3968, 0.7978846
        %v3977 = vmul.f32 %v3969, 0.7978846
        %v3978 = vmul.f32 %v3970, 0.7978846
        %v3979 = vmul.f32 %v3971, 0.7978846
        %v3980 = vmul.f32 %v3972, 0.7978846
        %v3981 = vtanh.pop %v3973
        %v3982 = vtanh.pop %v3974
        %v3983 = vtanh.pop %v3975
        %v3984 = vtanh.pop %v3976
        %v3985 = vtanh.pop %v3977
        %v3986 = vtanh.pop %v3978
        %v3987 = vtanh.pop %v3979
        %v3988 = vtanh.pop %v3980
        %v3989 = vadd.f32 %v3981, 1.0
        %v3990 = vadd.f32 %v3982, 1.0
        %v3991 = vadd.f32 %v3983, 1.0
        %v3992 = vadd.f32 %v3984, 1.0
        %v3993 = vadd.f32 %v3985, 1.0
        %v3994 = vadd.f32 %v3986, 1.0
        %v3995 = vadd.f32 %v3987, 1.0
        %v3996 = vadd.f32 %v3988, 1.0
        %v3997 = vmul.f32 %v3933, %v3989
        %v3998 = vmul.f32 %v3934, %v3990
        %v3999 = vmul.f32 %v3935, %v3991
        %v4000 = vmul.f32 %v3936, %v3992
        %v4001 = vmul.f32 %v3937, %v3993
        %v4002 = vmul.f32 %v3938, %v3994
        %v4003 = vmul.f32 %v3939, %v3995
        %v4004 = vmul.f32 %v3940, %v3996
        %v4005 = vpack.c.bf16 %v3998, %v3997
        %v4006 = vpack.c.bf16 %v4000, %v3999
        %v4007 = vpack.c.bf16 %v4002, %v4001
        %v4008 = vpack.c.bf16 %v4004, %v4003
        %v4009 = vld [vmem:[%s51] sm:$0xf]
        %v4010 = vld [vmem:[%s51 + $0x4] sm:$0xf]
        %v4011 = vld [vmem:[%s51 + $0x8] sm:$0xf]
        %v4012 = vld [vmem:[%s51 + $0xc] sm:$0xf]
        %v4013 = vld [vmem:[%s51 + $0x10] sm:$0xf]
        %v4014 = vld [vmem:[%s51 + $0x14] sm:$0xf]
        %v4015 = vld [vmem:[%s51 + $0x18] sm:$0xf]
        %v4016 = vld [vmem:[%s51 + $0x1c] sm:$0xf]
        %v4017 = vld [vmem:[%s51 + $0x20] sm:$0xf]
        %v4018 = vld [vmem:[%s51 + $0x24] sm:$0xf]
        %v4019 = vld [vmem:[%s51 + $0x28] sm:$0xf]
        %v4020 = vld [vmem:[%s51 + $0x2c] sm:$0xf]
        %v4021 = vld [vmem:[%s51 + $0x30] sm:$0xf]
        %v4022 = vld [vmem:[%s51 + $0x34] sm:$0xf]
        %v4023 = vld [vmem:[%s51 + $0x38] sm:$0xf]
        %v4024 = vld [vmem:[%s51 + $0x3c] sm:$0xf]
        %v4025 = vld [vmem:[%s53] sm:$0x1]
        %v4027 = vlaneseq
        %v4028 = vshrl.u32 %v4027, 7
        %v4029 = vsub.s32 0, %v4028
        %v4030 = vrot.slane %v4025, %v4029
        %v4048 = vunpack.c.l.b16 %v4009
        %v4049 = vunpack.c.l.b16 %v4010
        %v4050 = vunpack.c.l.b16 %v4011
        %v4051 = vunpack.c.l.b16 %v4012
        %v4052 = vunpack.c.l.b16 %v4013
        %v4053 = vunpack.c.l.b16 %v4014
        %v4054 = vunpack.c.l.b16 %v4015
        %v4055 = vunpack.c.l.b16 %v4016
        %v4056 = vunpack.c.l.b16 %v4017
        %v4057 = vunpack.c.l.b16 %v4018
        %v4058 = vunpack.c.l.b16 %v4019
        %v4059 = vunpack.c.l.b16 %v4020
        %v4060 = vunpack.c.l.b16 %v4021
        %v4061 = vunpack.c.l.b16 %v4022
        %v4062 = vunpack.c.l.b16 %v4023
        %v4063 = vunpack.c.l.b16 %v4024
        %v4064 = vpack.c.b16 %v4049, %v4048
        %v4065 = vpack.c.b16 %v4051, %v4050
        %v4066 = vpack.c.b16 %v4053, %v4052
        %v4067 = vpack.c.b16 %v4055, %v4054
        %v4068 = vpack.c.b16 %v4057, %v4056
        %v4069 = vpack.c.b16 %v4059, %v4058
        %v4070 = vpack.c.b16 %v4061, %v4060
        %v4071 = vpack.c.b16 %v4063, %v4062
        %4080 = vmatprep.subr.bf16.mxu0 0
        %4081 = vmatpush1.bf16.msra.mxu0 %v4064
        %4082 = vmatprep.subr.bf16.mxu0 0
        %4083 = vmatpush1.bf16.msra.mxu0 %v4065
        %4084 = vmatprep.subr.bf16.mxu0 0
        %4085 = vmatpush1.bf16.msra.mxu0 %v4066
        %4086 = vmatprep.subr.bf16.mxu0 0
        %4087 = vmatpush1.bf16.msra.mxu0 %v4067
        %4088 = vmatprep.subr.bf16.mxu0 0
        %4089 = vmatpush1.bf16.msra.mxu0 %v4068
        %4090 = vmatprep.subr.bf16.mxu0 0
        %4091 = vmatpush1.bf16.msra.mxu0 %v4069
        %4092 = vmatprep.subr.bf16.mxu0 0
        %4093 = vmatpush1.bf16.msra.mxu0 %v4070
        %4094 = vmatprep.subr.bf16.mxu0 0
        %4095 = vmatpush1.bf16.msra.mxu0 %v4071
        %4096 = vmatprep.subr.bf16.mxu0 0
        %4097 = vmatpush1.bf16.msra.mxu0 0
        %4098 = vmatprep.subr.bf16.mxu0 0
        %4099 = vmatpush1.bf16.msra.mxu0 0
        %4100 = vmatprep.subr.bf16.mxu0 0
        %4101 = vmatpush1.bf16.msra.mxu0 0
        %4102 = vmatprep.subr.bf16.mxu0 0
        %4103 = vmatpush1.bf16.msra.mxu0 0
        %4104 = vmatprep.subr.bf16.mxu0 0
        %4105 = vmatpush1.bf16.msra.mxu0 0
        %4106 = vmatprep.subr.bf16.mxu0 0
        %4107 = vmatpush1.bf16.msra.mxu0 0
        %4108 = vmatprep.subr.bf16.mxu0 0
        %4109 = vmatpush1.bf16.msra.mxu0 0
        %4110 = vmatprep.subr.bf16.mxu0 0
        %4111 = vmatpush1.bf16.msra.mxu0 0
        %4112 = vmatprep.mubr.bf16.mxu0 0
        %4113 = vmatmul.mubr.bf16.gmra.mrb[0].mxu0 %v4005
        %v4114 = vpop.f32.mrb[0].mxu0
        %v4115 = vadd.f32 %v4030, %v4114
        %v4116 = vpop.f32.mrb[0].mxu0
        %v4117 = vpop.f32.mrb[0].mxu0
        %v4118 = vadd.f32 %v4030, %v4117
        %v4119 = vpop.f32.mrb[0].mxu0
        %4120 = vmatprep.mubr.bf16.mxu0 0
        %4121 = vmatmul.mubr.bf16.gmra.mrb[0].mxu0 %v4006
        %v4122 = vpop.f32.mrb[0].mxu0
        %v4123 = vadd.f32 %v4030, %v4122
        %v4124 = vpop.f32.mrb[0].mxu0
        %v4125 = vpop.f32.mrb[0].mxu0
        %v4126 = vadd.f32 %v4030, %v4125
        %v4127 = vpop.f32.mrb[0].mxu0
        %4128 = vmatprep.mubr.bf16.mxu0 0
        %4129 = vmatmul.mubr.bf16.gmra.mrb[0].mxu0 %v4007
        %v4130 = vpop.f32.mrb[0].mxu0
        %v4131 = vadd.f32 %v4030, %v4130
        %v4132 = vpop.f32.mrb[0].mxu0
        %v4133 = vpop.f32.mrb[0].mxu0
        %v4134 = vadd.f32 %v4030, %v4133
        %v4135 = vpop.f32.mrb[0].mxu0
        %4136 = vmatprep.mubr.bf16.mxu0 0
        %4137 = vmatmul.mubr.bf16.gmra.mrb[0].mxu0 %v4008
        %v4138 = vpop.f32.mrb[0].mxu0
        %v4139 = vadd.f32 %v4030, %v4138
        %v4140 = vpop.f32.mrb[0].mxu0
        %v4141 = vpop.f32.mrb[0].mxu0
        %v4142 = vadd.f32 %v4030, %v4141
        %v4143 = vpop.f32.mrb[0].mxu0
        %4144 = vdwg.mxu0
        %v4145 = vld [vmem:[%s55] sm:$0x1]
        %v4147 = vlaneseq
        %v4148 = vshrl.u32 %v4147, 7
        %v4149 = vsub.s32 0, %v4148
        %v4150 = vrot.slane %v4145, %v4149
        %v4152 = vmul.f32 %v4150, %v4115
        %v4153 = vmul.f32 %v4150, %v4118
        %v4154 = vmul.f32 %v4150, %v4123
        %v4155 = vmul.f32 %v4150, %v4126
        %v4156 = vmul.f32 %v4150, %v4131
        %v4157 = vmul.f32 %v4150, %v4134
        %v4158 = vmul.f32 %v4150, %v4139
        %v4159 = vmul.f32 %v4150, %v4142
        %v4160 = vadd.f32 %v3553, %v4152
        %v4161 = vadd.f32 %v3554, %v4153
        %v4162 = vadd.f32 %v3555, %v4154
        %v4163 = vadd.f32 %v3556, %v4155
        %v4164 = vadd.f32 %v3557, %v4156
        %v4165 = vadd.f32 %v3558, %v4157
        %v4166 = vadd.f32 %v3559, %v4158
        %v4167 = vadd.f32 %v3560, %v4159
        %4168 = vst.msk [vmem:[%s930] sm:$0xff] %vm942, %v4160
        %4169 = vst.msk [vmem:[%s930 + $0x8] sm:$0xff] %vm942, %v4161
        %4170 = vst.msk [vmem:[%s930 + $0x10] sm:$0xff] %vm942, %v4162
        %4171 = vst.msk [vmem:[%s930 + $0x18] sm:$0xff] %vm942, %v4163
        %4172 = vst.msk [vmem:[%s930 + $0x20] sm:$0xff] %vm942, %v4164
        %4173 = vst.msk [vmem:[%s930 + $0x28] sm:$0xff] %vm942, %v4165
        %4174 = vst.msk [vmem:[%s930 + $0x30] sm:$0xff] %vm942, %v4166
        %4175 = vst.msk [vmem:[%s930 + $0x38] sm:$0xff] %vm942, %v4167
        %p4176 = scmp.lt.s32.totalorder %s74, 1
        %s4177 = scalar_select %p4176, %s74, 1
        %s4178 = smul.addr %s4177, 8
        %s4179 = smul.addr %s4178, 8
        %s4180 = scalar_lea.vmem %s57, %s4179
        %s4181 = sand.u32 %s706, 1
        %s4182 = scalar_lea.sflag [#allocation5], %s4181
        %s4183 = sand.u32 %s706, 1
        %s4184 = smul.addr %s4183, 4
        %s4185 = scalar_lea.vmem [#allocation4], %s4184
        // Predicated region
        $region133: #{fca_block_forward.1} parent=131 // pred_check
          %p4186 = pneg %p690
        $region134: #{fca_block_forward.1} parent=131 // pred_check_branch
          %4188 = sbr.rel (%p4186) target = $region136
        $region135: #{fca_block_forward.1} parent=131 // pred_region
          _
        $region136: #{fca_block_forward.1} parent=131 // pred_fallthru
          _
        // Predicated region
        $region137: #{fca_block_forward.1} parent=131 // pred_check
          %p4189 = pneg %p716
        $region138: #{fca_block_forward.1} parent=131 // pred_check_branch
          %4191 = sbr.rel (%p4189) target = $region140
        $region139: #{fca_block_forward.1} parent=131 // pred_region
          %s4193 = ssub.s32 64, 64
          %4194 = vsyncadd %s4182, %s4193
          %s4195 = smul.addr %s74, 64
          %s4196 = scalar_lea.hbm %s59, %s4195
          %s4198 = sshll.u32 %s4185, 4
          %s4199 = int_to_ptr.vmem [resolvable:$true] %s4198
          %4201 = dma.vmem_to_hbm [thread:$0]  %s4199, 64, %s4196, %s4182
        $region140: #{fca_block_forward.1} parent=131 // pred_fallthru
          _
      $region132: #{fca_block_forward.1} parent=5 // pred_fallthru
        _
      %p4202 = scmp.le.s32.totalorder 2, %s69
      // Predicated region
      $region141: #{fca_block_forward.1} parent=5 // pred_check
        %p4203 = pneg %p4202
      $region142: #{fca_block_forward.1} parent=5 // pred_check_branch
        %4205 = sbr.rel (%p4203) target = $region144
      $region143: #{fca_block_forward.1} parent=5 // pred_region
        %s4206 = ssub.s32 %s69, 2
        // Predicated region
        $region145: #{fca_block_forward.1} parent=143 // pred_check
          %p4207 = pneg %p696
        $region146: #{fca_block_forward.1} parent=143 // pred_check_branch
          %4209 = sbr.rel (%p4207) target = $region148
        $region147: #{fca_block_forward.1} parent=143 // pred_region
          %p4210 = scmp.lt.s32.totalorder %s75, 1
          %s4211 = scalar_select %p4210, %s75, 1
          %s4212 = smul.addr %s4211, 8
          %s4213 = smul.addr %s4212, 8
          %s4214 = scalar_lea.vmem %s57, %s4213
        $region148: #{fca_block_forward.1} parent=143 // pred_fallthru
          _
        // Predicated region
        $region149: #{fca_block_forward.1} parent=143 // pred_check
          %p4215 = pneg %p722
        $region150: #{fca_block_forward.1} parent=143 // pred_check_branch
          %4217 = sbr.rel (%p4215) target = $region152
        $region151: #{fca_block_forward.1} parent=143 // pred_region
          %s4218 = sand.u32 %s707, 1
          %s4219 = scalar_lea.sflag [#allocation5], %s4218
          %s4220 = sand.u32 %s707, 1
          %s4221 = smul.addr %s4220, 4
          %s4222 = scalar_lea.vmem [#allocation4], %s4221
          %4223 = dma.done %s4219, 64
        $region152: #{fca_block_forward.1} parent=143 // pred_fallthru
          _
      $region144: #{fca_block_forward.1} parent=5 // pred_fallthru
        _
    $region6: #{fca_block_forward.1} parent=1 // loop_footer
      %s73 = sadd.s32 1, %s69
    $region7: #{fca_block_forward.1} parent=1 // loop_footer_branch
      %68 = sbr.rel target = $region3
    $region8: #{fca_block_forward.1} parent=1 // loop_exit
      _
    %4224 = vsyncpa [#allocation5], 1
    %s4225 = scalar_lea.sflag [#allocation5], 1
    %4226 = vsyncpa %s4225, 1

</llo_original>
